<compile_context>
chip_gen: v5e
topology: v5e:2x2
jax: 0.10.0
libtpu: 0.0.40
codegen_flags: <defaults>
</compile_context>

<pallas_src>
import numpy as np
import jax
import jax.numpy as jnp
from jax import lax
from jax.experimental import pallas as pl
from jax.experimental.pallas import tpu as pltpu


# ----------------------------------------------------------------------------
# Parameter construction (deterministic, mirrors CGMN.__init__ shapes)
# ----------------------------------------------------------------------------
def contrastive_matrix(n_gen: int) -> np.ndarray:
    cu = n_gen * (n_gen - 1) // 2
    m = np.zeros((n_gen, cu), dtype=np.float32)
    p, s = 0, 1
    for i in range(cu):
        m[p, i] = 1.0
        m[s, i] = -1.0
        if s == n_gen - 1:
            p = p + 1
            s = p
        s = s + 1
    return m


def _round_up(x: int, m: int) -> int:
    return (x + m - 1) // m * m


# ----------------------------------------------------------------------------
# Pallas kernel: tiled scatter-sum -> contrastive -> fused-gate GRU -> linear
# ----------------------------------------------------------------------------
def cgmn_kernel(batch_ref,    # (1, TN)                int32  graph id / node
                ll_ref,       # (TN, L*NG)             f32|bf16 log-likelihoods
                contr_ref,    # (L*NG, L*CUP)          f32  block-diag contrastive
                h0_ref,       # (1, CUP)               f32  GRU initial hidden
                wihblk_ref,   # (L*CUP, L*3*CUP)       f32  block-diag fused W_ih
                whh_ref,      # (CUP, 3*CUP)           f32  fused [W_hr|W_hz|W_hn]
                bihL_ref,     # (1, L*3*CUP)           f32  fused b_ih tiled L times
                bhh_ref,      # (1, 3*CUP)             f32  fused b_hh
                wout_ref,     # (L*CUP, OUTP)          f32  output Linear weight
                out_ref,      # (G_pad, OUTP)          f32
                acc_ref):     # (G_pad, L*NG)          f32  VMEM scratch accumulator
    i = pl.program_id(0)
    G = out_ref.shape[0]                     # padded graph count (sublane mult.)
    TN = ll_ref.shape[0]                     # node tile
    CUP = whh_ref.shape[0]
    L = wout_ref.shape[0] // CUP
    G3 = 3 * CUP

    @pl.when(i == 0)
    def _init():
        acc_ref[...] = jnp.zeros_like(acc_ref)

    # Segmented sum over this node tile:  onehot(batch) @ ll  ==  scatter-add.
    # Precision pinned so the log-likelihood reduction is not silently
    # truncated to a single bf16 pass.
    batch = batch_ref[...]                                            # (1, TN)
    gids = lax.broadcasted_iota(jnp.int32, (G, TN), 0)                # (G, TN)
    onehot = (gids == batch).astype(ll_ref.dtype)                     # (G, TN)
    acc_ref[...] += jnp.dot(onehot, ll_ref[...],
                            preferred_element_type=jnp.float32,
                            precision=lax.Precision.HIGHEST)          # (G, L*NG)

    @pl.when(i == pl.num_programs(0) - 1)
    def _finalize():
        agg = acc_ref[...]                                            # (G, L*NG)
        # One block-diagonal contrastive matmul for all (graph, layer) pairs.
        c_all = jnp.tanh(jnp.dot(agg, contr_ref[...],
                                 preferred_element_type=jnp.float32))  # (G, L*CUP)

        # All L input-side (h-independent) fused gate matmuls collapsed into a
        # single block-diagonal matmul; bias broadcast hoisted once.
        gi_all = (jnp.dot(c_all, wihblk_ref[...],
                          preferred_element_type=jnp.float32)
                  + jnp.broadcast_to(bihL_ref[...], (G, L * G3)))      # (G, L*3*CUP)

        whh = whh_ref[...]
        bhh = jnp.broadcast_to(bhh_ref[...], (G, G3))
        h = jnp.broadcast_to(h0_ref[...], (G, CUP))

        hs = []
        for t in range(L):        # recurrence: one h-side fused matmul / step
            gh = jnp.dot(h, whh, preferred_element_type=jnp.float32) + bhh
            gi = gi_all[:, t * G3:(t + 1) * G3]
            r = jax.nn.sigmoid(gi[:, 0:CUP] + gh[:, 0:CUP])
            z = jax.nn.sigmoid(gi[:, CUP:2 * CUP] + gh[:, CUP:2 * CUP])
            n = jnp.tanh(gi[:, 2 * CUP:3 * CUP] + r * gh[:, 2 * CUP:3 * CUP])
            h = (1.0 - z) * n + z * h
            hs.append(h)

        # Output Linear deferred out of the recurrence: one K = L*CUP matmul.
        h_all = jnp.concatenate(hs, axis=-1)                          # (G, L*CUP)
        out_ref[...] = jnp.dot(h_all, wout_ref[...],
                               preferred_element_type=jnp.float32)


# ----------------------------------------------------------------------------
# Wrapper: packing / padding + pallas_call
# ----------------------------------------------------------------------------
def cgmn_forward(batch1d, ll, contr, h0, wih, whh, bih, bhh, wout, *,
                 num_graphs, out_features, node_tile=512,
                 ll_dtype=jnp.float32):
    N, L, NG = ll.shape
    CU = contr.shape[1]
    G = num_graphs
    G_pad = max(8, _round_up(G, 8))       # sublane-dense graph rows
    CUP = _round_up(CU, 128)              # lane-dense contrastive width
    OUTP = _round_up(out_features, 128)   # lane-dense output width
    LNG = L * NG

    # ---- wrapper-side packing / padding (pure JAX, outside the kernel) ----
    N_pad = _round_up(max(N, node_tile), node_tile)
    ll_flat = jnp.pad(ll.reshape(N, LNG).astype(ll_dtype),
                      ((0, N_pad - N), (0, 0)))
    # padded nodes get graph id G_pad -> never match any onehot row
    batch_p = jnp.pad(batch1d.astype(jnp.int32), (0, N_pad - N),
                      constant_values=G_pad).reshape(1, N_pad)

    # block-diagonal contrastive matrix, each block lane-padded CU -> CUP
    contr_p = jnp.zeros((NG, CUP), jnp.float32).at[:, :CU].set(contr)
    contr_blk = jnp.zeros((LNG, L * CUP), jnp.float32)
    for t in range(L):
        contr_blk = contr_blk.at[t * NG:(t + 1) * NG,
                                 t * CUP:(t + 1) * CUP].set(contr_p)

    # fused + padded GRU weights / biases, PyTorch gate order [r, z, n]
    def fuse_w(w):  # (3, CU, CU) stored (in, out) -> (CUP, 3*CUP)
        wf = jnp.zeros((CUP, 3 * CUP), jnp.float32)
        for g in range(3):
            wf = wf.at[:CU, g * CUP:g * CUP + CU].set(w[g])
        return wf

    def fuse_b(b):  # (3, 1, CU) -> (1, 3*CUP)
        bf = jnp.zeros((1, 3 * CUP), jnp.float32)
        for g in range(3):
            bf = bf.at[0, g * CUP:g * CUP + CU].set(b[g, 0])
        return bf

    wih_f, whh_f = fuse_w(wih), fuse_w(whh)
    bih_f, bhh_f = fuse_b(bih), fuse_b(bhh)
    h0_p = jnp.zeros((1, CUP), jnp.float32).at[0, :CU].set(h0[0])

    # block-diagonal replicated W_ih -> one MXU push for all L steps' x-side
    wih_blk = jnp.zeros((L * CUP, L * 3 * CUP), jnp.float32)
    for t in range(L):
        wih_blk = wih_blk.at[t * CUP:(t + 1) * CUP,
                             t * 3 * CUP:(t + 1) * 3 * CUP].set(wih_f)
    bih_L = jnp.tile(bih_f, (1, L))                                   # (1, L*3*CUP)

    # 2-D output Linear weight, padded CU->CUP per step and OUT->OUTP
    wout_2d = jnp.zeros((L * CUP, OUTP), jnp.float32)
    for t in range(L):
        wout_2d = wout_2d.at[t * CUP:t * CUP + CU,
                             :out_features].set(wout[t * CU:(t + 1) * CU, :])

    grid = (N_pad // node_tile,)
    out = pl.pallas_call(
        cgmn_kernel,
        out_shape=jax.ShapeDtypeStruct((G_pad, OUTP), jnp.float32),
        grid=grid,
        in_specs=[
            pl.BlockSpec((1, node_tile), lambda i: (0, i)),           # batch ids
            pl.BlockSpec((node_tile, LNG), lambda i: (i, 0)),         # ll tile
            pl.BlockSpec((LNG, L * CUP), lambda i: (0, 0)),           # contrastive
            pl.BlockSpec((1, CUP), lambda i: (0, 0)),                 # h0
            pl.BlockSpec((L * CUP, L * 3 * CUP), lambda i: (0, 0)),   # W_ih blkdiag
            pl.BlockSpec((CUP, 3 * CUP), lambda i: (0, 0)),           # W_hh fused
            pl.BlockSpec((1, L * 3 * CUP), lambda i: (0, 0)),         # b_ih tiled
            pl.BlockSpec((1, 3 * CUP), lambda i: (0, 0)),             # b_hh fused
            pl.BlockSpec((L * CUP, OUTP), lambda i: (0, 0)),          # W_out 2-D
        ],
        out_specs=pl.BlockSpec((G_pad, OUTP), lambda i: (0, 0)),
        scratch_shapes=[pltpu.VMEM((G_pad, LNG), jnp.float32)],
        compiler_params=pltpu.CompilerParams(
            dimension_semantics=("arbitrary",),    # node axis is a reduction
            # Footprint (double-buffered weights + 2x ll tile + scratch) is
            # well under 16 MiB at these sizes; 32 MiB also fits v7x's 64 MiB
            # physical VMEM with headroom.
            vmem_limit_bytes=32 * 1024 * 1024),
    )(batch_p, ll_flat, contr_blk, h0_p, wih_blk, whh_f, bih_L, bhh_f, wout_2d)
    return out[:G, :out_features]


# ----------------------------------------------------------------------------
# Pure-JAX reference (mirrors PyTorch semantics) for a correctness check
# ----------------------------------------------------------------------------
def cgmn_reference(batch1d, ll, contr, h0, wih, whh, bih, bhh, wout, num_graphs):
    G = num_graphs
    L = ll.shape[1]
    CU = contr.shape[1]
    agg = jnp.zeros((G, L, ll.shape[2]), jnp.float32).at[batch1d].add(ll)
    c = jnp.tanh(agg @ contr)                                        # (G, L, CU)
    h = jnp.broadcast_to(h0, (G, CU))
    outs = []
    for t in range(L):
        x = c[:, t, :]
        r = jax.nn.sigmoid(x @ wih[0] + bih[0] + h @ whh[0] + bhh[0])
        z = jax.nn.sigmoid(x @ wih[1] + bih[1] + h @ whh[1] + bhh[1])
        n = jnp.tanh(x @ wih[2] + bih[2] + r * (h @ whh[2] + bhh[2]))
        h = (1.0 - z) * n + z * h
        outs.append(h)
    return jnp.concatenate(outs, -1) @ wout


# ----------------------------------------------------------------------------
if __name__ == "__main__":
    # Small, module-consistent sizes.
    n_gen = 8                                  # CGMM generative components
    n_layers = 4                               # sequence length for the GRU
    out_features = 6
    cu = n_gen * (n_gen - 1) // 2              # contrastive units = 28
    n_nodes = 1100                             # 3 node tiles at node_tile=512
    num_graphs = 4

    key = jax.random.PRNGKey(0)
    k_ll, k_h0, k_wih, k_whh, k_bih, k_bhh, k_out = jax.random.split(key, 7)

    # Per-node log-likelihoods (stand-in for CGMM output).
    log_likelihood = jax.random.normal(k_ll, (n_nodes, n_layers, n_gen),
                                       dtype=jnp.float32)
    # 4 graphs x 275 nodes each.
    batch1d = jnp.repeat(jnp.arange(num_graphs, dtype=jnp.int32),
                         n_nodes // num_graphs)

    # Parameters (deterministic init, shapes per CGMN.__init__).
    contr = jnp.asarray(contrastive_matrix(n_gen))                   # (NG, CU)
    h0 = jax.random.uniform(k_h0, (1, cu), dtype=jnp.float32)        # (1,1,CU) squeezed
    bound = 1.0 / np.sqrt(cu)
    # GRU weights, PyTorch gate order [r, z, n]; stored transposed (in, out).
    wih = jax.random.uniform(k_wih, (3, cu, cu), jnp.float32, -bound, bound)
    whh = jax.random.uniform(k_whh, (3, cu, cu), jnp.float32, -bound, bound)
    bih = jax.random.uniform(k_bih, (3, 1, cu), jnp.float32, -bound, bound)
    bhh = jax.random.uniform(k_bhh, (3, 1, cu), jnp.float32, -bound, bound)
    # nn.Linear(cu * n_layers, out_features, bias=False) weight, transposed.
    ob = 1.0 / np.sqrt(cu * n_layers)
    wout = jax.random.uniform(k_out, (cu * n_layers, out_features), jnp.float32,
                              -ob, ob)

    out = cgmn_forward(batch1d, log_likelihood, contr, h0, wih, whh, bih, bhh,
                       wout, num_graphs=num_graphs, out_features=out_features,
                       node_tile=512)
    out = jax.block_until_ready(out)

    ref = cgmn_reference(batch1d, log_likelihood, contr, h0, wih, whh, bih, bhh,
                         wout, num_graphs)
    np.testing.assert_allclose(np.asarray(out), np.asarray(ref),
                               rtol=1e-4, atol=1e-4)

    print("KERNEL_OK")
</pallas_src>

<mosaic_0001>
module attributes {stable_mosaic.version = 11 : i64} {
  func.func @cgmn_kernel(%arg0: i32, %arg1: memref<1x512xi32, #tpu.memory_space<vmem>>, %arg2: memref<512x32xf32, #tpu.memory_space<vmem>>, %arg3: memref<32x512xf32, #tpu.memory_space<vmem>>, %arg4: memref<1x128xf32, #tpu.memory_space<vmem>>, %arg5: memref<512x1536xf32, #tpu.memory_space<vmem>>, %arg6: memref<128x384xf32, #tpu.memory_space<vmem>>, %arg7: memref<1x1536xf32, #tpu.memory_space<vmem>>, %arg8: memref<1x384xf32, #tpu.memory_space<vmem>>, %arg9: memref<512x128xf32, #tpu.memory_space<vmem>>, %arg10: memref<8x128xf32, #tpu.memory_space<vmem>>, %arg11: memref<8x32xf32, #tpu.memory_space<vmem>>) attributes {dimension_semantics = [#tpu.dimension_semantics<arbitrary>], iteration_bounds = array<i64: 3>, scalar_prefetch = 0 : i64, scratch_operands = 1 : i64, tpu.core_type = #tpu.core_type<tc>, window_params = [{transform_indices = @transform_0, window_bounds = array<i64: 1, 512>}, {transform_indices = @transform_1, window_bounds = array<i64: 512, 32>}, {pipeline_mode = #tpu.pipeline_mode<synchronous>, transform_indices = @transform_2, window_bounds = array<i64: 32, 512>}, {pipeline_mode = #tpu.pipeline_mode<synchronous>, transform_indices = @transform_3, window_bounds = array<i64: 1, 128>}, {pipeline_mode = #tpu.pipeline_mode<synchronous>, transform_indices = @transform_4, window_bounds = array<i64: 512, 1536>}, {pipeline_mode = #tpu.pipeline_mode<synchronous>, transform_indices = @transform_5, window_bounds = array<i64: 128, 384>}, {pipeline_mode = #tpu.pipeline_mode<synchronous>, transform_indices = @transform_6, window_bounds = array<i64: 1, 1536>}, {pipeline_mode = #tpu.pipeline_mode<synchronous>, transform_indices = @transform_7, window_bounds = array<i64: 1, 384>}, {pipeline_mode = #tpu.pipeline_mode<synchronous>, transform_indices = @transform_8, window_bounds = array<i64: 512, 128>}, {pipeline_mode = #tpu.pipeline_mode<synchronous>, transform_indices = @transform_9, window_bounds = array<i64: 8, 128>}]} {
    %c0_i32 = arith.constant 0 : i32
    %0 = arith.cmpi eq, %arg0, %c0_i32 : i32
    %1 = arith.extui %0 : i1 to i32
    %c0_i32_0 = arith.constant 0 : i32
    %2 = arith.cmpi ne, %1, %c0_i32_0 : i32
    scf.if %2 {
      %cst_9 = arith.constant 0.000000e+00 : f32
      %17 = vector.broadcast %cst_9 : f32 to vector<8x32xf32>
      %c0_10 = arith.constant 0 : index
      %c0_11 = arith.constant 0 : index
      %18 = vector.load %arg11[%c0_10, %c0_11] : memref<8x32xf32, #tpu.memory_space<vmem>>, vector<8x32xf32>
      tpu.vector_store %arg11[%c0_10, %c0_11], %17 {strides = array<i32>} : memref<8x32xf32, #tpu.memory_space<vmem>>, vector<8x32xf32>,
    } else {
    }
    %c0 = arith.constant 0 : index
    %c0_1 = arith.constant 0 : index
    %3 = vector.load %arg1[%c0, %c0_1] : memref<1x512xi32, #tpu.memory_space<vmem>>, vector<1x512xi32>
    %4 = tpu.iota {dimensions = array<i32: 0>} : vector<8x512xi32>
    %5 = vector.broadcast %3 : vector<1x512xi32> to vector<8x512xi32>
    %6 = arith.cmpi eq, %4, %5 : vector<8x512xi32>
    %7 = arith.extui %6 : vector<8x512xi1> to vector<8x512xi32>
    %8 = arith.sitofp %7 : vector<8x512xi32> to vector<8x512xf32>
    %c0_2 = arith.constant 0 : index
    %c0_3 = arith.constant 0 : index
    %9 = vector.load %arg11[%c0_2, %c0_3] : memref<8x32xf32, #tpu.memory_space<vmem>>, vector<8x32xf32>
    %c0_4 = arith.constant 0 : index
    %c0_5 = arith.constant 0 : index
    %10 = vector.load %arg2[%c0_4, %c0_5] : memref<512x32xf32, #tpu.memory_space<vmem>>, vector<512x32xf32>
    %cst = arith.constant dense<0.000000e+00> : vector<8x32xf32>
    %11 = tpu.matmul %8, %10, %cst {dimension_numbers = #tpu.dot_dimension_numbers<[1], [0], [0], [1], [0, 0, 1, 1], [], []>, precision = #tpu.contract_precision<fp32>} : vector<8x512xf32>, vector<512x32xf32>, vector<8x32xf32> -> vector<8x32xf32>
    %12 = arith.addf %9, %11 : vector<8x32xf32>
    %c0_6 = arith.constant 0 : index
    %c0_7 = arith.constant 0 : index
    %13 = vector.load %arg11[%c0_6, %c0_7] : memref<8x32xf32, #tpu.memory_space<vmem>>, vector<8x32xf32>
    tpu.vector_store %arg11[%c0_6, %c0_7], %12 {strides = array<i32>} : memref<8x32xf32, #tpu.memory_space<vmem>>, vector<8x32xf32>,
    %c2_i32 = arith.constant 2 : i32
    %14 = arith.cmpi eq, %arg0, %c2_i32 : i32
    %15 = arith.extui %14 : i1 to i32
    %c0_i32_8 = arith.constant 0 : i32
    %16 = arith.cmpi ne, %15, %c0_i32_8 : i32
    scf.if %16 {
      %c0_9 = arith.constant 0 : index
      %c0_10 = arith.constant 0 : index
      %17 = vector.load %arg11[%c0_9, %c0_10] : memref<8x32xf32, #tpu.memory_space<vmem>>, vector<8x32xf32>
      %c0_11 = arith.constant 0 : index
      %c0_12 = arith.constant 0 : index
      %18 = vector.load %arg3[%c0_11, %c0_12] : memref<32x512xf32, #tpu.memory_space<vmem>>, vector<32x512xf32>
      %cst_13 = arith.constant dense<0.000000e+00> : vector<8x512xf32>
      %19 = tpu.matmul %17, %18, %cst_13 {dimension_numbers = #tpu.dot_dimension_numbers<[1], [0], [0], [1], [0, 0, 1, 1], [], []>} : vector<8x32xf32>, vector<32x512xf32>, vector<8x512xf32> -> vector<8x512xf32>
      %20 = math.tanh %19 : vector<8x512xf32>
      %c0_14 = arith.constant 0 : index
      %c0_15 = arith.constant 0 : index
      %21 = vector.load %arg5[%c0_14, %c0_15] : memref<512x1536xf32, #tpu.memory_space<vmem>>, vector<512x1536xf32>
      %cst_16 = arith.constant dense<0.000000e+00> : vector<8x1536xf32>
      %22 = tpu.matmul %20, %21, %cst_16 {dimension_numbers = #tpu.dot_dimension_numbers<[1], [0], [0], [1], [0, 0, 1, 1], [], []>} : vector<8x512xf32>, vector<512x1536xf32>, vector<8x1536xf32> -> vector<8x1536xf32>
      %c0_17 = arith.constant 0 : index
      %c0_18 = arith.constant 0 : index
      %23 = vector.load %arg7[%c0_17, %c0_18] : memref<1x1536xf32, #tpu.memory_space<vmem>>, vector<1x1536xf32>
      %24 = vector.shape_cast %23 : vector<1x1536xf32> to vector<1x1536xf32>
      %25 = vector.broadcast %24 : vector<1x1536xf32> to vector<8x1536xf32>
      %26 = arith.addf %22, %25 : vector<8x1536xf32>
      %c0_19 = arith.constant 0 : index
      %c0_20 = arith.constant 0 : index
      %27 = vector.load %arg6[%c0_19, %c0_20] : memref<128x384xf32, #tpu.memory_space<vmem>>, vector<128x384xf32>
      %c0_21 = arith.constant 0 : index
      %c0_22 = arith.constant 0 : index
      %28 = vector.load %arg8[%c0_21, %c0_22] : memref<1x384xf32, #tpu.memory_space<vmem>>, vector<1x384xf32>
      %29 = vector.shape_cast %28 : vector<1x384xf32> to vector<1x384xf32>
      %30 = vector.broadcast %29 : vector<1x384xf32> to vector<8x384xf32>
      %c0_23 = arith.constant 0 : index
      %c0_24 = arith.constant 0 : index
      %31 = vector.load %arg4[%c0_23, %c0_24] : memref<1x128xf32, #tpu.memory_space<vmem>>, vector<1x128xf32>
      %32 = vector.shape_cast %31 : vector<1x128xf32> to vector<1x128xf32>
      %33 = vector.broadcast %32 : vector<1x128xf32> to vector<8x128xf32>
      %cst_25 = arith.constant dense<0.000000e+00> : vector<8x384xf32>
      %34 = tpu.matmul %33, %27, %cst_25 {dimension_numbers = #tpu.dot_dimension_numbers<[1], [0], [0], [1], [0, 0, 1, 1], [], []>} : vector<8x128xf32>, vector<128x384xf32>, vector<8x384xf32> -> vector<8x384xf32>
      %35 = arith.addf %34, %30 : vector<8x384xf32>
      %36 = vector.extract_strided_slice %26 {offsets = [0, 0], sizes = [8, 384], strides = [1, 1]} : vector<8x1536xf32> to vector<8x384xf32>
      %37 = vector.extract_strided_slice %36 {offsets = [0, 0], sizes = [8, 128], strides = [1, 1]} : vector<8x384xf32> to vector<8x128xf32>
      %38 = vector.extract_strided_slice %35 {offsets = [0, 0], sizes = [8, 128], strides = [1, 1]} : vector<8x384xf32> to vector<8x128xf32>
      %39 = arith.addf %37, %38 : vector<8x128xf32>
      %40 = arith.negf %39 : vector<8x128xf32>
      %41 = math.exp %40 : vector<8x128xf32>
      %cst_26 = arith.constant 1.000000e+00 : f32
      %42 = vector.broadcast %cst_26 : f32 to vector<8x128xf32>
      %43 = arith.addf %42, %41 : vector<8x128xf32>
      %44 = arith.divf %42, %43 : vector<8x128xf32>
      %45 = vector.extract_strided_slice %36 {offsets = [0, 128], sizes = [8, 128], strides = [1, 1]} : vector<8x384xf32> to vector<8x128xf32>
      %46 = vector.extract_strided_slice %35 {offsets = [0, 128], sizes = [8, 128], strides = [1, 1]} : vector<8x384xf32> to vector<8x128xf32>
      %47 = arith.addf %45, %46 : vector<8x128xf32>
      %48 = arith.negf %47 : vector<8x128xf32>
      %49 = math.exp %48 : vector<8x128xf32>
      %cst_27 = arith.constant 1.000000e+00 : f32
      %50 = vector.broadcast %cst_27 : f32 to vector<8x128xf32>
      %51 = arith.addf %50, %49 : vector<8x128xf32>
      %52 = arith.divf %50, %51 : vector<8x128xf32>
      %53 = vector.extract_strided_slice %36 {offsets = [0, 256], sizes = [8, 128], strides = [1, 1]} : vector<8x384xf32> to vector<8x128xf32>
      %54 = vector.extract_strided_slice %35 {offsets = [0, 256], sizes = [8, 128], strides = [1, 1]} : vector<8x384xf32> to vector<8x128xf32>
      %55 = arith.mulf %44, %54 : vector<8x128xf32>
      %56 = arith.addf %53, %55 : vector<8x128xf32>
      %57 = math.tanh %56 : vector<8x128xf32>
      %cst_28 = arith.constant 1.000000e+00 : f32
      %58 = vector.broadcast %cst_28 : f32 to vector<8x128xf32>
      %59 = arith.subf %58, %52 : vector<8x128xf32>
      %60 = arith.mulf %59, %57 : vector<8x128xf32>
      %61 = arith.mulf %52, %33 : vector<8x128xf32>
      %62 = arith.addf %60, %61 : vector<8x128xf32>
      %cst_29 = arith.constant dense<0.000000e+00> : vector<8x384xf32>
      %63 = tpu.matmul %62, %27, %cst_29 {dimension_numbers = #tpu.dot_dimension_numbers<[1], [0], [0], [1], [0, 0, 1, 1], [], []>} : vector<8x128xf32>, vector<128x384xf32>, vector<8x384xf32> -> vector<8x384xf32>
      %64 = arith.addf %63, %30 : vector<8x384xf32>
      %65 = vector.extract_strided_slice %26 {offsets = [0, 384], sizes = [8, 384], strides = [1, 1]} : vector<8x1536xf32> to vector<8x384xf32>
      %66 = vector.extract_strided_slice %65 {offsets = [0, 0], sizes = [8, 128], strides = [1, 1]} : vector<8x384xf32> to vector<8x128xf32>
      %67 = vector.extract_strided_slice %64 {offsets = [0, 0], sizes = [8, 128], strides = [1, 1]} : vector<8x384xf32> to vector<8x128xf32>
      %68 = arith.addf %66, %67 : vector<8x128xf32>
      %69 = arith.negf %68 : vector<8x128xf32>
      %70 = math.exp %69 : vector<8x128xf32>
      %cst_30 = arith.constant 1.000000e+00 : f32
      %71 = vector.broadcast %cst_30 : f32 to vector<8x128xf32>
      %72 = arith.addf %71, %70 : vector<8x128xf32>
      %73 = arith.divf %71, %72 : vector<8x128xf32>
      %74 = vector.extract_strided_slice %65 {offsets = [0, 128], sizes = [8, 128], strides = [1, 1]} : vector<8x384xf32> to vector<8x128xf32>
      %75 = vector.extract_strided_slice %64 {offsets = [0, 128], sizes = [8, 128], strides = [1, 1]} : vector<8x384xf32> to vector<8x128xf32>
      %76 = arith.addf %74, %75 : vector<8x128xf32>
      %77 = arith.negf %76 : vector<8x128xf32>
      %78 = math.exp %77 : vector<8x128xf32>
      %cst_31 = arith.constant 1.000000e+00 : f32
      %79 = vector.broadcast %cst_31 : f32 to vector<8x128xf32>
      %80 = arith.addf %79, %78 : vector<8x128xf32>
      %81 = arith.divf %79, %80 : vector<8x128xf32>
      %82 = vector.extract_strided_slice %65 {offsets = [0, 256], sizes = [8, 128], strides = [1, 1]} : vector<8x384xf32> to vector<8x128xf32>
      %83 = vector.extract_strided_slice %64 {offsets = [0, 256], sizes = [8, 128], strides = [1, 1]} : vector<8x384xf32> to vector<8x128xf32>
      %84 = arith.mulf %73, %83 : vector<8x128xf32>
      %85 = arith.addf %82, %84 : vector<8x128xf32>
      %86 = math.tanh %85 : vector<8x128xf32>
      %cst_32 = arith.constant 1.000000e+00 : f32
      %87 = vector.broadcast %cst_32 : f32 to vector<8x128xf32>
      %88 = arith.subf %87, %81 : vector<8x128xf32>
      %89 = arith.mulf %88, %86 : vector<8x128xf32>
      %90 = arith.mulf %81, %62 : vector<8x128xf32>
      %91 = arith.addf %89, %90 : vector<8x128xf32>
      %cst_33 = arith.constant dense<0.000000e+00> : vector<8x384xf32>
      %92 = tpu.matmul %91, %27, %cst_33 {dimension_numbers = #tpu.dot_dimension_numbers<[1], [0], [0], [1], [0, 0, 1, 1], [], []>} : vector<8x128xf32>, vector<128x384xf32>, vector<8x384xf32> -> vector<8x384xf32>
      %93 = arith.addf %92, %30 : vector<8x384xf32>
      %94 = vector.extract_strided_slice %26 {offsets = [0, 768], sizes = [8, 384], strides = [1, 1]} : vector<8x1536xf32> to vector<8x384xf32>
      %95 = vector.extract_strided_slice %94 {offsets = [0, 0], sizes = [8, 128], strides = [1, 1]} : vector<8x384xf32> to vector<8x128xf32>
      %96 = vector.extract_strided_slice %93 {offsets = [0, 0], sizes = [8, 128], strides = [1, 1]} : vector<8x384xf32> to vector<8x128xf32>
      %97 = arith.addf %95, %96 : vector<8x128xf32>
      %98 = arith.negf %97 : vector<8x128xf32>
      %99 = math.exp %98 : vector<8x128xf32>
      %cst_34 = arith.constant 1.000000e+00 : f32
      %100 = vector.broadcast %cst_34 : f32 to vector<8x128xf32>
      %101 = arith.addf %100, %99 : vector<8x128xf32>
      %102 = arith.divf %100, %101 : vector<8x128xf32>
      %103 = vector.extract_strided_slice %94 {offsets = [0, 128], sizes = [8, 128], strides = [1, 1]} : vector<8x384xf32> to vector<8x128xf32>
      %104 = vector.extract_strided_slice %93 {offsets = [0, 128], sizes = [8, 128], strides = [1, 1]} : vector<8x384xf32> to vector<8x128xf32>
      %105 = arith.addf %103, %104 : vector<8x128xf32>
      %106 = arith.negf %105 : vector<8x128xf32>
      %107 = math.exp %106 : vector<8x128xf32>
      %cst_35 = arith.constant 1.000000e+00 : f32
      %108 = vector.broadcast %cst_35 : f32 to vector<8x128xf32>
      %109 = arith.addf %108, %107 : vector<8x128xf32>
      %110 = arith.divf %108, %109 : vector<8x128xf32>
      %111 = vector.extract_strided_slice %94 {offsets = [0, 256], sizes = [8, 128], strides = [1, 1]} : vector<8x384xf32> to vector<8x128xf32>
      %112 = vector.extract_strided_slice %93 {offsets = [0, 256], sizes = [8, 128], strides = [1, 1]} : vector<8x384xf32> to vector<8x128xf32>
      %113 = arith.mulf %102, %112 : vector<8x128xf32>
      %114 = arith.addf %111, %113 : vector<8x128xf32>
      %115 = math.tanh %114 : vector<8x128xf32>
      %cst_36 = arith.constant 1.000000e+00 : f32
      %116 = vector.broadcast %cst_36 : f32 to vector<8x128xf32>
      %117 = arith.subf %116, %110 : vector<8x128xf32>
      %118 = arith.mulf %117, %115 : vector<8x128xf32>
      %119 = arith.mulf %110, %91 : vector<8x128xf32>
      %120 = arith.addf %118, %119 : vector<8x128xf32>
      %cst_37 = arith.constant dense<0.000000e+00> : vector<8x384xf32>
      %121 = tpu.matmul %120, %27, %cst_37 {dimension_numbers = #tpu.dot_dimension_numbers<[1], [0], [0], [1], [0, 0, 1, 1], [], []>} : vector<8x128xf32>, vector<128x384xf32>, vector<8x384xf32> -> vector<8x384xf32>
      %122 = arith.addf %121, %30 : vector<8x384xf32>
      %123 = vector.extract_strided_slice %26 {offsets = [0, 1152], sizes = [8, 384], strides = [1, 1]} : vector<8x1536xf32> to vector<8x384xf32>
      %124 = vector.extract_strided_slice %123 {offsets = [0, 0], sizes = [8, 128], strides = [1, 1]} : vector<8x384xf32> to vector<8x128xf32>
      %125 = vector.extract_strided_slice %122 {offsets = [0, 0], sizes = [8, 128], strides = [1, 1]} : vector<8x384xf32> to vector<8x128xf32>
      %126 = arith.addf %124, %125 : vector<8x128xf32>
      %127 = arith.negf %126 : vector<8x128xf32>
      %128 = math.exp %127 : vector<8x128xf32>
      %cst_38 = arith.constant 1.000000e+00 : f32
      %129 = vector.broadcast %cst_38 : f32 to vector<8x128xf32>
      %130 = arith.addf %129, %128 : vector<8x128xf32>
      %131 = arith.divf %129, %130 : vector<8x128xf32>
      %132 = vector.extract_strided_slice %123 {offsets = [0, 128], sizes = [8, 128], strides = [1, 1]} : vector<8x384xf32> to vector<8x128xf32>
      %133 = vector.extract_strided_slice %122 {offsets = [0, 128], sizes = [8, 128], strides = [1, 1]} : vector<8x384xf32> to vector<8x128xf32>
      %134 = arith.addf %132, %133 : vector<8x128xf32>
      %135 = arith.negf %134 : vector<8x128xf32>
      %136 = math.exp %135 : vector<8x128xf32>
      %cst_39 = arith.constant 1.000000e+00 : f32
      %137 = vector.broadcast %cst_39 : f32 to vector<8x128xf32>
      %138 = arith.addf %137, %136 : vector<8x128xf32>
      %139 = arith.divf %137, %138 : vector<8x128xf32>
      %140 = vector.extract_strided_slice %123 {offsets = [0, 256], sizes = [8, 128], strides = [1, 1]} : vector<8x384xf32> to vector<8x128xf32>
      %141 = vector.extract_strided_slice %122 {offsets = [0, 256], sizes = [8, 128], strides = [1, 1]} : vector<8x384xf32> to vector<8x128xf32>
      %142 = arith.mulf %131, %141 : vector<8x128xf32>
      %143 = arith.addf %140, %142 : vector<8x128xf32>
      %144 = math.tanh %143 : vector<8x128xf32>
      %cst_40 = arith.constant 1.000000e+00 : f32
      %145 = vector.broadcast %cst_40 : f32 to vector<8x128xf32>
      %146 = arith.subf %145, %139 : vector<8x128xf32>
      %147 = arith.mulf %146, %144 : vector<8x128xf32>
      %148 = arith.mulf %139, %120 : vector<8x128xf32>
      %149 = arith.addf %147, %148 : vector<8x128xf32>
      %150 = tpu.concatenate %62, %91, %120, %149 in 1 : vector<8x128xf32>, vector<8x128xf32>, vector<8x128xf32>, vector<8x128xf32> -> vector<8x512xf32>
      %c0_41 = arith.constant 0 : index
      %c0_42 = arith.constant 0 : index
      %151 = vector.load %arg9[%c0_41, %c0_42] : memref<512x128xf32, #tpu.memory_space<vmem>>, vector<512x128xf32>
      %cst_43 = arith.constant dense<0.000000e+00> : vector<8x128xf32>
      %152 = tpu.matmul %150, %151, %cst_43 {dimension_numbers = #tpu.dot_dimension_numbers<[1], [0], [0], [1], [0, 0, 1, 1], [], []>} : vector<8x512xf32>, vector<512x128xf32>, vector<8x128xf32> -> vector<8x128xf32>
      %c0_44 = arith.constant 0 : index
      %c0_45 = arith.constant 0 : index
      %153 = vector.load %arg10[%c0_44, %c0_45] : memref<8x128xf32, #tpu.memory_space<vmem>>, vector<8x128xf32>
      tpu.vector_store %arg10[%c0_44, %c0_45], %152 {strides = array<i32>} : memref<8x128xf32, #tpu.memory_space<vmem>>, vector<8x128xf32>,
    } else {
    }
    return
  }
  func.func @transform_0(%arg0: i32) -> (i32, i32) {
    %c0_i32 = arith.constant 0 : i32
    %c0_i32_0 = arith.constant 0 : i32
    return %c0_i32, %arg0 : i32, i32
  }
  func.func @transform_1(%arg0: i32) -> (i32, i32) {
    %c0_i32 = arith.constant 0 : i32
    %c0_i32_0 = arith.constant 0 : i32
    return %arg0, %c0_i32 : i32, i32
  }
  func.func @transform_2(%arg0: i32) -> (i32, i32) {
    %c0_i32 = arith.constant 0 : i32
    %c0_i32_0 = arith.constant 0 : i32
    %c0_i32_1 = arith.constant 0 : i32
    return %c0_i32, %c0_i32_0 : i32, i32
  }
  func.func @transform_3(%arg0: i32) -> (i32, i32) {
    %c0_i32 = arith.constant 0 : i32
    %c0_i32_0 = arith.constant 0 : i32
    %c0_i32_1 = arith.constant 0 : i32
    return %c0_i32, %c0_i32_0 : i32, i32
  }
  func.func @transform_4(%arg0: i32) -> (i32, i32) {
    %c0_i32 = arith.constant 0 : i32
    %c0_i32_0 = arith.constant 0 : i32
    %c0_i32_1 = arith.constant 0 : i32
    return %c0_i32, %c0_i32_0 : i32, i32
  }
  func.func @transform_5(%arg0: i32) -> (i32, i32) {
    %c0_i32 = arith.constant 0 : i32
    %c0_i32_0 = arith.constant 0 : i32
    %c0_i32_1 = arith.constant 0 : i32
    return %c0_i32, %c0_i32_0 : i32, i32
  }
  func.func @transform_6(%arg0: i32) -> (i32, i32) {
    %c0_i32 = arith.constant 0 : i32
    %c0_i32_0 = arith.constant 0 : i32
    %c0_i32_1 = arith.constant 0 : i32
    return %c0_i32, %c0_i32_0 : i32, i32
  }
  func.func @transform_7(%arg0: i32) -> (i32, i32) {
    %c0_i32 = arith.constant 0 : i32
    %c0_i32_0 = arith.constant 0 : i32
    %c0_i32_1 = arith.constant 0 : i32
    return %c0_i32, %c0_i32_0 : i32, i32
  }
  func.func @transform_8(%arg0: i32) -> (i32, i32) {
    %c0_i32 = arith.constant 0 : i32
    %c0_i32_0 = arith.constant 0 : i32
    %c0_i32_1 = arith.constant 0 : i32
    return %c0_i32, %c0_i32_0 : i32, i32
  }
  func.func @transform_9(%arg0: i32) -> (i32, i32) {
    %c0_i32 = arith.constant 0 : i32
    %c0_i32_0 = arith.constant 0 : i32
    %c0_i32_1 = arith.constant 0 : i32
    return %c0_i32, %c0_i32_0 : i32, i32
  }
}

</mosaic_0001>

<llo_original>
// kernel: tpu_custom_call.1
$region0: #{tpu_custom_call.1}
  #allocation0 [shape = 'u32[]', space=smem, size = 0x4, offset = 0x4, fixed_abs, tag = 'smem constant byte address 0x4 - core index']
  #allocation1 [shape = 'u32[72,128]{1,0:T(1,128)}', space=vmem, size = 0x9000, scoped, tag = 'internal scratch']
  #allocation2 [shape = 'f32[8,32]{1,0:T(8,128)}', space=vmem, size = 0x1000, scoped, tag = 'scratch operand']
  %s0 = inlined_call_operand.hbm [shape: s32[1,1536], index: 0, kind: input, shape index: {}]
  %s1 = inlined_call_operand.vmem [shape: f32[1536,32], index: 1, kind: input, shape index: {}]
  %s2 = inlined_call_operand.hbm [shape: f32[32,512], index: 2, kind: input, shape index: {}]
  %s3 = inlined_call_operand.hbm [shape: f32[1,128], index: 3, kind: input, shape index: {}]
  %s4 = inlined_call_operand.hbm [shape: f32[512,1536], index: 4, kind: input, shape index: {}]
  %s5 = inlined_call_operand.hbm [shape: f32[128,384], index: 5, kind: input, shape index: {}]
  %s6 = inlined_call_operand.hbm [shape: f32[1,1536], index: 6, kind: input, shape index: {}]
  %s7 = inlined_call_operand.hbm [shape: f32[1,384], index: 7, kind: input, shape index: {}]
  %s8 = inlined_call_operand.hbm [shape: f32[512,128], index: 8, kind: input, shape index: {}]
  %s9 = inlined_call_operand.hbm [shape: f32[8,128], index: 9, kind: output, shape index: {}]
  %s10 = sld [smem:[#allocation0]]
  $region109: #{tpu_custom_call.1} parent=0
    _
  %s12 = ssub.s32 1, %s10
  %s13 = scalar_select 0, %s12, %s10
  $region1: #{tpu_custom_call.1} parent=0
    #allocation3 [shape = 'u8[4096]{0}', space=vmem, size = 0x1000, scoped, tag = 'input window, operand 0']
    #allocation4 [shape = 's32[2]{0}', space=sflag, size = 0x8, scoped, tag = 'scoped memory for tpu_custom_call.1']
    #allocation5 [shape = 's32[2]{0}', space=sflag, size = 0x8, scoped, tag = 'scoped memory for tpu_custom_call.1']
    #allocation6 [shape = 'u8[65536]{0}', space=vmem, size = 0x10000, scoped, tag = 'input window, operand 2, single buffered']
    #allocation7 [shape = 's32[1]{0}', space=sflag, size = 0x4, scoped, tag = 'scoped memory for tpu_custom_call.1']
    #allocation8 [shape = 'u8[512]{0}', space=vmem, size = 0x400, scoped, tag = 'input window, operand 3, single buffered']
    #allocation9 [shape = 'u8[3145728]{0}', space=vmem, size = 0x300000, scoped, tag = 'input window, operand 4, single buffered']
    #allocation10 [shape = 's32[1]{0}', space=sflag, size = 0x4, scoped, tag = 'scoped memory for tpu_custom_call.1']
    #allocation11 [shape = 'u8[196608]{0}', space=vmem, size = 0x30000, scoped, tag = 'input window, operand 5, single buffered']
    #allocation12 [shape = 'u8[6144]{0}', space=vmem, size = 0x1800, scoped, tag = 'input window, operand 6, single buffered']
    #allocation13 [shape = 's32[1]{0}', space=sflag, size = 0x4, scoped, tag = 'scoped memory for tpu_custom_call.1']
    #allocation14 [shape = 'u8[1536]{0}', space=vmem, size = 0x800, scoped, tag = 'input window, operand 7, single buffered']
    #allocation15 [shape = 'u8[262144]{0}', space=vmem, size = 0x40000, scoped, tag = 'input window, operand 8, single buffered']
    #allocation16 [shape = 's32[1]{0}', space=sflag, size = 0x4, scoped, tag = 'scoped memory for tpu_custom_call.1']
    #allocation17 [shape = 'u8[4096]{0}', space=vmem, size = 0x1000, scoped, tag = 'output window, operand 0, single buffered']
    %14 = vsyncpa [#allocation4], 0
    %s15 = scalar_lea.sflag [#allocation4], 1
    %16 = vsyncpa %s15, 0
    %17 = vsyncpa [#allocation7], 0
    %18 = vsyncpa [#allocation10], 0
    %19 = vsyncpa [#allocation13], 0
    %20 = vsyncpa [#allocation16], 0
    %21 = vsyncpa [#allocation5], 0
    loop: start=0, step=1, limit=5
    $region2: #{tpu_custom_call.1} parent=1 // loop_pre_header
      _
    $region3: #{tpu_custom_call.1} parent=1 // loop_header
      %s23 = sphi 0, %s27
      %p24 = scmp.ge.s32.totalorder %s23, 5
      %s33 = sphi 0, %s35
      %s36 = sphi 0, %s33
      %s37 = sphi 0, %s36
      %s53 = sphi 0, %s37
      %s59 = sphi 0, %s61
      %s62 = sphi 0, %s59
      %s63 = sphi 0, %s62
      %s79 = sphi 0, %s63
      %s83 = sphi 0, %s83
      %s85 = sphi 0, %s83
      %s86 = sphi 0, %s85
      %s100 = sphi 0, %s86
      %s104 = sphi 0, %s104
      %s106 = sphi 0, %s104
      %s107 = sphi 0, %s106
      %s121 = sphi 0, %s107
      %s125 = sphi 0, %s125
      %s127 = sphi 0, %s125
      %s128 = sphi 0, %s127
      %s142 = sphi 0, %s128
      %s146 = sphi 0, %s146
      %s148 = sphi 0, %s146
      %s149 = sphi 0, %s148
      %s163 = sphi 0, %s149
      %s167 = sphi 0, %s167
      %s169 = sphi 0, %s167
      %s170 = sphi 0, %s169
      %s184 = sphi 0, %s170
      %s188 = sphi 0, %s188
      %s190 = sphi 0, %s188
      %s191 = sphi 0, %s190
      %s205 = sphi 0, %s191
      %s209 = sphi 0, %s209
      %s211 = sphi 0, %s209
      %s212 = sphi 0, %s211
      %s226 = sphi 0, %s212
      %s230 = sphi 0, %s230
      %s232 = sphi 0, %s230
      %s233 = sphi 0, %s232
      %s247 = sphi 0, %s233
    $region4: #{tpu_custom_call.1} parent=1 // loop_header_branch
      %26 = sbr.rel (%p24) target = $region8
    $region5: #{tpu_custom_call.1} parent=1 // loop_body
      %s28 = ssub.s32 %s23, 1
      %s29 = ssub.s32 %s23, 2
      %s30 = sadd.s32 %s23, 1
      %s31 = ssub.s32 %s23, %s30
      %p32 = scmp.eq.s32.totalorder %s31, 0
      %s34 = sadd.s32 %s33, 1
      %s35 = scalar_select %p32, %s33, %s34
      %p38 = pneg %p32
      %p39 = scmp.eq.s32.totalorder %s23, 2
      %p40 = por %p38, %p39
      %p41 = scmp.ne.s32.totalorder %s33, %s36
      %p42 = scmp.eq.s32.totalorder %s23, 0
      %p43 = por %p41, %p42
      %p44 = scmp.ne.s32.totalorder %s33, %s36
      %p45 = scmp.eq.s32.totalorder %s28, 2
      %p46 = por %p44, %p45
      %p47 = scmp.ne.s32.totalorder %s36, %s37
      %p48 = scmp.eq.s32.totalorder %s28, 0
      %p49 = por %p47, %p48
      %p50 = scmp.ne.s32.totalorder %s36, %s37
      %p51 = scmp.eq.s32.totalorder %s29, 2
      %p52 = por %p50, %p51
      %p54 = scmp.ne.s32.totalorder %s37, %s53
      %p55 = scmp.eq.s32.totalorder %s29, 0
      %p56 = por %p54, %p55
      %s57 = ssub.s32 %s23, %s30
      %p58 = scmp.eq.s32.totalorder %s57, 0
      %s60 = sadd.s32 %s59, 1
      %s61 = scalar_select %p58, %s59, %s60
      %p64 = pneg %p58
      %p65 = scmp.eq.s32.totalorder %s23, 2
      %p66 = por %p64, %p65
      %p67 = scmp.ne.s32.totalorder %s59, %s62
      %p68 = scmp.eq.s32.totalorder %s23, 0
      %p69 = por %p67, %p68
      %p70 = scmp.ne.s32.totalorder %s59, %s62
      %p71 = scmp.eq.s32.totalorder %s28, 2
      %p72 = por %p70, %p71
      %p73 = scmp.ne.s32.totalorder %s62, %s63
      %p74 = scmp.eq.s32.totalorder %s28, 0
      %p75 = por %p73, %p74
      %p76 = scmp.ne.s32.totalorder %s62, %s63
      %p77 = scmp.eq.s32.totalorder %s29, 2
      %p78 = por %p76, %p77
      %p80 = scmp.ne.s32.totalorder %s63, %s79
      %p81 = scmp.eq.s32.totalorder %s29, 0
      %p82 = por %p80, %p81
      %s84 = sadd.s32 %s83, 1
      %p87 = scmp.eq.s32.totalorder %s23, 2
      %p88 = scmp.ne.s32.totalorder %s83, %s85
      %p89 = scmp.eq.s32.totalorder %s23, 0
      %p90 = por %p88, %p89
      %p91 = scmp.ne.s32.totalorder %s83, %s85
      %p92 = scmp.eq.s32.totalorder %s28, 2
      %p93 = por %p91, %p92
      %p94 = scmp.ne.s32.totalorder %s85, %s86
      %p95 = scmp.eq.s32.totalorder %s28, 0
      %p96 = por %p94, %p95
      %p97 = scmp.ne.s32.totalorder %s85, %s86
      %p98 = scmp.eq.s32.totalorder %s29, 2
      %p99 = por %p97, %p98
      %p101 = scmp.ne.s32.totalorder %s86, %s100
      %p102 = scmp.eq.s32.totalorder %s29, 0
      %p103 = por %p101, %p102
      %s105 = sadd.s32 %s104, 1
      %p108 = scmp.eq.s32.totalorder %s23, 2
      %p109 = scmp.ne.s32.totalorder %s104, %s106
      %p110 = scmp.eq.s32.totalorder %s23, 0
      %p111 = por %p109, %p110
      %p112 = scmp.ne.s32.totalorder %s104, %s106
      %p113 = scmp.eq.s32.totalorder %s28, 2
      %p114 = por %p112, %p113
      %p115 = scmp.ne.s32.totalorder %s106, %s107
      %p116 = scmp.eq.s32.totalorder %s28, 0
      %p117 = por %p115, %p116
      %p118 = scmp.ne.s32.totalorder %s106, %s107
      %p119 = scmp.eq.s32.totalorder %s29, 2
      %p120 = por %p118, %p119
      %p122 = scmp.ne.s32.totalorder %s107, %s121
      %p123 = scmp.eq.s32.totalorder %s29, 0
      %p124 = por %p122, %p123
      %s126 = sadd.s32 %s125, 1
      %p129 = scmp.eq.s32.totalorder %s23, 2
      %p130 = scmp.ne.s32.totalorder %s125, %s127
      %p131 = scmp.eq.s32.totalorder %s23, 0
      %p132 = por %p130, %p131
      %p133 = scmp.ne.s32.totalorder %s125, %s127
      %p134 = scmp.eq.s32.totalorder %s28, 2
      %p135 = por %p133, %p134
      %p136 = scmp.ne.s32.totalorder %s127, %s128
      %p137 = scmp.eq.s32.totalorder %s28, 0
      %p138 = por %p136, %p137
      %p139 = scmp.ne.s32.totalorder %s127, %s128
      %p140 = scmp.eq.s32.totalorder %s29, 2
      %p141 = por %p139, %p140
      %p143 = scmp.ne.s32.totalorder %s128, %s142
      %p144 = scmp.eq.s32.totalorder %s29, 0
      %p145 = por %p143, %p144
      %s147 = sadd.s32 %s146, 1
      %p150 = scmp.eq.s32.totalorder %s23, 2
      %p151 = scmp.ne.s32.totalorder %s146, %s148
      %p152 = scmp.eq.s32.totalorder %s23, 0
      %p153 = por %p151, %p152
      %p154 = scmp.ne.s32.totalorder %s146, %s148
      %p155 = scmp.eq.s32.totalorder %s28, 2
      %p156 = por %p154, %p155
      %p157 = scmp.ne.s32.totalorder %s148, %s149
      %p158 = scmp.eq.s32.totalorder %s28, 0
      %p159 = por %p157, %p158
      %p160 = scmp.ne.s32.totalorder %s148, %s149
      %p161 = scmp.eq.s32.totalorder %s29, 2
      %p162 = por %p160, %p161
      %p164 = scmp.ne.s32.totalorder %s149, %s163
      %p165 = scmp.eq.s32.totalorder %s29, 0
      %p166 = por %p164, %p165
      %s168 = sadd.s32 %s167, 1
      %p171 = scmp.eq.s32.totalorder %s23, 2
      %p172 = scmp.ne.s32.totalorder %s167, %s169
      %p173 = scmp.eq.s32.totalorder %s23, 0
      %p174 = por %p172, %p173
      %p175 = scmp.ne.s32.totalorder %s167, %s169
      %p176 = scmp.eq.s32.totalorder %s28, 2
      %p177 = por %p175, %p176
      %p178 = scmp.ne.s32.totalorder %s169, %s170
      %p179 = scmp.eq.s32.totalorder %s28, 0
      %p180 = por %p178, %p179
      %p181 = scmp.ne.s32.totalorder %s169, %s170
      %p182 = scmp.eq.s32.totalorder %s29, 2
      %p183 = por %p181, %p182
      %p185 = scmp.ne.s32.totalorder %s170, %s184
      %p186 = scmp.eq.s32.totalorder %s29, 0
      %p187 = por %p185, %p186
      %s189 = sadd.s32 %s188, 1
      %p192 = scmp.eq.s32.totalorder %s23, 2
      %p193 = scmp.ne.s32.totalorder %s188, %s190
      %p194 = scmp.eq.s32.totalorder %s23, 0
      %p195 = por %p193, %p194
      %p196 = scmp.ne.s32.totalorder %s188, %s190
      %p197 = scmp.eq.s32.totalorder %s28, 2
      %p198 = por %p196, %p197
      %p199 = scmp.ne.s32.totalorder %s190, %s191
      %p200 = scmp.eq.s32.totalorder %s28, 0
      %p201 = por %p199, %p200
      %p202 = scmp.ne.s32.totalorder %s190, %s191
      %p203 = scmp.eq.s32.totalorder %s29, 2
      %p204 = por %p202, %p203
      %p206 = scmp.ne.s32.totalorder %s191, %s205
      %p207 = scmp.eq.s32.totalorder %s29, 0
      %p208 = por %p206, %p207
      %s210 = sadd.s32 %s209, 1
      %p213 = scmp.eq.s32.totalorder %s23, 2
      %p214 = scmp.ne.s32.totalorder %s209, %s211
      %p215 = scmp.eq.s32.totalorder %s23, 0
      %p216 = por %p214, %p215
      %p217 = scmp.ne.s32.totalorder %s209, %s211
      %p218 = scmp.eq.s32.totalorder %s28, 2
      %p219 = por %p217, %p218
      %p220 = scmp.ne.s32.totalorder %s211, %s212
      %p221 = scmp.eq.s32.totalorder %s28, 0
      %p222 = por %p220, %p221
      %p223 = scmp.ne.s32.totalorder %s211, %s212
      %p224 = scmp.eq.s32.totalorder %s29, 2
      %p225 = por %p223, %p224
      %p227 = scmp.ne.s32.totalorder %s212, %s226
      %p228 = scmp.eq.s32.totalorder %s29, 0
      %p229 = por %p227, %p228
      %s231 = sadd.s32 %s230, 1
      %p234 = scmp.eq.s32.totalorder %s23, 2
      %p235 = scmp.ne.s32.totalorder %s230, %s232
      %p236 = scmp.eq.s32.totalorder %s23, 0
      %p237 = por %p235, %p236
      %p238 = scmp.ne.s32.totalorder %s230, %s232
      %p239 = scmp.eq.s32.totalorder %s28, 2
      %p240 = por %p238, %p239
      %p241 = scmp.ne.s32.totalorder %s232, %s233
      %p242 = scmp.eq.s32.totalorder %s28, 0
      %p243 = por %p241, %p242
      %p244 = scmp.ne.s32.totalorder %s232, %s233
      %p245 = scmp.eq.s32.totalorder %s29, 2
      %p246 = por %p244, %p245
      %p248 = scmp.ne.s32.totalorder %s233, %s247
      %p249 = scmp.eq.s32.totalorder %s29, 0
      %p250 = por %p248, %p249
      %p251 = scmp.le.s32.totalorder 1, %s23
      %p252 = scmp.lt.s32.totalorder %s23, 4
      %p253 = pnand %p251, %p252
      %p254 = pneg %p253
      // Predicated region
      $region9: #{tpu_custom_call.1} parent=5 // pred_check
        _
      $region10: #{tpu_custom_call.1} parent=5 // pred_check_branch
        %256 = sbr.rel (%p253) target = $region12
      $region11: #{tpu_custom_call.1} parent=5 // pred_region
        %s257 = ssub.s32 %s23, 1
        // Predicated region
        $region13: #{tpu_custom_call.1} parent=11 // pred_check
          %p258 = pneg %p96
        $region14: #{tpu_custom_call.1} parent=11 // pred_check_branch
          %260 = sbr.rel (%p258) target = $region16
        $region15: #{tpu_custom_call.1} parent=11 // pred_region
          %262 = vsyncadd [#allocation7], 0
          %s263 = sshll.u32 %s2, 4
          %s264 = int_to_ptr.hbm [resolvable:$true] %s263
          %s265 = sshll.u32 [#allocation6], 4
          %s266 = int_to_ptr.vmem [resolvable:$true] %s265
          %271 = dma.hbm_to_vmem [thread:$0]  %s264, 2048, %s266, [#allocation7], 512, 512, 32
        $region16: #{tpu_custom_call.1} parent=11 // pred_fallthru
          _
        // Predicated region
        $region17: #{tpu_custom_call.1} parent=11 // pred_check
          %p272 = pneg %p117
        $region18: #{tpu_custom_call.1} parent=11 // pred_check_branch
          %274 = sbr.rel (%p272) target = $region20
        $region19: #{tpu_custom_call.1} parent=11 // pred_region
          %276 = vsyncadd [#allocation7], 0
          %s278 = sshll.u32 %s3, 4
          %s279 = int_to_ptr.hbm [resolvable:$true] %s278
          %s280 = sshll.u32 [#allocation8], 4
          %s281 = int_to_ptr.vmem [resolvable:$true] %s280
          %283 = dma.hbm_to_vmem [thread:$0]  %s279, 16, %s281, [#allocation7]
        $region20: #{tpu_custom_call.1} parent=11 // pred_fallthru
          _
        // Predicated region
        $region21: #{tpu_custom_call.1} parent=11 // pred_check
          %p284 = pneg %p138
        $region22: #{tpu_custom_call.1} parent=11 // pred_check_branch
          %286 = sbr.rel (%p284) target = $region24
        $region23: #{tpu_custom_call.1} parent=11 // pred_region
          %288 = vsyncadd [#allocation10], 0
          %s289 = sshll.u32 %s4, 4
          %s290 = int_to_ptr.hbm [resolvable:$true] %s289
          %s291 = sshll.u32 [#allocation9], 4
          %s292 = int_to_ptr.vmem [resolvable:$true] %s291
          %297 = dma.hbm_to_vmem [thread:$0]  %s290, 98304, %s292, [#allocation10], 1536, 1536, 96
        $region24: #{tpu_custom_call.1} parent=11 // pred_fallthru
          _
        // Predicated region
        $region25: #{tpu_custom_call.1} parent=11 // pred_check
          %p298 = pneg %p159
        $region26: #{tpu_custom_call.1} parent=11 // pred_check_branch
          %300 = sbr.rel (%p298) target = $region28
        $region27: #{tpu_custom_call.1} parent=11 // pred_region
          %302 = vsyncadd [#allocation10], 0
          %s303 = sshll.u32 %s5, 4
          %s304 = int_to_ptr.hbm [resolvable:$true] %s303
          %s305 = sshll.u32 [#allocation11], 4
          %s306 = int_to_ptr.vmem [resolvable:$true] %s305
          %311 = dma.hbm_to_vmem [thread:$0]  %s304, 6144, %s306, [#allocation10], 384, 384, 24
        $region28: #{tpu_custom_call.1} parent=11 // pred_fallthru
          _
        // Predicated region
        $region29: #{tpu_custom_call.1} parent=11 // pred_check
          %p312 = pneg %p180
        $region30: #{tpu_custom_call.1} parent=11 // pred_check_branch
          %314 = sbr.rel (%p312) target = $region32
        $region31: #{tpu_custom_call.1} parent=11 // pred_region
          %316 = vsyncadd [#allocation13], 0
          %s318 = sshll.u32 %s6, 4
          %s319 = int_to_ptr.hbm [resolvable:$true] %s318
          %s320 = sshll.u32 [#allocation12], 4
          %s321 = int_to_ptr.vmem [resolvable:$true] %s320
          %323 = dma.hbm_to_vmem [thread:$0]  %s319, 192, %s321, [#allocation13]
        $region32: #{tpu_custom_call.1} parent=11 // pred_fallthru
          _
        // Predicated region
        $region33: #{tpu_custom_call.1} parent=11 // pred_check
          %p324 = pneg %p201
        $region34: #{tpu_custom_call.1} parent=11 // pred_check_branch
          %326 = sbr.rel (%p324) target = $region36
        $region35: #{tpu_custom_call.1} parent=11 // pred_region
          %328 = vsyncadd [#allocation13], 0
          %s330 = sshll.u32 %s7, 4
          %s331 = int_to_ptr.hbm [resolvable:$true] %s330
          %s332 = sshll.u32 [#allocation14], 4
          %s333 = int_to_ptr.vmem [resolvable:$true] %s332
          %335 = dma.hbm_to_vmem [thread:$0]  %s331, 48, %s333, [#allocation13]
        $region36: #{tpu_custom_call.1} parent=11 // pred_fallthru
          _
        // Predicated region
        $region37: #{tpu_custom_call.1} parent=11 // pred_check
          %p336 = pneg %p222
        $region38: #{tpu_custom_call.1} parent=11 // pred_check_branch
          %338 = sbr.rel (%p336) target = $region40
        $region39: #{tpu_custom_call.1} parent=11 // pred_region
          %340 = vsyncadd [#allocation16], 0
          %s341 = sshll.u32 %s8, 4
          %s342 = int_to_ptr.hbm [resolvable:$true] %s341
          %s343 = sshll.u32 [#allocation15], 4
          %s344 = int_to_ptr.vmem [resolvable:$true] %s343
          %349 = dma.hbm_to_vmem [thread:$0]  %s342, 8192, %s344, [#allocation16], 128, 128, 8
        $region40: #{tpu_custom_call.1} parent=11 // pred_fallthru
          _
      $region12: #{tpu_custom_call.1} parent=5 // pred_fallthru
        _
      %p350 = scmp.lt.s32.totalorder %s23, 3
      // Predicated region
      $region41: #{tpu_custom_call.1} parent=5 // pred_check
        %p351 = pneg %p350
      $region42: #{tpu_custom_call.1} parent=5 // pred_check_branch
        %353 = sbr.rel (%p351) target = $region44
      $region43: #{tpu_custom_call.1} parent=5 // pred_region
        // Predicated region
        $region45: #{tpu_custom_call.1} parent=43 // pred_check
          %p354 = pneg %p43
        $region46: #{tpu_custom_call.1} parent=43 // pred_check_branch
          %356 = sbr.rel (%p354) target = $region48
        $region47: #{tpu_custom_call.1} parent=43 // pred_region
          %s357 = sand.u32 %s33, 1
          %s358 = scalar_lea.sflag [#allocation4], %s357
          %s359 = sand.u32 %s33, 1
          %s360 = smul.addr %s359, 4
          %s361 = scalar_lea.vmem [#allocation3], %s360
          %s362 = smul.u32 4, %s23
          %364 = vsyncadd %s358, 0
          %s365 = scalar_lea.hbm %s0, %s362
          %s367 = sshll.u32 %s365, 4
          %s368 = int_to_ptr.hbm [resolvable:$true] %s367
          %s369 = sshll.u32 %s361, 4
          %s370 = int_to_ptr.vmem [resolvable:$true] %s369
          %372 = dma.hbm_to_vmem [thread:$0]  %s368, 64, %s370, %s358
        $region48: #{tpu_custom_call.1} parent=43 // pred_fallthru
          _
        // Predicated region
        $region49: #{tpu_custom_call.1} parent=43 // pred_check
          %p373 = pneg %p69
        $region50: #{tpu_custom_call.1} parent=43 // pred_check_branch
          %375 = sbr.rel (%p373) target = $region52
        $region51: #{tpu_custom_call.1} parent=43 // pred_region
          %s376 = smul.u32 64, %s23
          %p377 = scmp.lt.s32.totalorder %s376, 191
          %s378 = scalar_select %p377, %s376, 191
          %s379 = smul.addr %s378, 8
          %s380 = scalar_lea.vmem %s1, %s379
          %s381 = smul.u32 64, %s23
        $region52: #{tpu_custom_call.1} parent=43 // pred_fallthru
          _
      $region44: #{tpu_custom_call.1} parent=5 // pred_fallthru
        _
      %p382 = scmp.le.s32.totalorder 1, %s23
      %p383 = scmp.lt.s32.totalorder %s23, 4
      %p384 = pnand %p382, %p383
      %p385 = pneg %p384
      // Predicated region
      $region53: #{tpu_custom_call.1} parent=5 // pred_check
        _
      $region54: #{tpu_custom_call.1} parent=5 // pred_check_branch
        %387 = sbr.rel (%p384) target = $region56
      $region55: #{tpu_custom_call.1} parent=5 // pred_region
        %s388 = ssub.s32 %s23, 1
        %s389 = sand.u32 %s36, 1
        %s390 = scalar_lea.sflag [#allocation4], %s389
        %s391 = sand.u32 %s36, 1
        %s392 = smul.addr %s391, 4
        %s393 = scalar_lea.vmem [#allocation3], %s392
        // Predicated region
        $region57: #{tpu_custom_call.1} parent=55 // pred_check
          %p394 = pneg %p49
        $region58: #{tpu_custom_call.1} parent=55 // pred_check_branch
          %396 = sbr.rel (%p394) target = $region60
        $region59: #{tpu_custom_call.1} parent=55 // pred_region
          %398 = dma.done %s390, 64
        $region60: #{tpu_custom_call.1} parent=55 // pred_fallthru
          _
        // Predicated region
        $region61: #{tpu_custom_call.1} parent=55 // pred_check
          %p399 = pneg %p96
        $region62: #{tpu_custom_call.1} parent=55 // pred_check_branch
          %401 = sbr.rel (%p399) target = $region64
        $region63: #{tpu_custom_call.1} parent=55 // pred_region
          %403 = dma.done [#allocation7], 2048
        $region64: #{tpu_custom_call.1} parent=55 // pred_fallthru
          _
        // Predicated region
        $region65: #{tpu_custom_call.1} parent=55 // pred_check
          %p404 = pneg %p117
        $region66: #{tpu_custom_call.1} parent=55 // pred_check_branch
          %406 = sbr.rel (%p404) target = $region68
        $region67: #{tpu_custom_call.1} parent=55 // pred_region
          %408 = dma.done [#allocation7], 16
        $region68: #{tpu_custom_call.1} parent=55 // pred_fallthru
          _
        // Predicated region
        $region69: #{tpu_custom_call.1} parent=55 // pred_check
          %p409 = pneg %p138
        $region70: #{tpu_custom_call.1} parent=55 // pred_check_branch
          %411 = sbr.rel (%p409) target = $region72
        $region71: #{tpu_custom_call.1} parent=55 // pred_region
          %413 = dma.done [#allocation10], 98304
        $region72: #{tpu_custom_call.1} parent=55 // pred_fallthru
          _
        // Predicated region
        $region73: #{tpu_custom_call.1} parent=55 // pred_check
          %p414 = pneg %p159
        $region74: #{tpu_custom_call.1} parent=55 // pred_check_branch
          %416 = sbr.rel (%p414) target = $region76
        $region75: #{tpu_custom_call.1} parent=55 // pred_region
          %418 = dma.done [#allocation10], 6144
        $region76: #{tpu_custom_call.1} parent=55 // pred_fallthru
          _
        // Predicated region
        $region77: #{tpu_custom_call.1} parent=55 // pred_check
          %p419 = pneg %p180
        $region78: #{tpu_custom_call.1} parent=55 // pred_check_branch
          %421 = sbr.rel (%p419) target = $region80
        $region79: #{tpu_custom_call.1} parent=55 // pred_region
          %423 = dma.done [#allocation13], 192
        $region80: #{tpu_custom_call.1} parent=55 // pred_fallthru
          _
        // Predicated region
        $region81: #{tpu_custom_call.1} parent=55 // pred_check
          %p424 = pneg %p201
        $region82: #{tpu_custom_call.1} parent=55 // pred_check_branch
          %426 = sbr.rel (%p424) target = $region84
        $region83: #{tpu_custom_call.1} parent=55 // pred_region
          %428 = dma.done [#allocation13], 48
        $region84: #{tpu_custom_call.1} parent=55 // pred_fallthru
          _
        // Predicated region
        $region85: #{tpu_custom_call.1} parent=55 // pred_check
          %p429 = pneg %p222
        $region86: #{tpu_custom_call.1} parent=55 // pred_check_branch
          %431 = sbr.rel (%p429) target = $region88
        $region87: #{tpu_custom_call.1} parent=55 // pred_region
          %433 = dma.done [#allocation16], 8192
        $region88: #{tpu_custom_call.1} parent=55 // pred_fallthru
          _
        %s434 = sand.u32 %s36, 1
        %s435 = scalar_lea.sflag [#allocation4], %s434
        %s436 = sand.u32 %s36, 1
        %s437 = smul.addr %s436, 4
        %s438 = scalar_lea.vmem [#allocation3], %s437
        %p439 = pneg %p49
        %p440 = pneg %p46
        %s441 = smul.u32 64, %s28
        %p442 = scmp.lt.s32.totalorder %s441, 191
        %s443 = scalar_select %p442, %s441, 191
        %s444 = smul.addr %s443, 8
        %s445 = scalar_lea.vmem %s1, %s444
        %p446 = pneg %p75
        %p447 = pneg %p72
        %p448 = pneg %p96
        %p449 = pneg %p93
        %p450 = pneg %p117
        %p451 = pneg %p114
        %p452 = pneg %p138
        %p453 = pneg %p135
        %p454 = pneg %p159
        %p455 = pneg %p156
        %p456 = pneg %p180
        %p457 = pneg %p177
        %p458 = pneg %p201
        %p459 = pneg %p198
        %p460 = pneg %p222
        %p461 = pneg %p219
        %p462 = pneg %p243
        %p463 = pneg %p240
        %s464 = smul.u32 4, %s28
        %s465 = smul.u32 64, %s28
        %p466 = scmp.lt.s32.totalorder %s465, 191
        %s467 = scalar_select %p466, %s465, 191
        %s468 = smul.addr %s467, 8
        %s469 = scalar_lea.vmem %s1, %s468
        %s470 = smul.u32 64, %s28
        %p471 = scmp.eq.s32.totalorder %s28, 0
        // Predicated region
        $region89: #{tpu_custom_call.1} parent=55 // pred_check
          %p472 = pneg %p471
        $region90: #{tpu_custom_call.1} parent=55 // pred_check_branch
          %474 = sbr.rel (%p472) target = $region92
        $region91: #{tpu_custom_call.1} parent=55 // pred_region
          %vm475 = vcmask 261120
          %476 = vst.msk [vmem:[#allocation2] sm:$0xff] %vm475, 0.0
        $region92: #{tpu_custom_call.1} parent=55 // pred_fallthru
          _
        %v477 = vld [vmem:[%s393] sm:$0xf]
        %v478 = vlaneseq
        %v479 = vshrl.u32 %v478, 7
        %v480 = vperm.slane %v477, 0
        %v481 = vperm.slane %v477, 1
        %v482 = vperm.slane %v477, 2
        %v483 = vperm.slane %v477, 3
        %vm484 = vcmp.eq.s32.totalorder %v479, %v480
        %vm485 = vcmp.eq.s32.totalorder %v479, %v481
        %vm486 = vcmp.eq.s32.totalorder %v479, %v482
        %vm487 = vcmp.eq.s32.totalorder %v479, %v483
        %v488 = vsel %vm484, 1, 0
        %v489 = vsel %vm485, 1, 0
        %v490 = vsel %vm486, 1, 0
        %v491 = vsel %vm487, 1, 0
        %v492 = vcvt.s32.f32 %v488
        %v493 = vcvt.s32.f32 %v489
        %v494 = vcvt.s32.f32 %v490
        %v495 = vcvt.s32.f32 %v491
        %v496 = vld [vmem:[#allocation2] sm:$0xff]
        %v497 = vld [vmem:[%s469] sm:$0xff]
        %v498 = vld [vmem:[%s469 + $0x8] sm:$0xff]
        %v499 = vld [vmem:[%s469 + $0x10] sm:$0xff]
        %v500 = vld [vmem:[%s469 + $0x18] sm:$0xff]
        %v501 = vld [vmem:[%s469 + $0x20] sm:$0xff]
        %v502 = vld [vmem:[%s469 + $0x28] sm:$0xff]
        %v503 = vld [vmem:[%s469 + $0x30] sm:$0xff]
        %v504 = vld [vmem:[%s469 + $0x38] sm:$0xff]
        %v505 = vld [vmem:[%s469 + $0x40] sm:$0xff]
        %v506 = vld [vmem:[%s469 + $0x48] sm:$0xff]
        %v507 = vld [vmem:[%s469 + $0x50] sm:$0xff]
        %v508 = vld [vmem:[%s469 + $0x58] sm:$0xff]
        %v509 = vld [vmem:[%s469 + $0x60] sm:$0xff]
        %v510 = vld [vmem:[%s469 + $0x68] sm:$0xff]
        %v511 = vld [vmem:[%s469 + $0x70] sm:$0xff]
        %v512 = vld [vmem:[%s469 + $0x78] sm:$0xff]
        %v513 = vld [vmem:[%s469 + $0x80] sm:$0xff]
        %v514 = vld [vmem:[%s469 + $0x88] sm:$0xff]
        %v515 = vld [vmem:[%s469 + $0x90] sm:$0xff]
        %v516 = vld [vmem:[%s469 + $0x98] sm:$0xff]
        %v517 = vld [vmem:[%s469 + $0xa0] sm:$0xff]
        %v518 = vld [vmem:[%s469 + $0xa8] sm:$0xff]
        %v519 = vld [vmem:[%s469 + $0xb0] sm:$0xff]
        %v520 = vld [vmem:[%s469 + $0xb8] sm:$0xff]
        %v521 = vld [vmem:[%s469 + $0xc0] sm:$0xff]
        %v522 = vld [vmem:[%s469 + $0xc8] sm:$0xff]
        %v523 = vld [vmem:[%s469 + $0xd0] sm:$0xff]
        %v524 = vld [vmem:[%s469 + $0xd8] sm:$0xff]
        %v525 = vld [vmem:[%s469 + $0xe0] sm:$0xff]
        %v526 = vld [vmem:[%s469 + $0xe8] sm:$0xff]
        %v527 = vld [vmem:[%s469 + $0xf0] sm:$0xff]
        %v528 = vld [vmem:[%s469 + $0xf8] sm:$0xff]
        %v529 = vld [vmem:[%s469 + $0x100] sm:$0xff]
        %v530 = vld [vmem:[%s469 + $0x108] sm:$0xff]
        %v531 = vld [vmem:[%s469 + $0x110] sm:$0xff]
        %v532 = vld [vmem:[%s469 + $0x118] sm:$0xff]
        %v533 = vld [vmem:[%s469 + $0x120] sm:$0xff]
        %v534 = vld [vmem:[%s469 + $0x128] sm:$0xff]
        %v535 = vld [vmem:[%s469 + $0x130] sm:$0xff]
        %v536 = vld [vmem:[%s469 + $0x138] sm:$0xff]
        %v537 = vld [vmem:[%s469 + $0x140] sm:$0xff]
        %v538 = vld [vmem:[%s469 + $0x148] sm:$0xff]
        %v539 = vld [vmem:[%s469 + $0x150] sm:$0xff]
        %v540 = vld [vmem:[%s469 + $0x158] sm:$0xff]
        %v541 = vld [vmem:[%s469 + $0x160] sm:$0xff]
        %v542 = vld [vmem:[%s469 + $0x168] sm:$0xff]
        %v543 = vld [vmem:[%s469 + $0x170] sm:$0xff]
        %v544 = vld [vmem:[%s469 + $0x178] sm:$0xff]
        %v545 = vld [vmem:[%s469 + $0x180] sm:$0xff]
        %v546 = vld [vmem:[%s469 + $0x188] sm:$0xff]
        %v547 = vld [vmem:[%s469 + $0x190] sm:$0xff]
        %v548 = vld [vmem:[%s469 + $0x198] sm:$0xff]
        %v549 = vld [vmem:[%s469 + $0x1a0] sm:$0xff]
        %v550 = vld [vmem:[%s469 + $0x1a8] sm:$0xff]
        %v551 = vld [vmem:[%s469 + $0x1b0] sm:$0xff]
        %v552 = vld [vmem:[%s469 + $0x1b8] sm:$0xff]
        %v553 = vld [vmem:[%s469 + $0x1c0] sm:$0xff]
        %v554 = vld [vmem:[%s469 + $0x1c8] sm:$0xff]
        %v555 = vld [vmem:[%s469 + $0x1d0] sm:$0xff]
        %v556 = vld [vmem:[%s469 + $0x1d8] sm:$0xff]
        %v557 = vld [vmem:[%s469 + $0x1e0] sm:$0xff]
        %v558 = vld [vmem:[%s469 + $0x1e8] sm:$0xff]
        %v559 = vld [vmem:[%s469 + $0x1f0] sm:$0xff]
        %v560 = vld [vmem:[%s469 + $0x1f8] sm:$0xff]
        %v561 = vand.u32 %v512, 4294901760
        %562 = vmatpush.msra.mxu0 %v561
        %v563 = vand.u32 %v511, 4294901760
        %564 = vmatpush.msra.mxu0 %v563
        %v565 = vand.u32 %v510, 4294901760
        %566 = vmatpush.msra.mxu0 %v565
        %v567 = vand.u32 %v509, 4294901760
        %568 = vmatpush.msra.mxu0 %v567
        %v569 = vand.u32 %v508, 4294901760
        %570 = vmatpush.msra.mxu0 %v569
        %v571 = vand.u32 %v507, 4294901760
        %572 = vmatpush.msra.mxu0 %v571
        %v573 = vand.u32 %v506, 4294901760
        %574 = vmatpush.msra.mxu0 %v573
        %v575 = vand.u32 %v505, 4294901760
        %576 = vmatpush.msra.mxu0 %v575
        %v577 = vand.u32 %v504, 4294901760
        %578 = vmatpush.msra.mxu0 %v577
        %v579 = vand.u32 %v503, 4294901760
        %580 = vmatpush.msra.mxu0 %v579
        %v581 = vand.u32 %v502, 4294901760
        %582 = vmatpush.msra.mxu0 %v581
        %v583 = vand.u32 %v501, 4294901760
        %584 = vmatpush.msra.mxu0 %v583
        %v585 = vand.u32 %v500, 4294901760
        %586 = vmatpush.msra.mxu0 %v585
        %v587 = vand.u32 %v499, 4294901760
        %588 = vmatpush.msra.mxu0 %v587
        %v589 = vand.u32 %v498, 4294901760
        %590 = vmatpush.msra.mxu0 %v589
        %v591 = vand.u32 %v497, 4294901760
        %592 = vmatpush.msra.mxu0 %v591
        %v593 = vand.u32 %v492, 4294901760
        %v594 = vsub.f32 %v492, %v593
        %v595 = vand.u32 %v594, 4294901760
        %v596 = vsub.f32 %v594, %v595
        %v597 = vand.u32 %v596, 4294901760
        %598 = vmatmul.f32.gmra.mxu0 %v597
        %v599 = vpop.f32.mrf.mxu0
        %v600 = vadd.f32 0.0, %v599
        %601 = vdwg.mxu0
        %v602 = vand.u32 %v512, 4294901760
        %v603 = vsub.f32 %v512, %v602
        %v604 = vand.u32 %v603, 4294901760
        %v605 = vsub.f32 %v603, %v604
        %v606 = vand.u32 %v605, 4294901760
        %607 = vmatpush.msra.mxu0 %v606
        %v608 = vand.u32 %v511, 4294901760
        %v609 = vsub.f32 %v511, %v608
        %v610 = vand.u32 %v609, 4294901760
        %v611 = vsub.f32 %v609, %v610
        %v612 = vand.u32 %v611, 4294901760
        %613 = vmatpush.msra.mxu0 %v612
        %v614 = vand.u32 %v510, 4294901760
        %v615 = vsub.f32 %v510, %v614
        %v616 = vand.u32 %v615, 4294901760
        %v617 = vsub.f32 %v615, %v616
        %v618 = vand.u32 %v617, 4294901760
        %619 = vmatpush.msra.mxu0 %v618
        %v620 = vand.u32 %v509, 4294901760
        %v621 = vsub.f32 %v509, %v620
        %v622 = vand.u32 %v621, 4294901760
        %v623 = vsub.f32 %v621, %v622
        %v624 = vand.u32 %v623, 4294901760
        %625 = vmatpush.msra.mxu0 %v624
        %v626 = vand.u32 %v508, 4294901760
        %v627 = vsub.f32 %v508, %v626
        %v628 = vand.u32 %v627, 4294901760
        %v629 = vsub.f32 %v627, %v628
        %v630 = vand.u32 %v629, 4294901760
        %631 = vmatpush.msra.mxu0 %v630
        %v632 = vand.u32 %v507, 4294901760
        %v633 = vsub.f32 %v507, %v632
        %v634 = vand.u32 %v633, 4294901760
        %v635 = vsub.f32 %v633, %v634
        %v636 = vand.u32 %v635, 4294901760
        %637 = vmatpush.msra.mxu0 %v636
        %v638 = vand.u32 %v506, 4294901760
        %v639 = vsub.f32 %v506, %v638
        %v640 = vand.u32 %v639, 4294901760
        %v641 = vsub.f32 %v639, %v640
        %v642 = vand.u32 %v641, 4294901760
        %643 = vmatpush.msra.mxu0 %v642
        %v644 = vand.u32 %v505, 4294901760
        %v645 = vsub.f32 %v505, %v644
        %v646 = vand.u32 %v645, 4294901760
        %v647 = vsub.f32 %v645, %v646
        %v648 = vand.u32 %v647, 4294901760
        %649 = vmatpush.msra.mxu0 %v648
        %v650 = vand.u32 %v504, 4294901760
        %v651 = vsub.f32 %v504, %v650
        %v652 = vand.u32 %v651, 4294901760
        %v653 = vsub.f32 %v651, %v652
        %v654 = vand.u32 %v653, 4294901760
        %655 = vmatpush.msra.mxu0 %v654
        %v656 = vand.u32 %v503, 4294901760
        %v657 = vsub.f32 %v503, %v656
        %v658 = vand.u32 %v657, 4294901760
        %v659 = vsub.f32 %v657, %v658
        %v660 = vand.u32 %v659, 4294901760
        %661 = vmatpush.msra.mxu0 %v660
        %v662 = vand.u32 %v502, 4294901760
        %v663 = vsub.f32 %v502, %v662
        %v664 = vand.u32 %v663, 4294901760
        %v665 = vsub.f32 %v663, %v664
        %v666 = vand.u32 %v665, 4294901760
        %667 = vmatpush.msra.mxu0 %v666
        %v668 = vand.u32 %v501, 4294901760
        %v669 = vsub.f32 %v501, %v668
        %v670 = vand.u32 %v669, 4294901760
        %v671 = vsub.f32 %v669, %v670
        %v672 = vand.u32 %v671, 4294901760
        %673 = vmatpush.msra.mxu0 %v672
        %v674 = vand.u32 %v500, 4294901760
        %v675 = vsub.f32 %v500, %v674
        %v676 = vand.u32 %v675, 4294901760
        %v677 = vsub.f32 %v675, %v676
        %v678 = vand.u32 %v677, 4294901760
        %679 = vmatpush.msra.mxu0 %v678
        %v680 = vand.u32 %v499, 4294901760
        %v681 = vsub.f32 %v499, %v680
        %v682 = vand.u32 %v681, 4294901760
        %v683 = vsub.f32 %v681, %v682
        %v684 = vand.u32 %v683, 4294901760
        %685 = vmatpush.msra.mxu0 %v684
        %v686 = vand.u32 %v498, 4294901760
        %v687 = vsub.f32 %v498, %v686
        %v688 = vand.u32 %v687, 4294901760
        %v689 = vsub.f32 %v687, %v688
        %v690 = vand.u32 %v689, 4294901760
        %691 = vmatpush.msra.mxu0 %v690
        %v692 = vand.u32 %v497, 4294901760
        %v693 = vsub.f32 %v497, %v692
        %v694 = vand.u32 %v693, 4294901760
        %v695 = vsub.f32 %v693, %v694
        %v696 = vand.u32 %v695, 4294901760
        %697 = vmatpush.msra.mxu0 %v696
        %v698 = vand.u32 %v492, 4294901760
        %699 = vmatmul.f32.gmra.mxu0 %v698
        %v700 = vpop.f32.mrf.mxu0
        %v701 = vadd.f32 %v600, %v700
        %702 = vdwg.mxu0
        %v703 = vand.u32 %v512, 4294901760
        %v704 = vsub.f32 %v512, %v703
        %705 = vmatpush.msra.mxu0 %v704
        %v706 = vand.u32 %v511, 4294901760
        %v707 = vsub.f32 %v511, %v706
        %708 = vmatpush.msra.mxu0 %v707
        %v709 = vand.u32 %v510, 4294901760
        %v710 = vsub.f32 %v510, %v709
        %711 = vmatpush.msra.mxu0 %v710
        %v712 = vand.u32 %v509, 4294901760
        %v713 = vsub.f32 %v509, %v712
        %714 = vmatpush.msra.mxu0 %v713
        %v715 = vand.u32 %v508, 4294901760
        %v716 = vsub.f32 %v508, %v715
        %717 = vmatpush.msra.mxu0 %v716
        %v718 = vand.u32 %v507, 4294901760
        %v719 = vsub.f32 %v507, %v718
        %720 = vmatpush.msra.mxu0 %v719
        %v721 = vand.u32 %v506, 4294901760
        %v722 = vsub.f32 %v506, %v721
        %723 = vmatpush.msra.mxu0 %v722
        %v724 = vand.u32 %v505, 4294901760
        %v725 = vsub.f32 %v505, %v724
        %726 = vmatpush.msra.mxu0 %v725
        %v727 = vand.u32 %v504, 4294901760
        %v728 = vsub.f32 %v504, %v727
        %729 = vmatpush.msra.mxu0 %v728
        %v730 = vand.u32 %v503, 4294901760
        %v731 = vsub.f32 %v503, %v730
        %732 = vmatpush.msra.mxu0 %v731
        %v733 = vand.u32 %v502, 4294901760
        %v734 = vsub.f32 %v502, %v733
        %735 = vmatpush.msra.mxu0 %v734
        %v736 = vand.u32 %v501, 4294901760
        %v737 = vsub.f32 %v501, %v736
        %738 = vmatpush.msra.mxu0 %v737
        %v739 = vand.u32 %v500, 4294901760
        %v740 = vsub.f32 %v500, %v739
        %741 = vmatpush.msra.mxu0 %v740
        %v742 = vand.u32 %v499, 4294901760
        %v743 = vsub.f32 %v499, %v742
        %744 = vmatpush.msra.mxu0 %v743
        %v745 = vand.u32 %v498, 4294901760
        %v746 = vsub.f32 %v498, %v745
        %747 = vmatpush.msra.mxu0 %v746
        %v748 = vand.u32 %v497, 4294901760
        %v749 = vsub.f32 %v497, %v748
        %750 = vmatpush.msra.mxu0 %v749
        %v751 = vand.u32 %v492, 4294901760
        %v752 = vsub.f32 %v492, %v751
        %753 = vmatmul.f32.gmra.mxu0 %v752
        %v754 = vpop.f32.mrf.mxu0
        %v755 = vadd.f32 %v701, %v754
        %756 = vdwg.mxu0
        %v757 = vand.u32 %v512, 4294901760
        %758 = vmatpush.msra.mxu0 %v757
        %v759 = vand.u32 %v511, 4294901760
        %760 = vmatpush.msra.mxu0 %v759
        %v761 = vand.u32 %v510, 4294901760
        %762 = vmatpush.msra.mxu0 %v761
        %v763 = vand.u32 %v509, 4294901760
        %764 = vmatpush.msra.mxu0 %v763
        %v765 = vand.u32 %v508, 4294901760
        %766 = vmatpush.msra.mxu0 %v765
        %v767 = vand.u32 %v507, 4294901760
        %768 = vmatpush.msra.mxu0 %v767
        %v769 = vand.u32 %v506, 4294901760
        %770 = vmatpush.msra.mxu0 %v769
        %v771 = vand.u32 %v505, 4294901760
        %772 = vmatpush.msra.mxu0 %v771
        %v773 = vand.u32 %v504, 4294901760
        %774 = vmatpush.msra.mxu0 %v773
        %v775 = vand.u32 %v503, 4294901760
        %776 = vmatpush.msra.mxu0 %v775
        %v777 = vand.u32 %v502, 4294901760
        %778 = vmatpush.msra.mxu0 %v777
        %v779 = vand.u32 %v501, 4294901760
        %780 = vmatpush.msra.mxu0 %v779
        %v781 = vand.u32 %v500, 4294901760
        %782 = vmatpush.msra.mxu0 %v781
        %v783 = vand.u32 %v499, 4294901760
        %784 = vmatpush.msra.mxu0 %v783
        %v785 = vand.u32 %v498, 4294901760
        %786 = vmatpush.msra.mxu0 %v785
        %v787 = vand.u32 %v497, 4294901760
        %788 = vmatpush.msra.mxu0 %v787
        %v789 = vand.u32 %v492, 4294901760
        %v790 = vsub.f32 %v492, %v789
        %v791 = vand.u32 %v790, 4294901760
        %792 = vmatmul.f32.gmra.mxu0 %v791
        %v793 = vpop.f32.mrf.mxu0
        %v794 = vadd.f32 %v755, %v793
        %795 = vdwg.mxu0
        %v796 = vand.u32 %v512, 4294901760
        %v797 = vsub.f32 %v512, %v796
        %v798 = vand.u32 %v797, 4294901760
        %799 = vmatpush.msra.mxu0 %v798
        %v800 = vand.u32 %v511, 4294901760
        %v801 = vsub.f32 %v511, %v800
        %v802 = vand.u32 %v801, 4294901760
        %803 = vmatpush.msra.mxu0 %v802
        %v804 = vand.u32 %v510, 4294901760
        %v805 = vsub.f32 %v510, %v804
        %v806 = vand.u32 %v805, 4294901760
        %807 = vmatpush.msra.mxu0 %v806
        %v808 = vand.u32 %v509, 4294901760
        %v809 = vsub.f32 %v509, %v808
        %v810 = vand.u32 %v809, 4294901760
        %811 = vmatpush.msra.mxu0 %v810
        %v812 = vand.u32 %v508, 4294901760
        %v813 = vsub.f32 %v508, %v812
        %v814 = vand.u32 %v813, 4294901760
        %815 = vmatpush.msra.mxu0 %v814
        %v816 = vand.u32 %v507, 4294901760
        %v817 = vsub.f32 %v507, %v816
        %v818 = vand.u32 %v817, 4294901760
        %819 = vmatpush.msra.mxu0 %v818
        %v820 = vand.u32 %v506, 4294901760
        %v821 = vsub.f32 %v506, %v820
        %v822 = vand.u32 %v821, 4294901760
        %823 = vmatpush.msra.mxu0 %v822
        %v824 = vand.u32 %v505, 4294901760
        %v825 = vsub.f32 %v505, %v824
        %v826 = vand.u32 %v825, 4294901760
        %827 = vmatpush.msra.mxu0 %v826
        %v828 = vand.u32 %v504, 4294901760
        %v829 = vsub.f32 %v504, %v828
        %v830 = vand.u32 %v829, 4294901760
        %831 = vmatpush.msra.mxu0 %v830
        %v832 = vand.u32 %v503, 4294901760
        %v833 = vsub.f32 %v503, %v832
        %v834 = vand.u32 %v833, 4294901760
        %835 = vmatpush.msra.mxu0 %v834
        %v836 = vand.u32 %v502, 4294901760
        %v837 = vsub.f32 %v502, %v836
        %v838 = vand.u32 %v837, 4294901760
        %839 = vmatpush.msra.mxu0 %v838
        %v840 = vand.u32 %v501, 4294901760
        %v841 = vsub.f32 %v501, %v840
        %v842 = vand.u32 %v841, 4294901760
        %843 = vmatpush.msra.mxu0 %v842
        %v844 = vand.u32 %v500, 4294901760
        %v845 = vsub.f32 %v500, %v844
        %v846 = vand.u32 %v845, 4294901760
        %847 = vmatpush.msra.mxu0 %v846
        %v848 = vand.u32 %v499, 4294901760
        %v849 = vsub.f32 %v499, %v848
        %v850 = vand.u32 %v849, 4294901760
        %851 = vmatpush.msra.mxu0 %v850
        %v852 = vand.u32 %v498, 4294901760
        %v853 = vsub.f32 %v498, %v852
        %v854 = vand.u32 %v853, 4294901760
        %855 = vmatpush.msra.mxu0 %v854
        %v856 = vand.u32 %v497, 4294901760
        %v857 = vsub.f32 %v497, %v856
        %v858 = vand.u32 %v857, 4294901760
        %859 = vmatpush.msra.mxu0 %v858
        %v860 = vand.u32 %v492, 4294901760
        %861 = vmatmul.f32.gmra.mxu0 %v860
        %v862 = vpop.f32.mrf.mxu0
        %v863 = vadd.f32 %v794, %v862
        %864 = vdwg.mxu0
        %v865 = vand.u32 %v512, 4294901760
        %866 = vmatpush.msra.mxu0 %v865
        %v867 = vand.u32 %v511, 4294901760
        %868 = vmatpush.msra.mxu0 %v867
        %v869 = vand.u32 %v510, 4294901760
        %870 = vmatpush.msra.mxu0 %v869
        %v871 = vand.u32 %v509, 4294901760
        %872 = vmatpush.msra.mxu0 %v871
        %v873 = vand.u32 %v508, 4294901760
        %874 = vmatpush.msra.mxu0 %v873
        %v875 = vand.u32 %v507, 4294901760
        %876 = vmatpush.msra.mxu0 %v875
        %v877 = vand.u32 %v506, 4294901760
        %878 = vmatpush.msra.mxu0 %v877
        %v879 = vand.u32 %v505, 4294901760
        %880 = vmatpush.msra.mxu0 %v879
        %v881 = vand.u32 %v504, 4294901760
        %882 = vmatpush.msra.mxu0 %v881
        %v883 = vand.u32 %v503, 4294901760
        %884 = vmatpush.msra.mxu0 %v883
        %v885 = vand.u32 %v502, 4294901760
        %886 = vmatpush.msra.mxu0 %v885
        %v887 = vand.u32 %v501, 4294901760
        %888 = vmatpush.msra.mxu0 %v887
        %v889 = vand.u32 %v500, 4294901760
        %890 = vmatpush.msra.mxu0 %v889
        %v891 = vand.u32 %v499, 4294901760
        %892 = vmatpush.msra.mxu0 %v891
        %v893 = vand.u32 %v498, 4294901760
        %894 = vmatpush.msra.mxu0 %v893
        %v895 = vand.u32 %v497, 4294901760
        %896 = vmatpush.msra.mxu0 %v895
        %v897 = vand.u32 %v492, 4294901760
        %898 = vmatmul.f32.gmra.mxu0 %v897
        %v899 = vpop.f32.mrf.mxu0
        %v900 = vadd.f32 %v863, %v899
        %901 = vdwg.mxu0
        %v902 = vand.u32 %v528, 4294901760
        %903 = vmatpush.msra.mxu0 %v902
        %v904 = vand.u32 %v527, 4294901760
        %905 = vmatpush.msra.mxu0 %v904
        %v906 = vand.u32 %v526, 4294901760
        %907 = vmatpush.msra.mxu0 %v906
        %v908 = vand.u32 %v525, 4294901760
        %909 = vmatpush.msra.mxu0 %v908
        %v910 = vand.u32 %v524, 4294901760
        %911 = vmatpush.msra.mxu0 %v910
        %v912 = vand.u32 %v523, 4294901760
        %913 = vmatpush.msra.mxu0 %v912
        %v914 = vand.u32 %v522, 4294901760
        %915 = vmatpush.msra.mxu0 %v914
        %v916 = vand.u32 %v521, 4294901760
        %917 = vmatpush.msra.mxu0 %v916
        %v918 = vand.u32 %v520, 4294901760
        %919 = vmatpush.msra.mxu0 %v918
        %v920 = vand.u32 %v519, 4294901760
        %921 = vmatpush.msra.mxu0 %v920
        %v922 = vand.u32 %v518, 4294901760
        %923 = vmatpush.msra.mxu0 %v922
        %v924 = vand.u32 %v517, 4294901760
        %925 = vmatpush.msra.mxu0 %v924
        %v926 = vand.u32 %v516, 4294901760
        %927 = vmatpush.msra.mxu0 %v926
        %v928 = vand.u32 %v515, 4294901760
        %929 = vmatpush.msra.mxu0 %v928
        %v930 = vand.u32 %v514, 4294901760
        %931 = vmatpush.msra.mxu0 %v930
        %v932 = vand.u32 %v513, 4294901760
        %933 = vmatpush.msra.mxu0 %v932
        %v934 = vand.u32 %v493, 4294901760
        %v935 = vsub.f32 %v493, %v934
        %v936 = vand.u32 %v935, 4294901760
        %v937 = vsub.f32 %v935, %v936
        %v938 = vand.u32 %v937, 4294901760
        %939 = vmatmul.f32.gmra.mxu0 %v938
        %v940 = vpop.f32.mrf.mxu0
        %v941 = vadd.f32 %v900, %v940
        %942 = vdwg.mxu0
        %v943 = vand.u32 %v528, 4294901760
        %v944 = vsub.f32 %v528, %v943
        %v945 = vand.u32 %v944, 4294901760
        %v946 = vsub.f32 %v944, %v945
        %v947 = vand.u32 %v946, 4294901760
        %948 = vmatpush.msra.mxu0 %v947
        %v949 = vand.u32 %v527, 4294901760
        %v950 = vsub.f32 %v527, %v949
        %v951 = vand.u32 %v950, 4294901760
        %v952 = vsub.f32 %v950, %v951
        %v953 = vand.u32 %v952, 4294901760
        %954 = vmatpush.msra.mxu0 %v953
        %v955 = vand.u32 %v526, 4294901760
        %v956 = vsub.f32 %v526, %v955
        %v957 = vand.u32 %v956, 4294901760
        %v958 = vsub.f32 %v956, %v957
        %v959 = vand.u32 %v958, 4294901760
        %960 = vmatpush.msra.mxu0 %v959
        %v961 = vand.u32 %v525, 4294901760
        %v962 = vsub.f32 %v525, %v961
        %v963 = vand.u32 %v962, 4294901760
        %v964 = vsub.f32 %v962, %v963
        %v965 = vand.u32 %v964, 4294901760
        %966 = vmatpush.msra.mxu0 %v965
        %v967 = vand.u32 %v524, 4294901760
        %v968 = vsub.f32 %v524, %v967
        %v969 = vand.u32 %v968, 4294901760
        %v970 = vsub.f32 %v968, %v969
        %v971 = vand.u32 %v970, 4294901760
        %972 = vmatpush.msra.mxu0 %v971
        %v973 = vand.u32 %v523, 4294901760
        %v974 = vsub.f32 %v523, %v973
        %v975 = vand.u32 %v974, 4294901760
        %v976 = vsub.f32 %v974, %v975
        %v977 = vand.u32 %v976, 4294901760
        %978 = vmatpush.msra.mxu0 %v977
        %v979 = vand.u32 %v522, 4294901760
        %v980 = vsub.f32 %v522, %v979
        %v981 = vand.u32 %v980, 4294901760
        %v982 = vsub.f32 %v980, %v981
        %v983 = vand.u32 %v982, 4294901760
        %984 = vmatpush.msra.mxu0 %v983
        %v985 = vand.u32 %v521, 4294901760
        %v986 = vsub.f32 %v521, %v985
        %v987 = vand.u32 %v986, 4294901760
        %v988 = vsub.f32 %v986, %v987
        %v989 = vand.u32 %v988, 4294901760
        %990 = vmatpush.msra.mxu0 %v989
        %v991 = vand.u32 %v520, 4294901760
        %v992 = vsub.f32 %v520, %v991
        %v993 = vand.u32 %v992, 4294901760
        %v994 = vsub.f32 %v992, %v993
        %v995 = vand.u32 %v994, 4294901760
        %996 = vmatpush.msra.mxu0 %v995
        %v997 = vand.u32 %v519, 4294901760
        %v998 = vsub.f32 %v519, %v997
        %v999 = vand.u32 %v998, 4294901760
        %v1000 = vsub.f32 %v998, %v999
        %v1001 = vand.u32 %v1000, 4294901760
        %1002 = vmatpush.msra.mxu0 %v1001
        %v1003 = vand.u32 %v518, 4294901760
        %v1004 = vsub.f32 %v518, %v1003
        %v1005 = vand.u32 %v1004, 4294901760
        %v1006 = vsub.f32 %v1004, %v1005
        %v1007 = vand.u32 %v1006, 4294901760
        %1008 = vmatpush.msra.mxu0 %v1007
        %v1009 = vand.u32 %v517, 4294901760
        %v1010 = vsub.f32 %v517, %v1009
        %v1011 = vand.u32 %v1010, 4294901760
        %v1012 = vsub.f32 %v1010, %v1011
        %v1013 = vand.u32 %v1012, 4294901760
        %1014 = vmatpush.msra.mxu0 %v1013
        %v1015 = vand.u32 %v516, 4294901760
        %v1016 = vsub.f32 %v516, %v1015
        %v1017 = vand.u32 %v1016, 4294901760
        %v1018 = vsub.f32 %v1016, %v1017
        %v1019 = vand.u32 %v1018, 4294901760
        %1020 = vmatpush.msra.mxu0 %v1019
        %v1021 = vand.u32 %v515, 4294901760
        %v1022 = vsub.f32 %v515, %v1021
        %v1023 = vand.u32 %v1022, 4294901760
        %v1024 = vsub.f32 %v1022, %v1023
        %v1025 = vand.u32 %v1024, 4294901760
        %1026 = vmatpush.msra.mxu0 %v1025
        %v1027 = vand.u32 %v514, 4294901760
        %v1028 = vsub.f32 %v514, %v1027
        %v1029 = vand.u32 %v1028, 4294901760
        %v1030 = vsub.f32 %v1028, %v1029
        %v1031 = vand.u32 %v1030, 4294901760
        %1032 = vmatpush.msra.mxu0 %v1031
        %v1033 = vand.u32 %v513, 4294901760
        %v1034 = vsub.f32 %v513, %v1033
        %v1035 = vand.u32 %v1034, 4294901760
        %v1036 = vsub.f32 %v1034, %v1035
        %v1037 = vand.u32 %v1036, 4294901760
        %1038 = vmatpush.msra.mxu0 %v1037
        %v1039 = vand.u32 %v493, 4294901760
        %1040 = vmatmul.f32.gmra.mxu0 %v1039
        %v1041 = vpop.f32.mrf.mxu0
        %v1042 = vadd.f32 %v941, %v1041
        %1043 = vdwg.mxu0
        %v1044 = vand.u32 %v528, 4294901760
        %v1045 = vsub.f32 %v528, %v1044
        %1046 = vmatpush.msra.mxu0 %v1045
        %v1047 = vand.u32 %v527, 4294901760
        %v1048 = vsub.f32 %v527, %v1047
        %1049 = vmatpush.msra.mxu0 %v1048
        %v1050 = vand.u32 %v526, 4294901760
        %v1051 = vsub.f32 %v526, %v1050
        %1052 = vmatpush.msra.mxu0 %v1051
        %v1053 = vand.u32 %v525, 4294901760
        %v1054 = vsub.f32 %v525, %v1053
        %1055 = vmatpush.msra.mxu0 %v1054
        %v1056 = vand.u32 %v524, 4294901760
        %v1057 = vsub.f32 %v524, %v1056
        %1058 = vmatpush.msra.mxu0 %v1057
        %v1059 = vand.u32 %v523, 4294901760
        %v1060 = vsub.f32 %v523, %v1059
        %1061 = vmatpush.msra.mxu0 %v1060
        %v1062 = vand.u32 %v522, 4294901760
        %v1063 = vsub.f32 %v522, %v1062
        %1064 = vmatpush.msra.mxu0 %v1063
        %v1065 = vand.u32 %v521, 4294901760
        %v1066 = vsub.f32 %v521, %v1065
        %1067 = vmatpush.msra.mxu0 %v1066
        %v1068 = vand.u32 %v520, 4294901760
        %v1069 = vsub.f32 %v520, %v1068
        %1070 = vmatpush.msra.mxu0 %v1069
        %v1071 = vand.u32 %v519, 4294901760
        %v1072 = vsub.f32 %v519, %v1071
        %1073 = vmatpush.msra.mxu0 %v1072
        %v1074 = vand.u32 %v518, 4294901760
        %v1075 = vsub.f32 %v518, %v1074
        %1076 = vmatpush.msra.mxu0 %v1075
        %v1077 = vand.u32 %v517, 4294901760
        %v1078 = vsub.f32 %v517, %v1077
        %1079 = vmatpush.msra.mxu0 %v1078
        %v1080 = vand.u32 %v516, 4294901760
        %v1081 = vsub.f32 %v516, %v1080
        %1082 = vmatpush.msra.mxu0 %v1081
        %v1083 = vand.u32 %v515, 4294901760
        %v1084 = vsub.f32 %v515, %v1083
        %1085 = vmatpush.msra.mxu0 %v1084
        %v1086 = vand.u32 %v514, 4294901760
        %v1087 = vsub.f32 %v514, %v1086
        %1088 = vmatpush.msra.mxu0 %v1087
        %v1089 = vand.u32 %v513, 4294901760
        %v1090 = vsub.f32 %v513, %v1089
        %1091 = vmatpush.msra.mxu0 %v1090
        %v1092 = vand.u32 %v493, 4294901760
        %v1093 = vsub.f32 %v493, %v1092
        %1094 = vmatmul.f32.gmra.mxu0 %v1093
        %v1095 = vpop.f32.mrf.mxu0
        %v1096 = vadd.f32 %v1042, %v1095
        %1097 = vdwg.mxu0
        %v1098 = vand.u32 %v528, 4294901760
        %1099 = vmatpush.msra.mxu0 %v1098
        %v1100 = vand.u32 %v527, 4294901760
        %1101 = vmatpush.msra.mxu0 %v1100
        %v1102 = vand.u32 %v526, 4294901760
        %1103 = vmatpush.msra.mxu0 %v1102
        %v1104 = vand.u32 %v525, 4294901760
        %1105 = vmatpush.msra.mxu0 %v1104
        %v1106 = vand.u32 %v524, 4294901760
        %1107 = vmatpush.msra.mxu0 %v1106
        %v1108 = vand.u32 %v523, 4294901760
        %1109 = vmatpush.msra.mxu0 %v1108
        %v1110 = vand.u32 %v522, 4294901760
        %1111 = vmatpush.msra.mxu0 %v1110
        %v1112 = vand.u32 %v521, 4294901760
        %1113 = vmatpush.msra.mxu0 %v1112
        %v1114 = vand.u32 %v520, 4294901760
        %1115 = vmatpush.msra.mxu0 %v1114
        %v1116 = vand.u32 %v519, 4294901760
        %1117 = vmatpush.msra.mxu0 %v1116
        %v1118 = vand.u32 %v518, 4294901760
        %1119 = vmatpush.msra.mxu0 %v1118
        %v1120 = vand.u32 %v517, 4294901760
        %1121 = vmatpush.msra.mxu0 %v1120
        %v1122 = vand.u32 %v516, 4294901760
        %1123 = vmatpush.msra.mxu0 %v1122
        %v1124 = vand.u32 %v515, 4294901760
        %1125 = vmatpush.msra.mxu0 %v1124
        %v1126 = vand.u32 %v514, 4294901760
        %1127 = vmatpush.msra.mxu0 %v1126
        %v1128 = vand.u32 %v513, 4294901760
        %1129 = vmatpush.msra.mxu0 %v1128
        %v1130 = vand.u32 %v493, 4294901760
        %v1131 = vsub.f32 %v493, %v1130
        %v1132 = vand.u32 %v1131, 4294901760
        %1133 = vmatmul.f32.gmra.mxu0 %v1132
        %v1134 = vpop.f32.mrf.mxu0
        %v1135 = vadd.f32 %v1096, %v1134
        %1136 = vdwg.mxu0
        %v1137 = vand.u32 %v528, 4294901760
        %v1138 = vsub.f32 %v528, %v1137
        %v1139 = vand.u32 %v1138, 4294901760
        %1140 = vmatpush.msra.mxu0 %v1139
        %v1141 = vand.u32 %v527, 4294901760
        %v1142 = vsub.f32 %v527, %v1141
        %v1143 = vand.u32 %v1142, 4294901760
        %1144 = vmatpush.msra.mxu0 %v1143
        %v1145 = vand.u32 %v526, 4294901760
        %v1146 = vsub.f32 %v526, %v1145
        %v1147 = vand.u32 %v1146, 4294901760
        %1148 = vmatpush.msra.mxu0 %v1147
        %v1149 = vand.u32 %v525, 4294901760
        %v1150 = vsub.f32 %v525, %v1149
        %v1151 = vand.u32 %v1150, 4294901760
        %1152 = vmatpush.msra.mxu0 %v1151
        %v1153 = vand.u32 %v524, 4294901760
        %v1154 = vsub.f32 %v524, %v1153
        %v1155 = vand.u32 %v1154, 4294901760
        %1156 = vmatpush.msra.mxu0 %v1155
        %v1157 = vand.u32 %v523, 4294901760
        %v1158 = vsub.f32 %v523, %v1157
        %v1159 = vand.u32 %v1158, 4294901760
        %1160 = vmatpush.msra.mxu0 %v1159
        %v1161 = vand.u32 %v522, 4294901760
        %v1162 = vsub.f32 %v522, %v1161
        %v1163 = vand.u32 %v1162, 4294901760
        %1164 = vmatpush.msra.mxu0 %v1163
        %v1165 = vand.u32 %v521, 4294901760
        %v1166 = vsub.f32 %v521, %v1165
        %v1167 = vand.u32 %v1166, 4294901760
        %1168 = vmatpush.msra.mxu0 %v1167
        %v1169 = vand.u32 %v520, 4294901760
        %v1170 = vsub.f32 %v520, %v1169
        %v1171 = vand.u32 %v1170, 4294901760
        %1172 = vmatpush.msra.mxu0 %v1171
        %v1173 = vand.u32 %v519, 4294901760
        %v1174 = vsub.f32 %v519, %v1173
        %v1175 = vand.u32 %v1174, 4294901760
        %1176 = vmatpush.msra.mxu0 %v1175
        %v1177 = vand.u32 %v518, 4294901760
        %v1178 = vsub.f32 %v518, %v1177
        %v1179 = vand.u32 %v1178, 4294901760
        %1180 = vmatpush.msra.mxu0 %v1179
        %v1181 = vand.u32 %v517, 4294901760
        %v1182 = vsub.f32 %v517, %v1181
        %v1183 = vand.u32 %v1182, 4294901760
        %1184 = vmatpush.msra.mxu0 %v1183
        %v1185 = vand.u32 %v516, 4294901760
        %v1186 = vsub.f32 %v516, %v1185
        %v1187 = vand.u32 %v1186, 4294901760
        %1188 = vmatpush.msra.mxu0 %v1187
        %v1189 = vand.u32 %v515, 4294901760
        %v1190 = vsub.f32 %v515, %v1189
        %v1191 = vand.u32 %v1190, 4294901760
        %1192 = vmatpush.msra.mxu0 %v1191
        %v1193 = vand.u32 %v514, 4294901760
        %v1194 = vsub.f32 %v514, %v1193
        %v1195 = vand.u32 %v1194, 4294901760
        %1196 = vmatpush.msra.mxu0 %v1195
        %v1197 = vand.u32 %v513, 4294901760
        %v1198 = vsub.f32 %v513, %v1197
        %v1199 = vand.u32 %v1198, 4294901760
        %1200 = vmatpush.msra.mxu0 %v1199
        %v1201 = vand.u32 %v493, 4294901760
        %1202 = vmatmul.f32.gmra.mxu0 %v1201
        %v1203 = vpop.f32.mrf.mxu0
        %v1204 = vadd.f32 %v1135, %v1203
        %1205 = vdwg.mxu0
        %v1206 = vand.u32 %v528, 4294901760
        %1207 = vmatpush.msra.mxu0 %v1206
        %v1208 = vand.u32 %v527, 4294901760
        %1209 = vmatpush.msra.mxu0 %v1208
        %v1210 = vand.u32 %v526, 4294901760
        %1211 = vmatpush.msra.mxu0 %v1210
        %v1212 = vand.u32 %v525, 4294901760
        %1213 = vmatpush.msra.mxu0 %v1212
        %v1214 = vand.u32 %v524, 4294901760
        %1215 = vmatpush.msra.mxu0 %v1214
        %v1216 = vand.u32 %v523, 4294901760
        %1217 = vmatpush.msra.mxu0 %v1216
        %v1218 = vand.u32 %v522, 4294901760
        %1219 = vmatpush.msra.mxu0 %v1218
        %v1220 = vand.u32 %v521, 4294901760
        %1221 = vmatpush.msra.mxu0 %v1220
        %v1222 = vand.u32 %v520, 4294901760
        %1223 = vmatpush.msra.mxu0 %v1222
        %v1224 = vand.u32 %v519, 4294901760
        %1225 = vmatpush.msra.mxu0 %v1224
        %v1226 = vand.u32 %v518, 4294901760
        %1227 = vmatpush.msra.mxu0 %v1226
        %v1228 = vand.u32 %v517, 4294901760
        %1229 = vmatpush.msra.mxu0 %v1228
        %v1230 = vand.u32 %v516, 4294901760
        %1231 = vmatpush.msra.mxu0 %v1230
        %v1232 = vand.u32 %v515, 4294901760
        %1233 = vmatpush.msra.mxu0 %v1232
        %v1234 = vand.u32 %v514, 4294901760
        %1235 = vmatpush.msra.mxu0 %v1234
        %v1236 = vand.u32 %v513, 4294901760
        %1237 = vmatpush.msra.mxu0 %v1236
        %v1238 = vand.u32 %v493, 4294901760
        %1239 = vmatmul.f32.gmra.mxu0 %v1238
        %v1240 = vpop.f32.mrf.mxu0
        %v1241 = vadd.f32 %v1204, %v1240
        %1242 = vdwg.mxu0
        %v1243 = vand.u32 %v544, 4294901760
        %1244 = vmatpush.msra.mxu0 %v1243
        %v1245 = vand.u32 %v543, 4294901760
        %1246 = vmatpush.msra.mxu0 %v1245
        %v1247 = vand.u32 %v542, 4294901760
        %1248 = vmatpush.msra.mxu0 %v1247
        %v1249 = vand.u32 %v541, 4294901760
        %1250 = vmatpush.msra.mxu0 %v1249
        %v1251 = vand.u32 %v540, 4294901760
        %1252 = vmatpush.msra.mxu0 %v1251
        %v1253 = vand.u32 %v539, 4294901760
        %1254 = vmatpush.msra.mxu0 %v1253
        %v1255 = vand.u32 %v538, 4294901760
        %1256 = vmatpush.msra.mxu0 %v1255
        %v1257 = vand.u32 %v537, 4294901760
        %1258 = vmatpush.msra.mxu0 %v1257
        %v1259 = vand.u32 %v536, 4294901760
        %1260 = vmatpush.msra.mxu0 %v1259
        %v1261 = vand.u32 %v535, 4294901760
        %1262 = vmatpush.msra.mxu0 %v1261
        %v1263 = vand.u32 %v534, 4294901760
        %1264 = vmatpush.msra.mxu0 %v1263
        %v1265 = vand.u32 %v533, 4294901760
        %1266 = vmatpush.msra.mxu0 %v1265
        %v1267 = vand.u32 %v532, 4294901760
        %1268 = vmatpush.msra.mxu0 %v1267
        %v1269 = vand.u32 %v531, 4294901760
        %1270 = vmatpush.msra.mxu0 %v1269
        %v1271 = vand.u32 %v530, 4294901760
        %1272 = vmatpush.msra.mxu0 %v1271
        %v1273 = vand.u32 %v529, 4294901760
        %1274 = vmatpush.msra.mxu0 %v1273
        %v1275 = vand.u32 %v494, 4294901760
        %v1276 = vsub.f32 %v494, %v1275
        %v1277 = vand.u32 %v1276, 4294901760
        %v1278 = vsub.f32 %v1276, %v1277
        %v1279 = vand.u32 %v1278, 4294901760
        %1280 = vmatmul.f32.gmra.mxu0 %v1279
        %v1281 = vpop.f32.mrf.mxu0
        %v1282 = vadd.f32 %v1241, %v1281
        %1283 = vdwg.mxu0
        %v1284 = vand.u32 %v544, 4294901760
        %v1285 = vsub.f32 %v544, %v1284
        %v1286 = vand.u32 %v1285, 4294901760
        %v1287 = vsub.f32 %v1285, %v1286
        %v1288 = vand.u32 %v1287, 4294901760
        %1289 = vmatpush.msra.mxu0 %v1288
        %v1290 = vand.u32 %v543, 4294901760
        %v1291 = vsub.f32 %v543, %v1290
        %v1292 = vand.u32 %v1291, 4294901760
        %v1293 = vsub.f32 %v1291, %v1292
        %v1294 = vand.u32 %v1293, 4294901760
        %1295 = vmatpush.msra.mxu0 %v1294
        %v1296 = vand.u32 %v542, 4294901760
        %v1297 = vsub.f32 %v542, %v1296
        %v1298 = vand.u32 %v1297, 4294901760
        %v1299 = vsub.f32 %v1297, %v1298
        %v1300 = vand.u32 %v1299, 4294901760
        %1301 = vmatpush.msra.mxu0 %v1300
        %v1302 = vand.u32 %v541, 4294901760
        %v1303 = vsub.f32 %v541, %v1302
        %v1304 = vand.u32 %v1303, 4294901760
        %v1305 = vsub.f32 %v1303, %v1304
        %v1306 = vand.u32 %v1305, 4294901760
        %1307 = vmatpush.msra.mxu0 %v1306
        %v1308 = vand.u32 %v540, 4294901760
        %v1309 = vsub.f32 %v540, %v1308
        %v1310 = vand.u32 %v1309, 4294901760
        %v1311 = vsub.f32 %v1309, %v1310
        %v1312 = vand.u32 %v1311, 4294901760
        %1313 = vmatpush.msra.mxu0 %v1312
        %v1314 = vand.u32 %v539, 4294901760
        %v1315 = vsub.f32 %v539, %v1314
        %v1316 = vand.u32 %v1315, 4294901760
        %v1317 = vsub.f32 %v1315, %v1316
        %v1318 = vand.u32 %v1317, 4294901760
        %1319 = vmatpush.msra.mxu0 %v1318
        %v1320 = vand.u32 %v538, 4294901760
        %v1321 = vsub.f32 %v538, %v1320
        %v1322 = vand.u32 %v1321, 4294901760
        %v1323 = vsub.f32 %v1321, %v1322
        %v1324 = vand.u32 %v1323, 4294901760
        %1325 = vmatpush.msra.mxu0 %v1324
        %v1326 = vand.u32 %v537, 4294901760
        %v1327 = vsub.f32 %v537, %v1326
        %v1328 = vand.u32 %v1327, 4294901760
        %v1329 = vsub.f32 %v1327, %v1328
        %v1330 = vand.u32 %v1329, 4294901760
        %1331 = vmatpush.msra.mxu0 %v1330
        %v1332 = vand.u32 %v536, 4294901760
        %v1333 = vsub.f32 %v536, %v1332
        %v1334 = vand.u32 %v1333, 4294901760
        %v1335 = vsub.f32 %v1333, %v1334
        %v1336 = vand.u32 %v1335, 4294901760
        %1337 = vmatpush.msra.mxu0 %v1336
        %v1338 = vand.u32 %v535, 4294901760
        %v1339 = vsub.f32 %v535, %v1338
        %v1340 = vand.u32 %v1339, 4294901760
        %v1341 = vsub.f32 %v1339, %v1340
        %v1342 = vand.u32 %v1341, 4294901760
        %1343 = vmatpush.msra.mxu0 %v1342
        %v1344 = vand.u32 %v534, 4294901760
        %v1345 = vsub.f32 %v534, %v1344
        %v1346 = vand.u32 %v1345, 4294901760
        %v1347 = vsub.f32 %v1345, %v1346
        %v1348 = vand.u32 %v1347, 4294901760
        %1349 = vmatpush.msra.mxu0 %v1348
        %v1350 = vand.u32 %v533, 4294901760
        %v1351 = vsub.f32 %v533, %v1350
        %v1352 = vand.u32 %v1351, 4294901760
        %v1353 = vsub.f32 %v1351, %v1352
        %v1354 = vand.u32 %v1353, 4294901760
        %1355 = vmatpush.msra.mxu0 %v1354
        %v1356 = vand.u32 %v532, 4294901760
        %v1357 = vsub.f32 %v532, %v1356
        %v1358 = vand.u32 %v1357, 4294901760
        %v1359 = vsub.f32 %v1357, %v1358
        %v1360 = vand.u32 %v1359, 4294901760
        %1361 = vmatpush.msra.mxu0 %v1360
        %v1362 = vand.u32 %v531, 4294901760
        %v1363 = vsub.f32 %v531, %v1362
        %v1364 = vand.u32 %v1363, 4294901760
        %v1365 = vsub.f32 %v1363, %v1364
        %v1366 = vand.u32 %v1365, 4294901760
        %1367 = vmatpush.msra.mxu0 %v1366
        %v1368 = vand.u32 %v530, 4294901760
        %v1369 = vsub.f32 %v530, %v1368
        %v1370 = vand.u32 %v1369, 4294901760
        %v1371 = vsub.f32 %v1369, %v1370
        %v1372 = vand.u32 %v1371, 4294901760
        %1373 = vmatpush.msra.mxu0 %v1372
        %v1374 = vand.u32 %v529, 4294901760
        %v1375 = vsub.f32 %v529, %v1374
        %v1376 = vand.u32 %v1375, 4294901760
        %v1377 = vsub.f32 %v1375, %v1376
        %v1378 = vand.u32 %v1377, 4294901760
        %1379 = vmatpush.msra.mxu0 %v1378
        %v1380 = vand.u32 %v494, 4294901760
        %1381 = vmatmul.f32.gmra.mxu0 %v1380
        %v1382 = vpop.f32.mrf.mxu0
        %v1383 = vadd.f32 %v1282, %v1382
        %1384 = vdwg.mxu0
        %v1385 = vand.u32 %v544, 4294901760
        %v1386 = vsub.f32 %v544, %v1385
        %1387 = vmatpush.msra.mxu0 %v1386
        %v1388 = vand.u32 %v543, 4294901760
        %v1389 = vsub.f32 %v543, %v1388
        %1390 = vmatpush.msra.mxu0 %v1389
        %v1391 = vand.u32 %v542, 4294901760
        %v1392 = vsub.f32 %v542, %v1391
        %1393 = vmatpush.msra.mxu0 %v1392
        %v1394 = vand.u32 %v541, 4294901760
        %v1395 = vsub.f32 %v541, %v1394
        %1396 = vmatpush.msra.mxu0 %v1395
        %v1397 = vand.u32 %v540, 4294901760
        %v1398 = vsub.f32 %v540, %v1397
        %1399 = vmatpush.msra.mxu0 %v1398
        %v1400 = vand.u32 %v539, 4294901760
        %v1401 = vsub.f32 %v539, %v1400
        %1402 = vmatpush.msra.mxu0 %v1401
        %v1403 = vand.u32 %v538, 4294901760
        %v1404 = vsub.f32 %v538, %v1403
        %1405 = vmatpush.msra.mxu0 %v1404
        %v1406 = vand.u32 %v537, 4294901760
        %v1407 = vsub.f32 %v537, %v1406
        %1408 = vmatpush.msra.mxu0 %v1407
        %v1409 = vand.u32 %v536, 4294901760
        %v1410 = vsub.f32 %v536, %v1409
        %1411 = vmatpush.msra.mxu0 %v1410
        %v1412 = vand.u32 %v535, 4294901760
        %v1413 = vsub.f32 %v535, %v1412
        %1414 = vmatpush.msra.mxu0 %v1413
        %v1415 = vand.u32 %v534, 4294901760
        %v1416 = vsub.f32 %v534, %v1415
        %1417 = vmatpush.msra.mxu0 %v1416
        %v1418 = vand.u32 %v533, 4294901760
        %v1419 = vsub.f32 %v533, %v1418
        %1420 = vmatpush.msra.mxu0 %v1419
        %v1421 = vand.u32 %v532, 4294901760
        %v1422 = vsub.f32 %v532, %v1421
        %1423 = vmatpush.msra.mxu0 %v1422
        %v1424 = vand.u32 %v531, 4294901760
        %v1425 = vsub.f32 %v531, %v1424
        %1426 = vmatpush.msra.mxu0 %v1425
        %v1427 = vand.u32 %v530, 4294901760
        %v1428 = vsub.f32 %v530, %v1427
        %1429 = vmatpush.msra.mxu0 %v1428
        %v1430 = vand.u32 %v529, 4294901760
        %v1431 = vsub.f32 %v529, %v1430
        %1432 = vmatpush.msra.mxu0 %v1431
        %v1433 = vand.u32 %v494, 4294901760
        %v1434 = vsub.f32 %v494, %v1433
        %1435 = vmatmul.f32.gmra.mxu0 %v1434
        %v1436 = vpop.f32.mrf.mxu0
        %v1437 = vadd.f32 %v1383, %v1436
        %1438 = vdwg.mxu0
        %v1439 = vand.u32 %v544, 4294901760
        %1440 = vmatpush.msra.mxu0 %v1439
        %v1441 = vand.u32 %v543, 4294901760
        %1442 = vmatpush.msra.mxu0 %v1441
        %v1443 = vand.u32 %v542, 4294901760
        %1444 = vmatpush.msra.mxu0 %v1443
        %v1445 = vand.u32 %v541, 4294901760
        %1446 = vmatpush.msra.mxu0 %v1445
        %v1447 = vand.u32 %v540, 4294901760
        %1448 = vmatpush.msra.mxu0 %v1447
        %v1449 = vand.u32 %v539, 4294901760
        %1450 = vmatpush.msra.mxu0 %v1449
        %v1451 = vand.u32 %v538, 4294901760
        %1452 = vmatpush.msra.mxu0 %v1451
        %v1453 = vand.u32 %v537, 4294901760
        %1454 = vmatpush.msra.mxu0 %v1453
        %v1455 = vand.u32 %v536, 4294901760
        %1456 = vmatpush.msra.mxu0 %v1455
        %v1457 = vand.u32 %v535, 4294901760
        %1458 = vmatpush.msra.mxu0 %v1457
        %v1459 = vand.u32 %v534, 4294901760
        %1460 = vmatpush.msra.mxu0 %v1459
        %v1461 = vand.u32 %v533, 4294901760
        %1462 = vmatpush.msra.mxu0 %v1461
        %v1463 = vand.u32 %v532, 4294901760
        %1464 = vmatpush.msra.mxu0 %v1463
        %v1465 = vand.u32 %v531, 4294901760
        %1466 = vmatpush.msra.mxu0 %v1465
        %v1467 = vand.u32 %v530, 4294901760
        %1468 = vmatpush.msra.mxu0 %v1467
        %v1469 = vand.u32 %v529, 4294901760
        %1470 = vmatpush.msra.mxu0 %v1469
        %v1471 = vand.u32 %v494, 4294901760
        %v1472 = vsub.f32 %v494, %v1471
        %v1473 = vand.u32 %v1472, 4294901760
        %1474 = vmatmul.f32.gmra.mxu0 %v1473
        %v1475 = vpop.f32.mrf.mxu0
        %v1476 = vadd.f32 %v1437, %v1475
        %1477 = vdwg.mxu0
        %v1478 = vand.u32 %v544, 4294901760
        %v1479 = vsub.f32 %v544, %v1478
        %v1480 = vand.u32 %v1479, 4294901760
        %1481 = vmatpush.msra.mxu0 %v1480
        %v1482 = vand.u32 %v543, 4294901760
        %v1483 = vsub.f32 %v543, %v1482
        %v1484 = vand.u32 %v1483, 4294901760
        %1485 = vmatpush.msra.mxu0 %v1484
        %v1486 = vand.u32 %v542, 4294901760
        %v1487 = vsub.f32 %v542, %v1486
        %v1488 = vand.u32 %v1487, 4294901760
        %1489 = vmatpush.msra.mxu0 %v1488
        %v1490 = vand.u32 %v541, 4294901760
        %v1491 = vsub.f32 %v541, %v1490
        %v1492 = vand.u32 %v1491, 4294901760
        %1493 = vmatpush.msra.mxu0 %v1492
        %v1494 = vand.u32 %v540, 4294901760
        %v1495 = vsub.f32 %v540, %v1494
        %v1496 = vand.u32 %v1495, 4294901760
        %1497 = vmatpush.msra.mxu0 %v1496
        %v1498 = vand.u32 %v539, 4294901760
        %v1499 = vsub.f32 %v539, %v1498
        %v1500 = vand.u32 %v1499, 4294901760
        %1501 = vmatpush.msra.mxu0 %v1500
        %v1502 = vand.u32 %v538, 4294901760
        %v1503 = vsub.f32 %v538, %v1502
        %v1504 = vand.u32 %v1503, 4294901760
        %1505 = vmatpush.msra.mxu0 %v1504
        %v1506 = vand.u32 %v537, 4294901760
        %v1507 = vsub.f32 %v537, %v1506
        %v1508 = vand.u32 %v1507, 4294901760
        %1509 = vmatpush.msra.mxu0 %v1508
        %v1510 = vand.u32 %v536, 4294901760
        %v1511 = vsub.f32 %v536, %v1510
        %v1512 = vand.u32 %v1511, 4294901760
        %1513 = vmatpush.msra.mxu0 %v1512
        %v1514 = vand.u32 %v535, 4294901760
        %v1515 = vsub.f32 %v535, %v1514
        %v1516 = vand.u32 %v1515, 4294901760
        %1517 = vmatpush.msra.mxu0 %v1516
        %v1518 = vand.u32 %v534, 4294901760
        %v1519 = vsub.f32 %v534, %v1518
        %v1520 = vand.u32 %v1519, 4294901760
        %1521 = vmatpush.msra.mxu0 %v1520
        %v1522 = vand.u32 %v533, 4294901760
        %v1523 = vsub.f32 %v533, %v1522
        %v1524 = vand.u32 %v1523, 4294901760
        %1525 = vmatpush.msra.mxu0 %v1524
        %v1526 = vand.u32 %v532, 4294901760
        %v1527 = vsub.f32 %v532, %v1526
        %v1528 = vand.u32 %v1527, 4294901760
        %1529 = vmatpush.msra.mxu0 %v1528
        %v1530 = vand.u32 %v531, 4294901760
        %v1531 = vsub.f32 %v531, %v1530
        %v1532 = vand.u32 %v1531, 4294901760
        %1533 = vmatpush.msra.mxu0 %v1532
        %v1534 = vand.u32 %v530, 4294901760
        %v1535 = vsub.f32 %v530, %v1534
        %v1536 = vand.u32 %v1535, 4294901760
        %1537 = vmatpush.msra.mxu0 %v1536
        %v1538 = vand.u32 %v529, 4294901760
        %v1539 = vsub.f32 %v529, %v1538
        %v1540 = vand.u32 %v1539, 4294901760
        %1541 = vmatpush.msra.mxu0 %v1540
        %v1542 = vand.u32 %v494, 4294901760
        %1543 = vmatmul.f32.gmra.mxu0 %v1542
        %v1544 = vpop.f32.mrf.mxu0
        %v1545 = vadd.f32 %v1476, %v1544
        %1546 = vdwg.mxu0
        %v1547 = vand.u32 %v544, 4294901760
        %1548 = vmatpush.msra.mxu0 %v1547
        %v1549 = vand.u32 %v543, 4294901760
        %1550 = vmatpush.msra.mxu0 %v1549
        %v1551 = vand.u32 %v542, 4294901760
        %1552 = vmatpush.msra.mxu0 %v1551
        %v1553 = vand.u32 %v541, 4294901760
        %1554 = vmatpush.msra.mxu0 %v1553
        %v1555 = vand.u32 %v540, 4294901760
        %1556 = vmatpush.msra.mxu0 %v1555
        %v1557 = vand.u32 %v539, 4294901760
        %1558 = vmatpush.msra.mxu0 %v1557
        %v1559 = vand.u32 %v538, 4294901760
        %1560 = vmatpush.msra.mxu0 %v1559
        %v1561 = vand.u32 %v537, 4294901760
        %1562 = vmatpush.msra.mxu0 %v1561
        %v1563 = vand.u32 %v536, 4294901760
        %1564 = vmatpush.msra.mxu0 %v1563
        %v1565 = vand.u32 %v535, 4294901760
        %1566 = vmatpush.msra.mxu0 %v1565
        %v1567 = vand.u32 %v534, 4294901760
        %1568 = vmatpush.msra.mxu0 %v1567
        %v1569 = vand.u32 %v533, 4294901760
        %1570 = vmatpush.msra.mxu0 %v1569
        %v1571 = vand.u32 %v532, 4294901760
        %1572 = vmatpush.msra.mxu0 %v1571
        %v1573 = vand.u32 %v531, 4294901760
        %1574 = vmatpush.msra.mxu0 %v1573
        %v1575 = vand.u32 %v530, 4294901760
        %1576 = vmatpush.msra.mxu0 %v1575
        %v1577 = vand.u32 %v529, 4294901760
        %1578 = vmatpush.msra.mxu0 %v1577
        %v1579 = vand.u32 %v494, 4294901760
        %1580 = vmatmul.f32.gmra.mxu0 %v1579
        %v1581 = vpop.f32.mrf.mxu0
        %v1582 = vadd.f32 %v1545, %v1581
        %1583 = vdwg.mxu0
        %v1584 = vand.u32 %v560, 4294901760
        %1585 = vmatpush.msra.mxu0 %v1584
        %v1586 = vand.u32 %v559, 4294901760
        %1587 = vmatpush.msra.mxu0 %v1586
        %v1588 = vand.u32 %v558, 4294901760
        %1589 = vmatpush.msra.mxu0 %v1588
        %v1590 = vand.u32 %v557, 4294901760
        %1591 = vmatpush.msra.mxu0 %v1590
        %v1592 = vand.u32 %v556, 4294901760
        %1593 = vmatpush.msra.mxu0 %v1592
        %v1594 = vand.u32 %v555, 4294901760
        %1595 = vmatpush.msra.mxu0 %v1594
        %v1596 = vand.u32 %v554, 4294901760
        %1597 = vmatpush.msra.mxu0 %v1596
        %v1598 = vand.u32 %v553, 4294901760
        %1599 = vmatpush.msra.mxu0 %v1598
        %v1600 = vand.u32 %v552, 4294901760
        %1601 = vmatpush.msra.mxu0 %v1600
        %v1602 = vand.u32 %v551, 4294901760
        %1603 = vmatpush.msra.mxu0 %v1602
        %v1604 = vand.u32 %v550, 4294901760
        %1605 = vmatpush.msra.mxu0 %v1604
        %v1606 = vand.u32 %v549, 4294901760
        %1607 = vmatpush.msra.mxu0 %v1606
        %v1608 = vand.u32 %v548, 4294901760
        %1609 = vmatpush.msra.mxu0 %v1608
        %v1610 = vand.u32 %v547, 4294901760
        %1611 = vmatpush.msra.mxu0 %v1610
        %v1612 = vand.u32 %v546, 4294901760
        %1613 = vmatpush.msra.mxu0 %v1612
        %v1614 = vand.u32 %v545, 4294901760
        %1615 = vmatpush.msra.mxu0 %v1614
        %v1616 = vand.u32 %v495, 4294901760
        %v1617 = vsub.f32 %v495, %v1616
        %v1618 = vand.u32 %v1617, 4294901760
        %v1619 = vsub.f32 %v1617, %v1618
        %v1620 = vand.u32 %v1619, 4294901760
        %1621 = vmatmul.f32.gmra.mxu0 %v1620
        %v1622 = vpop.f32.mrf.mxu0
        %v1623 = vadd.f32 %v1582, %v1622
        %1624 = vdwg.mxu0
        %v1625 = vand.u32 %v560, 4294901760
        %v1626 = vsub.f32 %v560, %v1625
        %v1627 = vand.u32 %v1626, 4294901760
        %v1628 = vsub.f32 %v1626, %v1627
        %v1629 = vand.u32 %v1628, 4294901760
        %1630 = vmatpush.msra.mxu0 %v1629
        %v1631 = vand.u32 %v559, 4294901760
        %v1632 = vsub.f32 %v559, %v1631
        %v1633 = vand.u32 %v1632, 4294901760
        %v1634 = vsub.f32 %v1632, %v1633
        %v1635 = vand.u32 %v1634, 4294901760
        %1636 = vmatpush.msra.mxu0 %v1635
        %v1637 = vand.u32 %v558, 4294901760
        %v1638 = vsub.f32 %v558, %v1637
        %v1639 = vand.u32 %v1638, 4294901760
        %v1640 = vsub.f32 %v1638, %v1639
        %v1641 = vand.u32 %v1640, 4294901760
        %1642 = vmatpush.msra.mxu0 %v1641
        %v1643 = vand.u32 %v557, 4294901760
        %v1644 = vsub.f32 %v557, %v1643
        %v1645 = vand.u32 %v1644, 4294901760
        %v1646 = vsub.f32 %v1644, %v1645
        %v1647 = vand.u32 %v1646, 4294901760
        %1648 = vmatpush.msra.mxu0 %v1647
        %v1649 = vand.u32 %v556, 4294901760
        %v1650 = vsub.f32 %v556, %v1649
        %v1651 = vand.u32 %v1650, 4294901760
        %v1652 = vsub.f32 %v1650, %v1651
        %v1653 = vand.u32 %v1652, 4294901760
        %1654 = vmatpush.msra.mxu0 %v1653
        %v1655 = vand.u32 %v555, 4294901760
        %v1656 = vsub.f32 %v555, %v1655
        %v1657 = vand.u32 %v1656, 4294901760
        %v1658 = vsub.f32 %v1656, %v1657
        %v1659 = vand.u32 %v1658, 4294901760
        %1660 = vmatpush.msra.mxu0 %v1659
        %v1661 = vand.u32 %v554, 4294901760
        %v1662 = vsub.f32 %v554, %v1661
        %v1663 = vand.u32 %v1662, 4294901760
        %v1664 = vsub.f32 %v1662, %v1663
        %v1665 = vand.u32 %v1664, 4294901760
        %1666 = vmatpush.msra.mxu0 %v1665
        %v1667 = vand.u32 %v553, 4294901760
        %v1668 = vsub.f32 %v553, %v1667
        %v1669 = vand.u32 %v1668, 4294901760
        %v1670 = vsub.f32 %v1668, %v1669
        %v1671 = vand.u32 %v1670, 4294901760
        %1672 = vmatpush.msra.mxu0 %v1671
        %v1673 = vand.u32 %v552, 4294901760
        %v1674 = vsub.f32 %v552, %v1673
        %v1675 = vand.u32 %v1674, 4294901760
        %v1676 = vsub.f32 %v1674, %v1675
        %v1677 = vand.u32 %v1676, 4294901760
        %1678 = vmatpush.msra.mxu0 %v1677
        %v1679 = vand.u32 %v551, 4294901760
        %v1680 = vsub.f32 %v551, %v1679
        %v1681 = vand.u32 %v1680, 4294901760
        %v1682 = vsub.f32 %v1680, %v1681
        %v1683 = vand.u32 %v1682, 4294901760
        %1684 = vmatpush.msra.mxu0 %v1683
        %v1685 = vand.u32 %v550, 4294901760
        %v1686 = vsub.f32 %v550, %v1685
        %v1687 = vand.u32 %v1686, 4294901760
        %v1688 = vsub.f32 %v1686, %v1687
        %v1689 = vand.u32 %v1688, 4294901760
        %1690 = vmatpush.msra.mxu0 %v1689
        %v1691 = vand.u32 %v549, 4294901760
        %v1692 = vsub.f32 %v549, %v1691
        %v1693 = vand.u32 %v1692, 4294901760
        %v1694 = vsub.f32 %v1692, %v1693
        %v1695 = vand.u32 %v1694, 4294901760
        %1696 = vmatpush.msra.mxu0 %v1695
        %v1697 = vand.u32 %v548, 4294901760
        %v1698 = vsub.f32 %v548, %v1697
        %v1699 = vand.u32 %v1698, 4294901760
        %v1700 = vsub.f32 %v1698, %v1699
        %v1701 = vand.u32 %v1700, 4294901760
        %1702 = vmatpush.msra.mxu0 %v1701
        %v1703 = vand.u32 %v547, 4294901760
        %v1704 = vsub.f32 %v547, %v1703
        %v1705 = vand.u32 %v1704, 4294901760
        %v1706 = vsub.f32 %v1704, %v1705
        %v1707 = vand.u32 %v1706, 4294901760
        %1708 = vmatpush.msra.mxu0 %v1707
        %v1709 = vand.u32 %v546, 4294901760
        %v1710 = vsub.f32 %v546, %v1709
        %v1711 = vand.u32 %v1710, 4294901760
        %v1712 = vsub.f32 %v1710, %v1711
        %v1713 = vand.u32 %v1712, 4294901760
        %1714 = vmatpush.msra.mxu0 %v1713
        %v1715 = vand.u32 %v545, 4294901760
        %v1716 = vsub.f32 %v545, %v1715
        %v1717 = vand.u32 %v1716, 4294901760
        %v1718 = vsub.f32 %v1716, %v1717
        %v1719 = vand.u32 %v1718, 4294901760
        %1720 = vmatpush.msra.mxu0 %v1719
        %v1721 = vand.u32 %v495, 4294901760
        %1722 = vmatmul.f32.gmra.mxu0 %v1721
        %v1723 = vpop.f32.mrf.mxu0
        %v1724 = vadd.f32 %v1623, %v1723
        %1725 = vdwg.mxu0
        %v1726 = vand.u32 %v560, 4294901760
        %v1727 = vsub.f32 %v560, %v1726
        %1728 = vmatpush.msra.mxu0 %v1727
        %v1729 = vand.u32 %v559, 4294901760
        %v1730 = vsub.f32 %v559, %v1729
        %1731 = vmatpush.msra.mxu0 %v1730
        %v1732 = vand.u32 %v558, 4294901760
        %v1733 = vsub.f32 %v558, %v1732
        %1734 = vmatpush.msra.mxu0 %v1733
        %v1735 = vand.u32 %v557, 4294901760
        %v1736 = vsub.f32 %v557, %v1735
        %1737 = vmatpush.msra.mxu0 %v1736
        %v1738 = vand.u32 %v556, 4294901760
        %v1739 = vsub.f32 %v556, %v1738
        %1740 = vmatpush.msra.mxu0 %v1739
        %v1741 = vand.u32 %v555, 4294901760
        %v1742 = vsub.f32 %v555, %v1741
        %1743 = vmatpush.msra.mxu0 %v1742
        %v1744 = vand.u32 %v554, 4294901760
        %v1745 = vsub.f32 %v554, %v1744
        %1746 = vmatpush.msra.mxu0 %v1745
        %v1747 = vand.u32 %v553, 4294901760
        %v1748 = vsub.f32 %v553, %v1747
        %1749 = vmatpush.msra.mxu0 %v1748
        %v1750 = vand.u32 %v552, 4294901760
        %v1751 = vsub.f32 %v552, %v1750
        %1752 = vmatpush.msra.mxu0 %v1751
        %v1753 = vand.u32 %v551, 4294901760
        %v1754 = vsub.f32 %v551, %v1753
        %1755 = vmatpush.msra.mxu0 %v1754
        %v1756 = vand.u32 %v550, 4294901760
        %v1757 = vsub.f32 %v550, %v1756
        %1758 = vmatpush.msra.mxu0 %v1757
        %v1759 = vand.u32 %v549, 4294901760
        %v1760 = vsub.f32 %v549, %v1759
        %1761 = vmatpush.msra.mxu0 %v1760
        %v1762 = vand.u32 %v548, 4294901760
        %v1763 = vsub.f32 %v548, %v1762
        %1764 = vmatpush.msra.mxu0 %v1763
        %v1765 = vand.u32 %v547, 4294901760
        %v1766 = vsub.f32 %v547, %v1765
        %1767 = vmatpush.msra.mxu0 %v1766
        %v1768 = vand.u32 %v546, 4294901760
        %v1769 = vsub.f32 %v546, %v1768
        %1770 = vmatpush.msra.mxu0 %v1769
        %v1771 = vand.u32 %v545, 4294901760
        %v1772 = vsub.f32 %v545, %v1771
        %1773 = vmatpush.msra.mxu0 %v1772
        %v1774 = vand.u32 %v495, 4294901760
        %v1775 = vsub.f32 %v495, %v1774
        %1776 = vmatmul.f32.gmra.mxu0 %v1775
        %v1777 = vpop.f32.mrf.mxu0
        %v1778 = vadd.f32 %v1724, %v1777
        %1779 = vdwg.mxu0
        %v1780 = vand.u32 %v560, 4294901760
        %1781 = vmatpush.msra.mxu0 %v1780
        %v1782 = vand.u32 %v559, 4294901760
        %1783 = vmatpush.msra.mxu0 %v1782
        %v1784 = vand.u32 %v558, 4294901760
        %1785 = vmatpush.msra.mxu0 %v1784
        %v1786 = vand.u32 %v557, 4294901760
        %1787 = vmatpush.msra.mxu0 %v1786
        %v1788 = vand.u32 %v556, 4294901760
        %1789 = vmatpush.msra.mxu0 %v1788
        %v1790 = vand.u32 %v555, 4294901760
        %1791 = vmatpush.msra.mxu0 %v1790
        %v1792 = vand.u32 %v554, 4294901760
        %1793 = vmatpush.msra.mxu0 %v1792
        %v1794 = vand.u32 %v553, 4294901760
        %1795 = vmatpush.msra.mxu0 %v1794
        %v1796 = vand.u32 %v552, 4294901760
        %1797 = vmatpush.msra.mxu0 %v1796
        %v1798 = vand.u32 %v551, 4294901760
        %1799 = vmatpush.msra.mxu0 %v1798
        %v1800 = vand.u32 %v550, 4294901760
        %1801 = vmatpush.msra.mxu0 %v1800
        %v1802 = vand.u32 %v549, 4294901760
        %1803 = vmatpush.msra.mxu0 %v1802
        %v1804 = vand.u32 %v548, 4294901760
        %1805 = vmatpush.msra.mxu0 %v1804
        %v1806 = vand.u32 %v547, 4294901760
        %1807 = vmatpush.msra.mxu0 %v1806
        %v1808 = vand.u32 %v546, 4294901760
        %1809 = vmatpush.msra.mxu0 %v1808
        %v1810 = vand.u32 %v545, 4294901760
        %1811 = vmatpush.msra.mxu0 %v1810
        %v1812 = vand.u32 %v495, 4294901760
        %v1813 = vsub.f32 %v495, %v1812
        %v1814 = vand.u32 %v1813, 4294901760
        %1815 = vmatmul.f32.gmra.mxu0 %v1814
        %v1816 = vpop.f32.mrf.mxu0
        %v1817 = vadd.f32 %v1778, %v1816
        %1818 = vdwg.mxu0
        %v1819 = vand.u32 %v560, 4294901760
        %v1820 = vsub.f32 %v560, %v1819
        %v1821 = vand.u32 %v1820, 4294901760
        %1822 = vmatpush.msra.mxu0 %v1821
        %v1823 = vand.u32 %v559, 4294901760
        %v1824 = vsub.f32 %v559, %v1823
        %v1825 = vand.u32 %v1824, 4294901760
        %1826 = vmatpush.msra.mxu0 %v1825
        %v1827 = vand.u32 %v558, 4294901760
        %v1828 = vsub.f32 %v558, %v1827
        %v1829 = vand.u32 %v1828, 4294901760
        %1830 = vmatpush.msra.mxu0 %v1829
        %v1831 = vand.u32 %v557, 4294901760
        %v1832 = vsub.f32 %v557, %v1831
        %v1833 = vand.u32 %v1832, 4294901760
        %1834 = vmatpush.msra.mxu0 %v1833
        %v1835 = vand.u32 %v556, 4294901760
        %v1836 = vsub.f32 %v556, %v1835
        %v1837 = vand.u32 %v1836, 4294901760
        %1838 = vmatpush.msra.mxu0 %v1837
        %v1839 = vand.u32 %v555, 4294901760
        %v1840 = vsub.f32 %v555, %v1839
        %v1841 = vand.u32 %v1840, 4294901760
        %1842 = vmatpush.msra.mxu0 %v1841
        %v1843 = vand.u32 %v554, 4294901760
        %v1844 = vsub.f32 %v554, %v1843
        %v1845 = vand.u32 %v1844, 4294901760
        %1846 = vmatpush.msra.mxu0 %v1845
        %v1847 = vand.u32 %v553, 4294901760
        %v1848 = vsub.f32 %v553, %v1847
        %v1849 = vand.u32 %v1848, 4294901760
        %1850 = vmatpush.msra.mxu0 %v1849
        %v1851 = vand.u32 %v552, 4294901760
        %v1852 = vsub.f32 %v552, %v1851
        %v1853 = vand.u32 %v1852, 4294901760
        %1854 = vmatpush.msra.mxu0 %v1853
        %v1855 = vand.u32 %v551, 4294901760
        %v1856 = vsub.f32 %v551, %v1855
        %v1857 = vand.u32 %v1856, 4294901760
        %1858 = vmatpush.msra.mxu0 %v1857
        %v1859 = vand.u32 %v550, 4294901760
        %v1860 = vsub.f32 %v550, %v1859
        %v1861 = vand.u32 %v1860, 4294901760
        %1862 = vmatpush.msra.mxu0 %v1861
        %v1863 = vand.u32 %v549, 4294901760
        %v1864 = vsub.f32 %v549, %v1863
        %v1865 = vand.u32 %v1864, 4294901760
        %1866 = vmatpush.msra.mxu0 %v1865
        %v1867 = vand.u32 %v548, 4294901760
        %v1868 = vsub.f32 %v548, %v1867
        %v1869 = vand.u32 %v1868, 4294901760
        %1870 = vmatpush.msra.mxu0 %v1869
        %v1871 = vand.u32 %v547, 4294901760
        %v1872 = vsub.f32 %v547, %v1871
        %v1873 = vand.u32 %v1872, 4294901760
        %1874 = vmatpush.msra.mxu0 %v1873
        %v1875 = vand.u32 %v546, 4294901760
        %v1876 = vsub.f32 %v546, %v1875
        %v1877 = vand.u32 %v1876, 4294901760
        %1878 = vmatpush.msra.mxu0 %v1877
        %v1879 = vand.u32 %v545, 4294901760
        %v1880 = vsub.f32 %v545, %v1879
        %v1881 = vand.u32 %v1880, 4294901760
        %1882 = vmatpush.msra.mxu0 %v1881
        %v1883 = vand.u32 %v495, 4294901760
        %1884 = vmatmul.f32.gmra.mxu0 %v1883
        %v1885 = vpop.f32.mrf.mxu0
        %v1886 = vadd.f32 %v1817, %v1885
        %1887 = vdwg.mxu0
        %v1888 = vand.u32 %v560, 4294901760
        %1889 = vmatpush.msra.mxu0 %v1888
        %v1890 = vand.u32 %v559, 4294901760
        %1891 = vmatpush.msra.mxu0 %v1890
        %v1892 = vand.u32 %v558, 4294901760
        %1893 = vmatpush.msra.mxu0 %v1892
        %v1894 = vand.u32 %v557, 4294901760
        %1895 = vmatpush.msra.mxu0 %v1894
        %v1896 = vand.u32 %v556, 4294901760
        %1897 = vmatpush.msra.mxu0 %v1896
        %v1898 = vand.u32 %v555, 4294901760
        %1899 = vmatpush.msra.mxu0 %v1898
        %v1900 = vand.u32 %v554, 4294901760
        %1901 = vmatpush.msra.mxu0 %v1900
        %v1902 = vand.u32 %v553, 4294901760
        %1903 = vmatpush.msra.mxu0 %v1902
        %v1904 = vand.u32 %v552, 4294901760
        %1905 = vmatpush.msra.mxu0 %v1904
        %v1906 = vand.u32 %v551, 4294901760
        %1907 = vmatpush.msra.mxu0 %v1906
        %v1908 = vand.u32 %v550, 4294901760
        %1909 = vmatpush.msra.mxu0 %v1908
        %v1910 = vand.u32 %v549, 4294901760
        %1911 = vmatpush.msra.mxu0 %v1910
        %v1912 = vand.u32 %v548, 4294901760
        %1913 = vmatpush.msra.mxu0 %v1912
        %v1914 = vand.u32 %v547, 4294901760
        %1915 = vmatpush.msra.mxu0 %v1914
        %v1916 = vand.u32 %v546, 4294901760
        %1917 = vmatpush.msra.mxu0 %v1916
        %v1918 = vand.u32 %v545, 4294901760
        %1919 = vmatpush.msra.mxu0 %v1918
        %v1920 = vand.u32 %v495, 4294901760
        %1921 = vmatmul.f32.gmra.mxu0 %v1920
        %v1922 = vpop.f32.mrf.mxu0
        %v1923 = vadd.f32 %v1886, %v1922
        %1924 = vdwg.mxu0
        %v1925 = vadd.f32 %v496, %v1923
        %vm1926 = vcmask 261120
        %1927 = vst.msk [vmem:[#allocation2] sm:$0xff] %vm1926, %v1925
        %p1928 = scmp.eq.s32.totalorder %s28, 2
        // Predicated region
        $region93: #{tpu_custom_call.1} parent=55 // pred_check
          %p1929 = pneg %p1928
        $region94: #{tpu_custom_call.1} parent=55 // pred_check_branch
          %1931 = sbr.rel (%p1929) target = $region96
        $region95: #{tpu_custom_call.1} parent=55 // pred_region
          %v1932 = vld [vmem:[#allocation2] sm:$0xff]
          %v1933 = vld [vmem:[#allocation6] sm:$0xff]
          %v1934 = vld [vmem:[#allocation6 + $0x8] sm:$0xff]
          %v1935 = vld [vmem:[#allocation6 + $0x10] sm:$0xff]
          %v1936 = vld [vmem:[#allocation6 + $0x18] sm:$0xff]
          %v1937 = vld [vmem:[#allocation6 + $0x20] sm:$0xff]
          %v1938 = vld [vmem:[#allocation6 + $0x28] sm:$0xff]
          %v1939 = vld [vmem:[#allocation6 + $0x30] sm:$0xff]
          %v1940 = vld [vmem:[#allocation6 + $0x38] sm:$0xff]
          %v1941 = vld [vmem:[#allocation6 + $0x40] sm:$0xff]
          %v1942 = vld [vmem:[#allocation6 + $0x48] sm:$0xff]
          %v1943 = vld [vmem:[#allocation6 + $0x50] sm:$0xff]
          %v1944 = vld [vmem:[#allocation6 + $0x58] sm:$0xff]
          %v1945 = vld [vmem:[#allocation6 + $0x60] sm:$0xff]
          %v1946 = vld [vmem:[#allocation6 + $0x68] sm:$0xff]
          %v1947 = vld [vmem:[#allocation6 + $0x70] sm:$0xff]
          %v1948 = vld [vmem:[#allocation6 + $0x78] sm:$0xff]
          %v1950 = vsel %vm1926, %v1932, 0
          %1952 = vmatpush.msra.mxu0 0.0
          %1953 = vmatpush.msra.mxu0 0.0
          %1954 = vmatpush.msra.mxu0 0.0
          %1955 = vmatpush.msra.mxu0 0.0
          %1956 = vmatpush.msra.mxu0 0.0
          %1957 = vmatpush.msra.mxu0 0.0
          %1958 = vmatpush.msra.mxu0 0.0
          %1959 = vmatpush.msra.mxu0 0.0
          %1960 = vmatpush.msra.mxu0 0.0
          %1961 = vmatpush.msra.mxu0 0.0
          %1962 = vmatpush.msra.mxu0 0.0
          %1963 = vmatpush.msra.mxu0 0.0
          %1964 = vmatpush.msra.mxu0 %v1945
          %1965 = vmatpush.msra.mxu0 %v1941
          %1966 = vmatpush.msra.mxu0 %v1937
          %1967 = vmatpush.msra.mxu0 %v1933
          %1968 = vmatmul.f32.gmra.mxu0 %v1950
          %v1969 = vpop.f32.mrf.mxu0
          %v1970 = vadd.f32 0.0, %v1969
          %1971 = vdwg.mxu0
          %1972 = vmatpush.msra.mxu0 0.0
          %1973 = vmatpush.msra.mxu0 0.0
          %1974 = vmatpush.msra.mxu0 0.0
          %1975 = vmatpush.msra.mxu0 0.0
          %1976 = vmatpush.msra.mxu0 0.0
          %1977 = vmatpush.msra.mxu0 0.0
          %1978 = vmatpush.msra.mxu0 0.0
          %1979 = vmatpush.msra.mxu0 0.0
          %1980 = vmatpush.msra.mxu0 0.0
          %1981 = vmatpush.msra.mxu0 0.0
          %1982 = vmatpush.msra.mxu0 0.0
          %1983 = vmatpush.msra.mxu0 0.0
          %1984 = vmatpush.msra.mxu0 %v1946
          %1985 = vmatpush.msra.mxu0 %v1942
          %1986 = vmatpush.msra.mxu0 %v1938
          %1987 = vmatpush.msra.mxu0 %v1934
          %1988 = vmatmul.f32.gmra.mxu0 %v1950
          %v1989 = vpop.f32.mrf.mxu0
          %v1990 = vadd.f32 0.0, %v1989
          %1991 = vdwg.mxu0
          %1992 = vmatpush.msra.mxu0 0.0
          %1993 = vmatpush.msra.mxu0 0.0
          %1994 = vmatpush.msra.mxu0 0.0
          %1995 = vmatpush.msra.mxu0 0.0
          %1996 = vmatpush.msra.mxu0 0.0
          %1997 = vmatpush.msra.mxu0 0.0
          %1998 = vmatpush.msra.mxu0 0.0
          %1999 = vmatpush.msra.mxu0 0.0
          %2000 = vmatpush.msra.mxu0 0.0
          %2001 = vmatpush.msra.mxu0 0.0
          %2002 = vmatpush.msra.mxu0 0.0
          %2003 = vmatpush.msra.mxu0 0.0
          %2004 = vmatpush.msra.mxu0 %v1947
          %2005 = vmatpush.msra.mxu0 %v1943
          %2006 = vmatpush.msra.mxu0 %v1939
          %2007 = vmatpush.msra.mxu0 %v1935
          %2008 = vmatmul.f32.gmra.mxu0 %v1950
          %v2009 = vpop.f32.mrf.mxu0
          %v2010 = vadd.f32 0.0, %v2009
          %2011 = vdwg.mxu0
          %2012 = vmatpush.msra.mxu0 0.0
          %2013 = vmatpush.msra.mxu0 0.0
          %2014 = vmatpush.msra.mxu0 0.0
          %2015 = vmatpush.msra.mxu0 0.0
          %2016 = vmatpush.msra.mxu0 0.0
          %2017 = vmatpush.msra.mxu0 0.0
          %2018 = vmatpush.msra.mxu0 0.0
          %2019 = vmatpush.msra.mxu0 0.0
          %2020 = vmatpush.msra.mxu0 0.0
          %2021 = vmatpush.msra.mxu0 0.0
          %2022 = vmatpush.msra.mxu0 0.0
          %2023 = vmatpush.msra.mxu0 0.0
          %2024 = vmatpush.msra.mxu0 %v1948
          %2025 = vmatpush.msra.mxu0 %v1944
          %2026 = vmatpush.msra.mxu0 %v1940
          %2027 = vmatpush.msra.mxu0 %v1936
          %2028 = vmatmul.f32.gmra.mxu0 %v1950
          %v2029 = vpop.f32.mrf.mxu0
          %v2030 = vadd.f32 0.0, %v2029
          %2031 = vdwg.mxu0
          %v2032 = vtanh.pop %v1970
          %v2033 = vtanh.pop %v1990
          %v2034 = vtanh.pop %v2010
          %v2035 = vtanh.pop %v2030
          %v2036 = vld [vmem:[#allocation9] sm:$0xff]
          %v2037 = vld [vmem:[#allocation9 + $0x8] sm:$0xff]
          %v2038 = vld [vmem:[#allocation9 + $0x10] sm:$0xff]
          %v2039 = vld [vmem:[#allocation9 + $0x18] sm:$0xff]
          %v2040 = vld [vmem:[#allocation9 + $0x20] sm:$0xff]
          %v2041 = vld [vmem:[#allocation9 + $0x28] sm:$0xff]
          %v2042 = vld [vmem:[#allocation9 + $0x30] sm:$0xff]
          %v2043 = vld [vmem:[#allocation9 + $0x38] sm:$0xff]
          %v2044 = vld [vmem:[#allocation9 + $0x40] sm:$0xff]
          %v2045 = vld [vmem:[#allocation9 + $0x48] sm:$0xff]
          %v2046 = vld [vmem:[#allocation9 + $0x50] sm:$0xff]
          %v2047 = vld [vmem:[#allocation9 + $0x58] sm:$0xff]
          %v2048 = vld [vmem:[#allocation9 + $0x60] sm:$0xff]
          %v2049 = vld [vmem:[#allocation9 + $0x68] sm:$0xff]
          %v2050 = vld [vmem:[#allocation9 + $0x70] sm:$0xff]
          %v2051 = vld [vmem:[#allocation9 + $0x78] sm:$0xff]
          %v2052 = vld [vmem:[#allocation9 + $0x80] sm:$0xff]
          %v2053 = vld [vmem:[#allocation9 + $0x88] sm:$0xff]
          %v2054 = vld [vmem:[#allocation9 + $0x90] sm:$0xff]
          %v2055 = vld [vmem:[#allocation9 + $0x98] sm:$0xff]
          %v2056 = vld [vmem:[#allocation9 + $0xa0] sm:$0xff]
          %v2057 = vld [vmem:[#allocation9 + $0xa8] sm:$0xff]
          %v2058 = vld [vmem:[#allocation9 + $0xb0] sm:$0xff]
          %v2059 = vld [vmem:[#allocation9 + $0xb8] sm:$0xff]
          %v2060 = vld [vmem:[#allocation9 + $0xc0] sm:$0xff]
          %v2061 = vld [vmem:[#allocation9 + $0xc8] sm:$0xff]
          %v2062 = vld [vmem:[#allocation9 + $0xd0] sm:$0xff]
          %v2063 = vld [vmem:[#allocation9 + $0xd8] sm:$0xff]
          %v2064 = vld [vmem:[#allocation9 + $0xe0] sm:$0xff]
          %v2065 = vld [vmem:[#allocation9 + $0xe8] sm:$0xff]
          %v2066 = vld [vmem:[#allocation9 + $0xf0] sm:$0xff]
          %v2067 = vld [vmem:[#allocation9 + $0xf8] sm:$0xff]
          %v2068 = vld [vmem:[#allocation9 + $0x100] sm:$0xff]
          %v2069 = vld [vmem:[#allocation9 + $0x108] sm:$0xff]
          %v2070 = vld [vmem:[#allocation9 + $0x110] sm:$0xff]
          %v2071 = vld [vmem:[#allocation9 + $0x118] sm:$0xff]
          %v2072 = vld [vmem:[#allocation9 + $0x120] sm:$0xff]
          %v2073 = vld [vmem:[#allocation9 + $0x128] sm:$0xff]
          %v2074 = vld [vmem:[#allocation9 + $0x130] sm:$0xff]
          %v2075 = vld [vmem:[#allocation9 + $0x138] sm:$0xff]
          %v2076 = vld [vmem:[#allocation9 + $0x140] sm:$0xff]
          %v2077 = vld [vmem:[#allocation9 + $0x148] sm:$0xff]
          %v2078 = vld [vmem:[#allocation9 + $0x150] sm:$0xff]
          %v2079 = vld [vmem:[#allocation9 + $0x158] sm:$0xff]
          %v2080 = vld [vmem:[#allocation9 + $0x160] sm:$0xff]
          %v2081 = vld [vmem:[#allocation9 + $0x168] sm:$0xff]
          %v2082 = vld [vmem:[#allocation9 + $0x170] sm:$0xff]
          %v2083 = vld [vmem:[#allocation9 + $0x178] sm:$0xff]
          %v2084 = vld [vmem:[#allocation9 + $0x180] sm:$0xff]
          %v2085 = vld [vmem:[#allocation9 + $0x188] sm:$0xff]
          %v2086 = vld [vmem:[#allocation9 + $0x190] sm:$0xff]
          %v2087 = vld [vmem:[#allocation9 + $0x198] sm:$0xff]
          %v2088 = vld [vmem:[#allocation9 + $0x1a0] sm:$0xff]
          %v2089 = vld [vmem:[#allocation9 + $0x1a8] sm:$0xff]
          %v2090 = vld [vmem:[#allocation9 + $0x1b0] sm:$0xff]
          %v2091 = vld [vmem:[#allocation9 + $0x1b8] sm:$0xff]
          %v2092 = vld [vmem:[#allocation9 + $0x1c0] sm:$0xff]
          %v2093 = vld [vmem:[#allocation9 + $0x1c8] sm:$0xff]
          %v2094 = vld [vmem:[#allocation9 + $0x1d0] sm:$0xff]
          %v2095 = vld [vmem:[#allocation9 + $0x1d8] sm:$0xff]
          %v2096 = vld [vmem:[#allocation9 + $0x1e0] sm:$0xff]
          %v2097 = vld [vmem:[#allocation9 + $0x1e8] sm:$0xff]
          %v2098 = vld [vmem:[#allocation9 + $0x1f0] sm:$0xff]
          %v2099 = vld [vmem:[#allocation9 + $0x1f8] sm:$0xff]
          %v2100 = vld [vmem:[#allocation9 + $0x200] sm:$0xff]
          %v2101 = vld [vmem:[#allocation9 + $0x208] sm:$0xff]
          %v2102 = vld [vmem:[#allocation9 + $0x210] sm:$0xff]
          %v2103 = vld [vmem:[#allocation9 + $0x218] sm:$0xff]
          %v2104 = vld [vmem:[#allocation9 + $0x220] sm:$0xff]
          %v2105 = vld [vmem:[#allocation9 + $0x228] sm:$0xff]
          %v2106 = vld [vmem:[#allocation9 + $0x230] sm:$0xff]
          %v2107 = vld [vmem:[#allocation9 + $0x238] sm:$0xff]
          %v2108 = vld [vmem:[#allocation9 + $0x240] sm:$0xff]
          %v2109 = vld [vmem:[#allocation9 + $0x248] sm:$0xff]
          %v2110 = vld [vmem:[#allocation9 + $0x250] sm:$0xff]
          %v2111 = vld [vmem:[#allocation9 + $0x258] sm:$0xff]
          %v2112 = vld [vmem:[#allocation9 + $0x260] sm:$0xff]
          %v2113 = vld [vmem:[#allocation9 + $0x268] sm:$0xff]
          %v2114 = vld [vmem:[#allocation9 + $0x270] sm:$0xff]
          %v2115 = vld [vmem:[#allocation9 + $0x278] sm:$0xff]
          %v2116 = vld [vmem:[#allocation9 + $0x280] sm:$0xff]
          %v2117 = vld [vmem:[#allocation9 + $0x288] sm:$0xff]
          %v2118 = vld [vmem:[#allocation9 + $0x290] sm:$0xff]
          %v2119 = vld [vmem:[#allocation9 + $0x298] sm:$0xff]
          %v2120 = vld [vmem:[#allocation9 + $0x2a0] sm:$0xff]
          %v2121 = vld [vmem:[#allocation9 + $0x2a8] sm:$0xff]
          %v2122 = vld [vmem:[#allocation9 + $0x2b0] sm:$0xff]
          %v2123 = vld [vmem:[#allocation9 + $0x2b8] sm:$0xff]
          %v2124 = vld [vmem:[#allocation9 + $0x2c0] sm:$0xff]
          %v2125 = vld [vmem:[#allocation9 + $0x2c8] sm:$0xff]
          %v2126 = vld [vmem:[#allocation9 + $0x2d0] sm:$0xff]
          %v2127 = vld [vmem:[#allocation9 + $0x2d8] sm:$0xff]
          %v2128 = vld [vmem:[#allocation9 + $0x2e0] sm:$0xff]
          %v2129 = vld [vmem:[#allocation9 + $0x2e8] sm:$0xff]
          %v2130 = vld [vmem:[#allocation9 + $0x2f0] sm:$0xff]
          %v2131 = vld [vmem:[#allocation9 + $0x2f8] sm:$0xff]
          %v2132 = vld [vmem:[#allocation9 + $0x300] sm:$0xff]
          %v2133 = vld [vmem:[#allocation9 + $0x308] sm:$0xff]
          %v2134 = vld [vmem:[#allocation9 + $0x310] sm:$0xff]
          %v2135 = vld [vmem:[#allocation9 + $0x318] sm:$0xff]
          %v2136 = vld [vmem:[#allocation9 + $0x320] sm:$0xff]
          %v2137 = vld [vmem:[#allocation9 + $0x328] sm:$0xff]
          %v2138 = vld [vmem:[#allocation9 + $0x330] sm:$0xff]
          %v2139 = vld [vmem:[#allocation9 + $0x338] sm:$0xff]
          %v2140 = vld [vmem:[#allocation9 + $0x340] sm:$0xff]
          %v2141 = vld [vmem:[#allocation9 + $0x348] sm:$0xff]
          %v2142 = vld [vmem:[#allocation9 + $0x350] sm:$0xff]
          %v2143 = vld [vmem:[#allocation9 + $0x358] sm:$0xff]
          %v2144 = vld [vmem:[#allocation9 + $0x360] sm:$0xff]
          %v2145 = vld [vmem:[#allocation9 + $0x368] sm:$0xff]
          %v2146 = vld [vmem:[#allocation9 + $0x370] sm:$0xff]
          %v2147 = vld [vmem:[#allocation9 + $0x378] sm:$0xff]
          %v2148 = vld [vmem:[#allocation9 + $0x380] sm:$0xff]
          %v2149 = vld [vmem:[#allocation9 + $0x388] sm:$0xff]
          %v2150 = vld [vmem:[#allocation9 + $0x390] sm:$0xff]
          %v2151 = vld [vmem:[#allocation9 + $0x398] sm:$0xff]
          %v2152 = vld [vmem:[#allocation9 + $0x3a0] sm:$0xff]
          %v2153 = vld [vmem:[#allocation9 + $0x3a8] sm:$0xff]
          %v2154 = vld [vmem:[#allocation9 + $0x3b0] sm:$0xff]
          %v2155 = vld [vmem:[#allocation9 + $0x3b8] sm:$0xff]
          %v2156 = vld [vmem:[#allocation9 + $0x3c0] sm:$0xff]
          %v2157 = vld [vmem:[#allocation9 + $0x3c8] sm:$0xff]
          %v2158 = vld [vmem:[#allocation9 + $0x3d0] sm:$0xff]
          %v2159 = vld [vmem:[#allocation9 + $0x3d8] sm:$0xff]
          %v2160 = vld [vmem:[#allocation9 + $0x3e0] sm:$0xff]
          %v2161 = vld [vmem:[#allocation9 + $0x3e8] sm:$0xff]
          %v2162 = vld [vmem:[#allocation9 + $0x3f0] sm:$0xff]
          %v2163 = vld [vmem:[#allocation9 + $0x3f8] sm:$0xff]
          %v2164 = vld [vmem:[#allocation9 + $0x400] sm:$0xff]
          %v2165 = vld [vmem:[#allocation9 + $0x408] sm:$0xff]
          %v2166 = vld [vmem:[#allocation9 + $0x410] sm:$0xff]
          %v2167 = vld [vmem:[#allocation9 + $0x418] sm:$0xff]
          %v2168 = vld [vmem:[#allocation9 + $0x420] sm:$0xff]
          %v2169 = vld [vmem:[#allocation9 + $0x428] sm:$0xff]
          %v2170 = vld [vmem:[#allocation9 + $0x430] sm:$0xff]
          %v2171 = vld [vmem:[#allocation9 + $0x438] sm:$0xff]
          %v2172 = vld [vmem:[#allocation9 + $0x440] sm:$0xff]
          %v2173 = vld [vmem:[#allocation9 + $0x448] sm:$0xff]
          %v2174 = vld [vmem:[#allocation9 + $0x450] sm:$0xff]
          %v2175 = vld [vmem:[#allocation9 + $0x458] sm:$0xff]
          %v2176 = vld [vmem:[#allocation9 + $0x460] sm:$0xff]
          %v2177 = vld [vmem:[#allocation9 + $0x468] sm:$0xff]
          %v2178 = vld [vmem:[#allocation9 + $0x470] sm:$0xff]
          %v2179 = vld [vmem:[#allocation9 + $0x478] sm:$0xff]
          %v2180 = vld [vmem:[#allocation9 + $0x480] sm:$0xff]
          %v2181 = vld [vmem:[#allocation9 + $0x488] sm:$0xff]
          %v2182 = vld [vmem:[#allocation9 + $0x490] sm:$0xff]
          %v2183 = vld [vmem:[#allocation9 + $0x498] sm:$0xff]
          %v2184 = vld [vmem:[#allocation9 + $0x4a0] sm:$0xff]
          %v2185 = vld [vmem:[#allocation9 + $0x4a8] sm:$0xff]
          %v2186 = vld [vmem:[#allocation9 + $0x4b0] sm:$0xff]
          %v2187 = vld [vmem:[#allocation9 + $0x4b8] sm:$0xff]
          %v2188 = vld [vmem:[#allocation9 + $0x4c0] sm:$0xff]
          %v2189 = vld [vmem:[#allocation9 + $0x4c8] sm:$0xff]
          %v2190 = vld [vmem:[#allocation9 + $0x4d0] sm:$0xff]
          %v2191 = vld [vmem:[#allocation9 + $0x4d8] sm:$0xff]
          %v2192 = vld [vmem:[#allocation9 + $0x4e0] sm:$0xff]
          %v2193 = vld [vmem:[#allocation9 + $0x4e8] sm:$0xff]
          %v2194 = vld [vmem:[#allocation9 + $0x4f0] sm:$0xff]
          %v2195 = vld [vmem:[#allocation9 + $0x4f8] sm:$0xff]
          %v2196 = vld [vmem:[#allocation9 + $0x500] sm:$0xff]
          %v2197 = vld [vmem:[#allocation9 + $0x508] sm:$0xff]
          %v2198 = vld [vmem:[#allocation9 + $0x510] sm:$0xff]
          %v2199 = vld [vmem:[#allocation9 + $0x518] sm:$0xff]
          %v2200 = vld [vmem:[#allocation9 + $0x520] sm:$0xff]
          %v2201 = vld [vmem:[#allocation9 + $0x528] sm:$0xff]
          %v2202 = vld [vmem:[#allocation9 + $0x530] sm:$0xff]
          %v2203 = vld [vmem:[#allocation9 + $0x538] sm:$0xff]
          %v2204 = vld [vmem:[#allocation9 + $0x540] sm:$0xff]
          %v2205 = vld [vmem:[#allocation9 + $0x548] sm:$0xff]
          %v2206 = vld [vmem:[#allocation9 + $0x550] sm:$0xff]
          %v2207 = vld [vmem:[#allocation9 + $0x558] sm:$0xff]
          %v2208 = vld [vmem:[#allocation9 + $0x560] sm:$0xff]
          %v2209 = vld [vmem:[#allocation9 + $0x568] sm:$0xff]
          %v2210 = vld [vmem:[#allocation9 + $0x570] sm:$0xff]
          %v2211 = vld [vmem:[#allocation9 + $0x578] sm:$0xff]
          %v2212 = vld [vmem:[#allocation9 + $0x580] sm:$0xff]
          %v2213 = vld [vmem:[#allocation9 + $0x588] sm:$0xff]
          %v2214 = vld [vmem:[#allocation9 + $0x590] sm:$0xff]
          %v2215 = vld [vmem:[#allocation9 + $0x598] sm:$0xff]
          %v2216 = vld [vmem:[#allocation9 + $0x5a0] sm:$0xff]
          %v2217 = vld [vmem:[#allocation9 + $0x5a8] sm:$0xff]
          %v2218 = vld [vmem:[#allocation9 + $0x5b0] sm:$0xff]
          %v2219 = vld [vmem:[#allocation9 + $0x5b8] sm:$0xff]
          %v2220 = vld [vmem:[#allocation9 + $0x5c0] sm:$0xff]
          %v2221 = vld [vmem:[#allocation9 + $0x5c8] sm:$0xff]
          %v2222 = vld [vmem:[#allocation9 + $0x5d0] sm:$0xff]
          %v2223 = vld [vmem:[#allocation9 + $0x5d8] sm:$0xff]
          %v2224 = vld [vmem:[#allocation9 + $0x5e0] sm:$0xff]
          %v2225 = vld [vmem:[#allocation9 + $0x5e8] sm:$0xff]
          %v2226 = vld [vmem:[#allocation9 + $0x5f0] sm:$0xff]
          %v2227 = vld [vmem:[#allocation9 + $0x5f8] sm:$0xff]
          %v2228 = vld [vmem:[#allocation9 + $0x600] sm:$0xff]
          %v2229 = vld [vmem:[#allocation9 + $0x608] sm:$0xff]
          %v2230 = vld [vmem:[#allocation9 + $0x610] sm:$0xff]
          %v2231 = vld [vmem:[#allocation9 + $0x618] sm:$0xff]
          %v2232 = vld [vmem:[#allocation9 + $0x620] sm:$0xff]
          %v2233 = vld [vmem:[#allocation9 + $0x628] sm:$0xff]
          %v2234 = vld [vmem:[#allocation9 + $0x630] sm:$0xff]
          %v2235 = vld [vmem:[#allocation9 + $0x638] sm:$0xff]
          %v2236 = vld [vmem:[#allocation9 + $0x640] sm:$0xff]
          %v2237 = vld [vmem:[#allocation9 + $0x648] sm:$0xff]
          %v2238 = vld [vmem:[#allocation9 + $0x650] sm:$0xff]
          %v2239 = vld [vmem:[#allocation9 + $0x658] sm:$0xff]
          %v2240 = vld [vmem:[#allocation9 + $0x660] sm:$0xff]
          %v2241 = vld [vmem:[#allocation9 + $0x668] sm:$0xff]
          %v2242 = vld [vmem:[#allocation9 + $0x670] sm:$0xff]
          %v2243 = vld [vmem:[#allocation9 + $0x678] sm:$0xff]
          %v2244 = vld [vmem:[#allocation9 + $0x680] sm:$0xff]
          %v2245 = vld [vmem:[#allocation9 + $0x688] sm:$0xff]
          %v2246 = vld [vmem:[#allocation9 + $0x690] sm:$0xff]
          %v2247 = vld [vmem:[#allocation9 + $0x698] sm:$0xff]
          %v2248 = vld [vmem:[#allocation9 + $0x6a0] sm:$0xff]
          %v2249 = vld [vmem:[#allocation9 + $0x6a8] sm:$0xff]
          %v2250 = vld [vmem:[#allocation9 + $0x6b0] sm:$0xff]
          %v2251 = vld [vmem:[#allocation9 + $0x6b8] sm:$0xff]
          %v2252 = vld [vmem:[#allocation9 + $0x6c0] sm:$0xff]
          %v2253 = vld [vmem:[#allocation9 + $0x6c8] sm:$0xff]
          %v2254 = vld [vmem:[#allocation9 + $0x6d0] sm:$0xff]
          %v2255 = vld [vmem:[#allocation9 + $0x6d8] sm:$0xff]
          %v2256 = vld [vmem:[#allocation9 + $0x6e0] sm:$0xff]
          %v2257 = vld [vmem:[#allocation9 + $0x6e8] sm:$0xff]
          %v2258 = vld [vmem:[#allocation9 + $0x6f0] sm:$0xff]
          %v2259 = vld [vmem:[#allocation9 + $0x6f8] sm:$0xff]
          %v2260 = vld [vmem:[#allocation9 + $0x700] sm:$0xff]
          %v2261 = vld [vmem:[#allocation9 + $0x708] sm:$0xff]
          %v2262 = vld [vmem:[#allocation9 + $0x710] sm:$0xff]
          %v2263 = vld [vmem:[#allocation9 + $0x718] sm:$0xff]
          %v2264 = vld [vmem:[#allocation9 + $0x720] sm:$0xff]
          %v2265 = vld [vmem:[#allocation9 + $0x728] sm:$0xff]
          %v2266 = vld [vmem:[#allocation9 + $0x730] sm:$0xff]
          %v2267 = vld [vmem:[#allocation9 + $0x738] sm:$0xff]
          %v2268 = vld [vmem:[#allocation9 + $0x740] sm:$0xff]
          %v2269 = vld [vmem:[#allocation9 + $0x748] sm:$0xff]
          %v2270 = vld [vmem:[#allocation9 + $0x750] sm:$0xff]
          %v2271 = vld [vmem:[#allocation9 + $0x758] sm:$0xff]
          %v2272 = vld [vmem:[#allocation9 + $0x760] sm:$0xff]
          %v2273 = vld [vmem:[#allocation9 + $0x768] sm:$0xff]
          %v2274 = vld [vmem:[#allocation9 + $0x770] sm:$0xff]
          %v2275 = vld [vmem:[#allocation9 + $0x778] sm:$0xff]
          %v2276 = vld [vmem:[#allocation9 + $0x780] sm:$0xff]
          %v2277 = vld [vmem:[#allocation9 + $0x788] sm:$0xff]
          %v2278 = vld [vmem:[#allocation9 + $0x790] sm:$0xff]
          %v2279 = vld [vmem:[#allocation9 + $0x798] sm:$0xff]
          %v2280 = vld [vmem:[#allocation9 + $0x7a0] sm:$0xff]
          %v2281 = vld [vmem:[#allocation9 + $0x7a8] sm:$0xff]
          %v2282 = vld [vmem:[#allocation9 + $0x7b0] sm:$0xff]
          %v2283 = vld [vmem:[#allocation9 + $0x7b8] sm:$0xff]
          %v2284 = vld [vmem:[#allocation9 + $0x7c0] sm:$0xff]
          %v2285 = vld [vmem:[#allocation9 + $0x7c8] sm:$0xff]
          %v2286 = vld [vmem:[#allocation9 + $0x7d0] sm:$0xff]
          %v2287 = vld [vmem:[#allocation9 + $0x7d8] sm:$0xff]
          %v2288 = vld [vmem:[#allocation9 + $0x7e0] sm:$0xff]
          %v2289 = vld [vmem:[#allocation9 + $0x7e8] sm:$0xff]
          %v2290 = vld [vmem:[#allocation9 + $0x7f0] sm:$0xff]
          %v2291 = vld [vmem:[#allocation9 + $0x7f8] sm:$0xff]
          %v2292 = vld [vmem:[#allocation9 + $0x800] sm:$0xff]
          %v2293 = vld [vmem:[#allocation9 + $0x808] sm:$0xff]
          %v2294 = vld [vmem:[#allocation9 + $0x810] sm:$0xff]
          %v2295 = vld [vmem:[#allocation9 + $0x818] sm:$0xff]
          %v2296 = vld [vmem:[#allocation9 + $0x820] sm:$0xff]
          %v2297 = vld [vmem:[#allocation9 + $0x828] sm:$0xff]
          %v2298 = vld [vmem:[#allocation9 + $0x830] sm:$0xff]
          %v2299 = vld [vmem:[#allocation9 + $0x838] sm:$0xff]
          %v2300 = vld [vmem:[#allocation9 + $0x840] sm:$0xff]
          %v2301 = vld [vmem:[#allocation9 + $0x848] sm:$0xff]
          %v2302 = vld [vmem:[#allocation9 + $0x850] sm:$0xff]
          %v2303 = vld [vmem:[#allocation9 + $0x858] sm:$0xff]
          %v2304 = vld [vmem:[#allocation9 + $0x860] sm:$0xff]
          %v2305 = vld [vmem:[#allocation9 + $0x868] sm:$0xff]
          %v2306 = vld [vmem:[#allocation9 + $0x870] sm:$0xff]
          %v2307 = vld [vmem:[#allocation9 + $0x878] sm:$0xff]
          %v2308 = vld [vmem:[#allocation9 + $0x880] sm:$0xff]
          %v2309 = vld [vmem:[#allocation9 + $0x888] sm:$0xff]
          %v2310 = vld [vmem:[#allocation9 + $0x890] sm:$0xff]
          %v2311 = vld [vmem:[#allocation9 + $0x898] sm:$0xff]
          %v2312 = vld [vmem:[#allocation9 + $0x8a0] sm:$0xff]
          %v2313 = vld [vmem:[#allocation9 + $0x8a8] sm:$0xff]
          %v2314 = vld [vmem:[#allocation9 + $0x8b0] sm:$0xff]
          %v2315 = vld [vmem:[#allocation9 + $0x8b8] sm:$0xff]
          %v2316 = vld [vmem:[#allocation9 + $0x8c0] sm:$0xff]
          %v2317 = vld [vmem:[#allocation9 + $0x8c8] sm:$0xff]
          %v2318 = vld [vmem:[#allocation9 + $0x8d0] sm:$0xff]
          %v2319 = vld [vmem:[#allocation9 + $0x8d8] sm:$0xff]
          %v2320 = vld [vmem:[#allocation9 + $0x8e0] sm:$0xff]
          %v2321 = vld [vmem:[#allocation9 + $0x8e8] sm:$0xff]
          %v2322 = vld [vmem:[#allocation9 + $0x8f0] sm:$0xff]
          %v2323 = vld [vmem:[#allocation9 + $0x8f8] sm:$0xff]
          %v2324 = vld [vmem:[#allocation9 + $0x900] sm:$0xff]
          %v2325 = vld [vmem:[#allocation9 + $0x908] sm:$0xff]
          %v2326 = vld [vmem:[#allocation9 + $0x910] sm:$0xff]
          %v2327 = vld [vmem:[#allocation9 + $0x918] sm:$0xff]
          %v2328 = vld [vmem:[#allocation9 + $0x920] sm:$0xff]
          %v2329 = vld [vmem:[#allocation9 + $0x928] sm:$0xff]
          %v2330 = vld [vmem:[#allocation9 + $0x930] sm:$0xff]
          %v2331 = vld [vmem:[#allocation9 + $0x938] sm:$0xff]
          %v2332 = vld [vmem:[#allocation9 + $0x940] sm:$0xff]
          %v2333 = vld [vmem:[#allocation9 + $0x948] sm:$0xff]
          %v2334 = vld [vmem:[#allocation9 + $0x950] sm:$0xff]
          %v2335 = vld [vmem:[#allocation9 + $0x958] sm:$0xff]
          %v2336 = vld [vmem:[#allocation9 + $0x960] sm:$0xff]
          %v2337 = vld [vmem:[#allocation9 + $0x968] sm:$0xff]
          %v2338 = vld [vmem:[#allocation9 + $0x970] sm:$0xff]
          %v2339 = vld [vmem:[#allocation9 + $0x978] sm:$0xff]
          %v2340 = vld [vmem:[#allocation9 + $0x980] sm:$0xff]
          %v2341 = vld [vmem:[#allocation9 + $0x988] sm:$0xff]
          %v2342 = vld [vmem:[#allocation9 + $0x990] sm:$0xff]
          %v2343 = vld [vmem:[#allocation9 + $0x998] sm:$0xff]
          %v2344 = vld [vmem:[#allocation9 + $0x9a0] sm:$0xff]
          %v2345 = vld [vmem:[#allocation9 + $0x9a8] sm:$0xff]
          %v2346 = vld [vmem:[#allocation9 + $0x9b0] sm:$0xff]
          %v2347 = vld [vmem:[#allocation9 + $0x9b8] sm:$0xff]
          %v2348 = vld [vmem:[#allocation9 + $0x9c0] sm:$0xff]
          %v2349 = vld [vmem:[#allocation9 + $0x9c8] sm:$0xff]
          %v2350 = vld [vmem:[#allocation9 + $0x9d0] sm:$0xff]
          %v2351 = vld [vmem:[#allocation9 + $0x9d8] sm:$0xff]
          %v2352 = vld [vmem:[#allocation9 + $0x9e0] sm:$0xff]
          %v2353 = vld [vmem:[#allocation9 + $0x9e8] sm:$0xff]
          %v2354 = vld [vmem:[#allocation9 + $0x9f0] sm:$0xff]
          %v2355 = vld [vmem:[#allocation9 + $0x9f8] sm:$0xff]
          %v2356 = vld [vmem:[#allocation9 + $0xa00] sm:$0xff]
          %v2357 = vld [vmem:[#allocation9 + $0xa08] sm:$0xff]
          %v2358 = vld [vmem:[#allocation9 + $0xa10] sm:$0xff]
          %v2359 = vld [vmem:[#allocation9 + $0xa18] sm:$0xff]
          %v2360 = vld [vmem:[#allocation9 + $0xa20] sm:$0xff]
          %v2361 = vld [vmem:[#allocation9 + $0xa28] sm:$0xff]
          %v2362 = vld [vmem:[#allocation9 + $0xa30] sm:$0xff]
          %v2363 = vld [vmem:[#allocation9 + $0xa38] sm:$0xff]
          %v2364 = vld [vmem:[#allocation9 + $0xa40] sm:$0xff]
          %v2365 = vld [vmem:[#allocation9 + $0xa48] sm:$0xff]
          %v2366 = vld [vmem:[#allocation9 + $0xa50] sm:$0xff]
          %v2367 = vld [vmem:[#allocation9 + $0xa58] sm:$0xff]
          %v2368 = vld [vmem:[#allocation9 + $0xa60] sm:$0xff]
          %v2369 = vld [vmem:[#allocation9 + $0xa68] sm:$0xff]
          %v2370 = vld [vmem:[#allocation9 + $0xa70] sm:$0xff]
          %v2371 = vld [vmem:[#allocation9 + $0xa78] sm:$0xff]
          %v2372 = vld [vmem:[#allocation9 + $0xa80] sm:$0xff]
          %v2373 = vld [vmem:[#allocation9 + $0xa88] sm:$0xff]
          %v2374 = vld [vmem:[#allocation9 + $0xa90] sm:$0xff]
          %v2375 = vld [vmem:[#allocation9 + $0xa98] sm:$0xff]
          %v2376 = vld [vmem:[#allocation9 + $0xaa0] sm:$0xff]
          %v2377 = vld [vmem:[#allocation9 + $0xaa8] sm:$0xff]
          %v2378 = vld [vmem:[#allocation9 + $0xab0] sm:$0xff]
          %v2379 = vld [vmem:[#allocation9 + $0xab8] sm:$0xff]
          %v2380 = vld [vmem:[#allocation9 + $0xac0] sm:$0xff]
          %v2381 = vld [vmem:[#allocation9 + $0xac8] sm:$0xff]
          %v2382 = vld [vmem:[#allocation9 + $0xad0] sm:$0xff]
          %v2383 = vld [vmem:[#allocation9 + $0xad8] sm:$0xff]
          %v2384 = vld [vmem:[#allocation9 + $0xae0] sm:$0xff]
          %v2385 = vld [vmem:[#allocation9 + $0xae8] sm:$0xff]
          %v2386 = vld [vmem:[#allocation9 + $0xaf0] sm:$0xff]
          %v2387 = vld [vmem:[#allocation9 + $0xaf8] sm:$0xff]
          %v2388 = vld [vmem:[#allocation9 + $0xb00] sm:$0xff]
          %v2389 = vld [vmem:[#allocation9 + $0xb08] sm:$0xff]
          %v2390 = vld [vmem:[#allocation9 + $0xb10] sm:$0xff]
          %v2391 = vld [vmem:[#allocation9 + $0xb18] sm:$0xff]
          %v2392 = vld [vmem:[#allocation9 + $0xb20] sm:$0xff]
          %v2393 = vld [vmem:[#allocation9 + $0xb28] sm:$0xff]
          %v2394 = vld [vmem:[#allocation9 + $0xb30] sm:$0xff]
          %v2395 = vld [vmem:[#allocation9 + $0xb38] sm:$0xff]
          %v2396 = vld [vmem:[#allocation9 + $0xb40] sm:$0xff]
          %v2397 = vld [vmem:[#allocation9 + $0xb48] sm:$0xff]
          %v2398 = vld [vmem:[#allocation9 + $0xb50] sm:$0xff]
          %v2399 = vld [vmem:[#allocation9 + $0xb58] sm:$0xff]
          %v2400 = vld [vmem:[#allocation9 + $0xb60] sm:$0xff]
          %v2401 = vld [vmem:[#allocation9 + $0xb68] sm:$0xff]
          %v2402 = vld [vmem:[#allocation9 + $0xb70] sm:$0xff]
          %v2403 = vld [vmem:[#allocation9 + $0xb78] sm:$0xff]
          %v2404 = vld [vmem:[#allocation9 + $0xb80] sm:$0xff]
          %v2405 = vld [vmem:[#allocation9 + $0xb88] sm:$0xff]
          %v2406 = vld [vmem:[#allocation9 + $0xb90] sm:$0xff]
          %v2407 = vld [vmem:[#allocation9 + $0xb98] sm:$0xff]
          %v2408 = vld [vmem:[#allocation9 + $0xba0] sm:$0xff]
          %v2409 = vld [vmem:[#allocation9 + $0xba8] sm:$0xff]
          %v2410 = vld [vmem:[#allocation9 + $0xbb0] sm:$0xff]
          %v2411 = vld [vmem:[#allocation9 + $0xbb8] sm:$0xff]
          %v2412 = vld [vmem:[#allocation9 + $0xbc0] sm:$0xff]
          %v2413 = vld [vmem:[#allocation9 + $0xbc8] sm:$0xff]
          %v2414 = vld [vmem:[#allocation9 + $0xbd0] sm:$0xff]
          %v2415 = vld [vmem:[#allocation9 + $0xbd8] sm:$0xff]
          %v2416 = vld [vmem:[#allocation9 + $0xbe0] sm:$0xff]
          %v2417 = vld [vmem:[#allocation9 + $0xbe8] sm:$0xff]
          %v2418 = vld [vmem:[#allocation9 + $0xbf0] sm:$0xff]
          %v2419 = vld [vmem:[#allocation9 + $0xbf8] sm:$0xff]
          %v2420 = vld [vmem:[#allocation9 + $0xc00] sm:$0xff]
          %v2421 = vld [vmem:[#allocation9 + $0xc08] sm:$0xff]
          %v2422 = vld [vmem:[#allocation9 + $0xc10] sm:$0xff]
          %v2423 = vld [vmem:[#allocation9 + $0xc18] sm:$0xff]
          %v2424 = vld [vmem:[#allocation9 + $0xc20] sm:$0xff]
          %v2425 = vld [vmem:[#allocation9 + $0xc28] sm:$0xff]
          %v2426 = vld [vmem:[#allocation9 + $0xc30] sm:$0xff]
          %v2427 = vld [vmem:[#allocation9 + $0xc38] sm:$0xff]
          %v2428 = vld [vmem:[#allocation9 + $0xc40] sm:$0xff]
          %v2429 = vld [vmem:[#allocation9 + $0xc48] sm:$0xff]
          %v2430 = vld [vmem:[#allocation9 + $0xc50] sm:$0xff]
          %v2431 = vld [vmem:[#allocation9 + $0xc58] sm:$0xff]
          %v2432 = vld [vmem:[#allocation9 + $0xc60] sm:$0xff]
          %v2433 = vld [vmem:[#allocation9 + $0xc68] sm:$0xff]
          %v2434 = vld [vmem:[#allocation9 + $0xc70] sm:$0xff]
          %v2435 = vld [vmem:[#allocation9 + $0xc78] sm:$0xff]
          %v2436 = vld [vmem:[#allocation9 + $0xc80] sm:$0xff]
          %v2437 = vld [vmem:[#allocation9 + $0xc88] sm:$0xff]
          %v2438 = vld [vmem:[#allocation9 + $0xc90] sm:$0xff]
          %v2439 = vld [vmem:[#allocation9 + $0xc98] sm:$0xff]
          %v2440 = vld [vmem:[#allocation9 + $0xca0] sm:$0xff]
          %v2441 = vld [vmem:[#allocation9 + $0xca8] sm:$0xff]
          %v2442 = vld [vmem:[#allocation9 + $0xcb0] sm:$0xff]
          %v2443 = vld [vmem:[#allocation9 + $0xcb8] sm:$0xff]
          %v2444 = vld [vmem:[#allocation9 + $0xcc0] sm:$0xff]
          %v2445 = vld [vmem:[#allocation9 + $0xcc8] sm:$0xff]
          %v2446 = vld [vmem:[#allocation9 + $0xcd0] sm:$0xff]
          %v2447 = vld [vmem:[#allocation9 + $0xcd8] sm:$0xff]
          %v2448 = vld [vmem:[#allocation9 + $0xce0] sm:$0xff]
          %v2449 = vld [vmem:[#allocation9 + $0xce8] sm:$0xff]
          %v2450 = vld [vmem:[#allocation9 + $0xcf0] sm:$0xff]
          %v2451 = vld [vmem:[#allocation9 + $0xcf8] sm:$0xff]
          %v2452 = vld [vmem:[#allocation9 + $0xd00] sm:$0xff]
          %v2453 = vld [vmem:[#allocation9 + $0xd08] sm:$0xff]
          %v2454 = vld [vmem:[#allocation9 + $0xd10] sm:$0xff]
          %v2455 = vld [vmem:[#allocation9 + $0xd18] sm:$0xff]
          %v2456 = vld [vmem:[#allocation9 + $0xd20] sm:$0xff]
          %v2457 = vld [vmem:[#allocation9 + $0xd28] sm:$0xff]
          %v2458 = vld [vmem:[#allocation9 + $0xd30] sm:$0xff]
          %v2459 = vld [vmem:[#allocation9 + $0xd38] sm:$0xff]
          %v2460 = vld [vmem:[#allocation9 + $0xd40] sm:$0xff]
          %v2461 = vld [vmem:[#allocation9 + $0xd48] sm:$0xff]
          %v2462 = vld [vmem:[#allocation9 + $0xd50] sm:$0xff]
          %v2463 = vld [vmem:[#allocation9 + $0xd58] sm:$0xff]
          %v2464 = vld [vmem:[#allocation9 + $0xd60] sm:$0xff]
          %v2465 = vld [vmem:[#allocation9 + $0xd68] sm:$0xff]
          %v2466 = vld [vmem:[#allocation9 + $0xd70] sm:$0xff]
          %v2467 = vld [vmem:[#allocation9 + $0xd78] sm:$0xff]
          %v2468 = vld [vmem:[#allocation9 + $0xd80] sm:$0xff]
          %v2469 = vld [vmem:[#allocation9 + $0xd88] sm:$0xff]
          %v2470 = vld [vmem:[#allocation9 + $0xd90] sm:$0xff]
          %v2471 = vld [vmem:[#allocation9 + $0xd98] sm:$0xff]
          %v2472 = vld [vmem:[#allocation9 + $0xda0] sm:$0xff]
          %v2473 = vld [vmem:[#allocation9 + $0xda8] sm:$0xff]
          %v2474 = vld [vmem:[#allocation9 + $0xdb0] sm:$0xff]
          %v2475 = vld [vmem:[#allocation9 + $0xdb8] sm:$0xff]
          %v2476 = vld [vmem:[#allocation9 + $0xdc0] sm:$0xff]
          %v2477 = vld [vmem:[#allocation9 + $0xdc8] sm:$0xff]
          %v2478 = vld [vmem:[#allocation9 + $0xdd0] sm:$0xff]
          %v2479 = vld [vmem:[#allocation9 + $0xdd8] sm:$0xff]
          %v2480 = vld [vmem:[#allocation9 + $0xde0] sm:$0xff]
          %v2481 = vld [vmem:[#allocation9 + $0xde8] sm:$0xff]
          %v2482 = vld [vmem:[#allocation9 + $0xdf0] sm:$0xff]
          %v2483 = vld [vmem:[#allocation9 + $0xdf8] sm:$0xff]
          %v2484 = vld [vmem:[#allocation9 + $0xe00] sm:$0xff]
          %v2485 = vld [vmem:[#allocation9 + $0xe08] sm:$0xff]
          %v2486 = vld [vmem:[#allocation9 + $0xe10] sm:$0xff]
          %v2487 = vld [vmem:[#allocation9 + $0xe18] sm:$0xff]
          %v2488 = vld [vmem:[#allocation9 + $0xe20] sm:$0xff]
          %v2489 = vld [vmem:[#allocation9 + $0xe28] sm:$0xff]
          %v2490 = vld [vmem:[#allocation9 + $0xe30] sm:$0xff]
          %v2491 = vld [vmem:[#allocation9 + $0xe38] sm:$0xff]
          %v2492 = vld [vmem:[#allocation9 + $0xe40] sm:$0xff]
          %v2493 = vld [vmem:[#allocation9 + $0xe48] sm:$0xff]
          %v2494 = vld [vmem:[#allocation9 + $0xe50] sm:$0xff]
          %v2495 = vld [vmem:[#allocation9 + $0xe58] sm:$0xff]
          %v2496 = vld [vmem:[#allocation9 + $0xe60] sm:$0xff]
          %v2497 = vld [vmem:[#allocation9 + $0xe68] sm:$0xff]
          %v2498 = vld [vmem:[#allocation9 + $0xe70] sm:$0xff]
          %v2499 = vld [vmem:[#allocation9 + $0xe78] sm:$0xff]
          %v2500 = vld [vmem:[#allocation9 + $0xe80] sm:$0xff]
          %v2501 = vld [vmem:[#allocation9 + $0xe88] sm:$0xff]
          %v2502 = vld [vmem:[#allocation9 + $0xe90] sm:$0xff]
          %v2503 = vld [vmem:[#allocation9 + $0xe98] sm:$0xff]
          %v2504 = vld [vmem:[#allocation9 + $0xea0] sm:$0xff]
          %v2505 = vld [vmem:[#allocation9 + $0xea8] sm:$0xff]
          %v2506 = vld [vmem:[#allocation9 + $0xeb0] sm:$0xff]
          %v2507 = vld [vmem:[#allocation9 + $0xeb8] sm:$0xff]
          %v2508 = vld [vmem:[#allocation9 + $0xec0] sm:$0xff]
          %v2509 = vld [vmem:[#allocation9 + $0xec8] sm:$0xff]
          %v2510 = vld [vmem:[#allocation9 + $0xed0] sm:$0xff]
          %v2511 = vld [vmem:[#allocation9 + $0xed8] sm:$0xff]
          %v2512 = vld [vmem:[#allocation9 + $0xee0] sm:$0xff]
          %v2513 = vld [vmem:[#allocation9 + $0xee8] sm:$0xff]
          %v2514 = vld [vmem:[#allocation9 + $0xef0] sm:$0xff]
          %v2515 = vld [vmem:[#allocation9 + $0xef8] sm:$0xff]
          %v2516 = vld [vmem:[#allocation9 + $0xf00] sm:$0xff]
          %v2517 = vld [vmem:[#allocation9 + $0xf08] sm:$0xff]
          %v2518 = vld [vmem:[#allocation9 + $0xf10] sm:$0xff]
          %v2519 = vld [vmem:[#allocation9 + $0xf18] sm:$0xff]
          %v2520 = vld [vmem:[#allocation9 + $0xf20] sm:$0xff]
          %v2521 = vld [vmem:[#allocation9 + $0xf28] sm:$0xff]
          %v2522 = vld [vmem:[#allocation9 + $0xf30] sm:$0xff]
          %v2523 = vld [vmem:[#allocation9 + $0xf38] sm:$0xff]
          %v2524 = vld [vmem:[#allocation9 + $0xf40] sm:$0xff]
          %v2525 = vld [vmem:[#allocation9 + $0xf48] sm:$0xff]
          %v2526 = vld [vmem:[#allocation9 + $0xf50] sm:$0xff]
          %v2527 = vld [vmem:[#allocation9 + $0xf58] sm:$0xff]
          %v2528 = vld [vmem:[#allocation9 + $0xf60] sm:$0xff]
          %v2529 = vld [vmem:[#allocation9 + $0xf68] sm:$0xff]
          %v2530 = vld [vmem:[#allocation9 + $0xf70] sm:$0xff]
          %v2531 = vld [vmem:[#allocation9 + $0xf78] sm:$0xff]
          %v2532 = vld [vmem:[#allocation9 + $0xf80] sm:$0xff]
          %v2533 = vld [vmem:[#allocation9 + $0xf88] sm:$0xff]
          %v2534 = vld [vmem:[#allocation9 + $0xf90] sm:$0xff]
          %v2535 = vld [vmem:[#allocation9 + $0xf98] sm:$0xff]
          %v2536 = vld [vmem:[#allocation9 + $0xfa0] sm:$0xff]
          %v2537 = vld [vmem:[#allocation9 + $0xfa8] sm:$0xff]
          %v2538 = vld [vmem:[#allocation9 + $0xfb0] sm:$0xff]
          %v2539 = vld [vmem:[#allocation9 + $0xfb8] sm:$0xff]
          %v2540 = vld [vmem:[#allocation9 + $0xfc0] sm:$0xff]
          %v2541 = vld [vmem:[#allocation9 + $0xfc8] sm:$0xff]
          %v2542 = vld [vmem:[#allocation9 + $0xfd0] sm:$0xff]
          %v2543 = vld [vmem:[#allocation9 + $0xfd8] sm:$0xff]
          %v2544 = vld [vmem:[#allocation9 + $0xfe0] sm:$0xff]
          %v2545 = vld [vmem:[#allocation9 + $0xfe8] sm:$0xff]
          %v2546 = vld [vmem:[#allocation9 + $0xff0] sm:$0xff]
          %v2547 = vld [vmem:[#allocation9 + $0xff8] sm:$0xff]
          %v2548 = vld [vmem:[#allocation9 + $0x1000] sm:$0xff]
          %v2549 = vld [vmem:[#allocation9 + $0x1008] sm:$0xff]
          %v2550 = vld [vmem:[#allocation9 + $0x1010] sm:$0xff]
          %v2551 = vld [vmem:[#allocation9 + $0x1018] sm:$0xff]
          %v2552 = vld [vmem:[#allocation9 + $0x1020] sm:$0xff]
          %v2553 = vld [vmem:[#allocation9 + $0x1028] sm:$0xff]
          %v2554 = vld [vmem:[#allocation9 + $0x1030] sm:$0xff]
          %v2555 = vld [vmem:[#allocation9 + $0x1038] sm:$0xff]
          %v2556 = vld [vmem:[#allocation9 + $0x1040] sm:$0xff]
          %v2557 = vld [vmem:[#allocation9 + $0x1048] sm:$0xff]
          %v2558 = vld [vmem:[#allocation9 + $0x1050] sm:$0xff]
          %v2559 = vld [vmem:[#allocation9 + $0x1058] sm:$0xff]
          %v2560 = vld [vmem:[#allocation9 + $0x1060] sm:$0xff]
          %v2561 = vld [vmem:[#allocation9 + $0x1068] sm:$0xff]
          %v2562 = vld [vmem:[#allocation9 + $0x1070] sm:$0xff]
          %v2563 = vld [vmem:[#allocation9 + $0x1078] sm:$0xff]
          %v2564 = vld [vmem:[#allocation9 + $0x1080] sm:$0xff]
          %v2565 = vld [vmem:[#allocation9 + $0x1088] sm:$0xff]
          %v2566 = vld [vmem:[#allocation9 + $0x1090] sm:$0xff]
          %v2567 = vld [vmem:[#allocation9 + $0x1098] sm:$0xff]
          %v2568 = vld [vmem:[#allocation9 + $0x10a0] sm:$0xff]
          %v2569 = vld [vmem:[#allocation9 + $0x10a8] sm:$0xff]
          %v2570 = vld [vmem:[#allocation9 + $0x10b0] sm:$0xff]
          %v2571 = vld [vmem:[#allocation9 + $0x10b8] sm:$0xff]
          %v2572 = vld [vmem:[#allocation9 + $0x10c0] sm:$0xff]
          %v2573 = vld [vmem:[#allocation9 + $0x10c8] sm:$0xff]
          %v2574 = vld [vmem:[#allocation9 + $0x10d0] sm:$0xff]
          %v2575 = vld [vmem:[#allocation9 + $0x10d8] sm:$0xff]
          %v2576 = vld [vmem:[#allocation9 + $0x10e0] sm:$0xff]
          %v2577 = vld [vmem:[#allocation9 + $0x10e8] sm:$0xff]
          %v2578 = vld [vmem:[#allocation9 + $0x10f0] sm:$0xff]
          %v2579 = vld [vmem:[#allocation9 + $0x10f8] sm:$0xff]
          %v2580 = vld [vmem:[#allocation9 + $0x1100] sm:$0xff]
          %v2581 = vld [vmem:[#allocation9 + $0x1108] sm:$0xff]
          %v2582 = vld [vmem:[#allocation9 + $0x1110] sm:$0xff]
          %v2583 = vld [vmem:[#allocation9 + $0x1118] sm:$0xff]
          %v2584 = vld [vmem:[#allocation9 + $0x1120] sm:$0xff]
          %v2585 = vld [vmem:[#allocation9 + $0x1128] sm:$0xff]
          %v2586 = vld [vmem:[#allocation9 + $0x1130] sm:$0xff]
          %v2587 = vld [vmem:[#allocation9 + $0x1138] sm:$0xff]
          %v2588 = vld [vmem:[#allocation9 + $0x1140] sm:$0xff]
          %v2589 = vld [vmem:[#allocation9 + $0x1148] sm:$0xff]
          %v2590 = vld [vmem:[#allocation9 + $0x1150] sm:$0xff]
          %v2591 = vld [vmem:[#allocation9 + $0x1158] sm:$0xff]
          %v2592 = vld [vmem:[#allocation9 + $0x1160] sm:$0xff]
          %v2593 = vld [vmem:[#allocation9 + $0x1168] sm:$0xff]
          %v2594 = vld [vmem:[#allocation9 + $0x1170] sm:$0xff]
          %v2595 = vld [vmem:[#allocation9 + $0x1178] sm:$0xff]
          %v2596 = vld [vmem:[#allocation9 + $0x1180] sm:$0xff]
          %v2597 = vld [vmem:[#allocation9 + $0x1188] sm:$0xff]
          %v2598 = vld [vmem:[#allocation9 + $0x1190] sm:$0xff]
          %v2599 = vld [vmem:[#allocation9 + $0x1198] sm:$0xff]
          %v2600 = vld [vmem:[#allocation9 + $0x11a0] sm:$0xff]
          %v2601 = vld [vmem:[#allocation9 + $0x11a8] sm:$0xff]
          %v2602 = vld [vmem:[#allocation9 + $0x11b0] sm:$0xff]
          %v2603 = vld [vmem:[#allocation9 + $0x11b8] sm:$0xff]
          %v2604 = vld [vmem:[#allocation9 + $0x11c0] sm:$0xff]
          %v2605 = vld [vmem:[#allocation9 + $0x11c8] sm:$0xff]
          %v2606 = vld [vmem:[#allocation9 + $0x11d0] sm:$0xff]
          %v2607 = vld [vmem:[#allocation9 + $0x11d8] sm:$0xff]
          %v2608 = vld [vmem:[#allocation9 + $0x11e0] sm:$0xff]
          %v2609 = vld [vmem:[#allocation9 + $0x11e8] sm:$0xff]
          %v2610 = vld [vmem:[#allocation9 + $0x11f0] sm:$0xff]
          %v2611 = vld [vmem:[#allocation9 + $0x11f8] sm:$0xff]
          %v2612 = vld [vmem:[#allocation9 + $0x1200] sm:$0xff]
          %v2613 = vld [vmem:[#allocation9 + $0x1208] sm:$0xff]
          %v2614 = vld [vmem:[#allocation9 + $0x1210] sm:$0xff]
          %v2615 = vld [vmem:[#allocation9 + $0x1218] sm:$0xff]
          %v2616 = vld [vmem:[#allocation9 + $0x1220] sm:$0xff]
          %v2617 = vld [vmem:[#allocation9 + $0x1228] sm:$0xff]
          %v2618 = vld [vmem:[#allocation9 + $0x1230] sm:$0xff]
          %v2619 = vld [vmem:[#allocation9 + $0x1238] sm:$0xff]
          %v2620 = vld [vmem:[#allocation9 + $0x1240] sm:$0xff]
          %v2621 = vld [vmem:[#allocation9 + $0x1248] sm:$0xff]
          %v2622 = vld [vmem:[#allocation9 + $0x1250] sm:$0xff]
          %v2623 = vld [vmem:[#allocation9 + $0x1258] sm:$0xff]
          %v2624 = vld [vmem:[#allocation9 + $0x1260] sm:$0xff]
          %v2625 = vld [vmem:[#allocation9 + $0x1268] sm:$0xff]
          %v2626 = vld [vmem:[#allocation9 + $0x1270] sm:$0xff]
          %v2627 = vld [vmem:[#allocation9 + $0x1278] sm:$0xff]
          %v2628 = vld [vmem:[#allocation9 + $0x1280] sm:$0xff]
          %v2629 = vld [vmem:[#allocation9 + $0x1288] sm:$0xff]
          %v2630 = vld [vmem:[#allocation9 + $0x1290] sm:$0xff]
          %v2631 = vld [vmem:[#allocation9 + $0x1298] sm:$0xff]
          %v2632 = vld [vmem:[#allocation9 + $0x12a0] sm:$0xff]
          %v2633 = vld [vmem:[#allocation9 + $0x12a8] sm:$0xff]
          %v2634 = vld [vmem:[#allocation9 + $0x12b0] sm:$0xff]
          %v2635 = vld [vmem:[#allocation9 + $0x12b8] sm:$0xff]
          %v2636 = vld [vmem:[#allocation9 + $0x12c0] sm:$0xff]
          %v2637 = vld [vmem:[#allocation9 + $0x12c8] sm:$0xff]
          %v2638 = vld [vmem:[#allocation9 + $0x12d0] sm:$0xff]
          %v2639 = vld [vmem:[#allocation9 + $0x12d8] sm:$0xff]
          %v2640 = vld [vmem:[#allocation9 + $0x12e0] sm:$0xff]
          %v2641 = vld [vmem:[#allocation9 + $0x12e8] sm:$0xff]
          %v2642 = vld [vmem:[#allocation9 + $0x12f0] sm:$0xff]
          %v2643 = vld [vmem:[#allocation9 + $0x12f8] sm:$0xff]
          %v2644 = vld [vmem:[#allocation9 + $0x1300] sm:$0xff]
          %v2645 = vld [vmem:[#allocation9 + $0x1308] sm:$0xff]
          %v2646 = vld [vmem:[#allocation9 + $0x1310] sm:$0xff]
          %v2647 = vld [vmem:[#allocation9 + $0x1318] sm:$0xff]
          %v2648 = vld [vmem:[#allocation9 + $0x1320] sm:$0xff]
          %v2649 = vld [vmem:[#allocation9 + $0x1328] sm:$0xff]
          %v2650 = vld [vmem:[#allocation9 + $0x1330] sm:$0xff]
          %v2651 = vld [vmem:[#allocation9 + $0x1338] sm:$0xff]
          %v2652 = vld [vmem:[#allocation9 + $0x1340] sm:$0xff]
          %v2653 = vld [vmem:[#allocation9 + $0x1348] sm:$0xff]
          %v2654 = vld [vmem:[#allocation9 + $0x1350] sm:$0xff]
          %v2655 = vld [vmem:[#allocation9 + $0x1358] sm:$0xff]
          %v2656 = vld [vmem:[#allocation9 + $0x1360] sm:$0xff]
          %v2657 = vld [vmem:[#allocation9 + $0x1368] sm:$0xff]
          %v2658 = vld [vmem:[#allocation9 + $0x1370] sm:$0xff]
          %v2659 = vld [vmem:[#allocation9 + $0x1378] sm:$0xff]
          %v2660 = vld [vmem:[#allocation9 + $0x1380] sm:$0xff]
          %v2661 = vld [vmem:[#allocation9 + $0x1388] sm:$0xff]
          %v2662 = vld [vmem:[#allocation9 + $0x1390] sm:$0xff]
          %v2663 = vld [vmem:[#allocation9 + $0x1398] sm:$0xff]
          %v2664 = vld [vmem:[#allocation9 + $0x13a0] sm:$0xff]
          %v2665 = vld [vmem:[#allocation9 + $0x13a8] sm:$0xff]
          %v2666 = vld [vmem:[#allocation9 + $0x13b0] sm:$0xff]
          %v2667 = vld [vmem:[#allocation9 + $0x13b8] sm:$0xff]
          %v2668 = vld [vmem:[#allocation9 + $0x13c0] sm:$0xff]
          %v2669 = vld [vmem:[#allocation9 + $0x13c8] sm:$0xff]
          %v2670 = vld [vmem:[#allocation9 + $0x13d0] sm:$0xff]
          %v2671 = vld [vmem:[#allocation9 + $0x13d8] sm:$0xff]
          %v2672 = vld [vmem:[#allocation9 + $0x13e0] sm:$0xff]
          %v2673 = vld [vmem:[#allocation9 + $0x13e8] sm:$0xff]
          %v2674 = vld [vmem:[#allocation9 + $0x13f0] sm:$0xff]
          %v2675 = vld [vmem:[#allocation9 + $0x13f8] sm:$0xff]
          %v2676 = vld [vmem:[#allocation9 + $0x1400] sm:$0xff]
          %v2677 = vld [vmem:[#allocation9 + $0x1408] sm:$0xff]
          %v2678 = vld [vmem:[#allocation9 + $0x1410] sm:$0xff]
          %v2679 = vld [vmem:[#allocation9 + $0x1418] sm:$0xff]
          %v2680 = vld [vmem:[#allocation9 + $0x1420] sm:$0xff]
          %v2681 = vld [vmem:[#allocation9 + $0x1428] sm:$0xff]
          %v2682 = vld [vmem:[#allocation9 + $0x1430] sm:$0xff]
          %v2683 = vld [vmem:[#allocation9 + $0x1438] sm:$0xff]
          %v2684 = vld [vmem:[#allocation9 + $0x1440] sm:$0xff]
          %v2685 = vld [vmem:[#allocation9 + $0x1448] sm:$0xff]
          %v2686 = vld [vmem:[#allocation9 + $0x1450] sm:$0xff]
          %v2687 = vld [vmem:[#allocation9 + $0x1458] sm:$0xff]
          %v2688 = vld [vmem:[#allocation9 + $0x1460] sm:$0xff]
          %v2689 = vld [vmem:[#allocation9 + $0x1468] sm:$0xff]
          %v2690 = vld [vmem:[#allocation9 + $0x1470] sm:$0xff]
          %v2691 = vld [vmem:[#allocation9 + $0x1478] sm:$0xff]
          %v2692 = vld [vmem:[#allocation9 + $0x1480] sm:$0xff]
          %v2693 = vld [vmem:[#allocation9 + $0x1488] sm:$0xff]
          %v2694 = vld [vmem:[#allocation9 + $0x1490] sm:$0xff]
          %v2695 = vld [vmem:[#allocation9 + $0x1498] sm:$0xff]
          %v2696 = vld [vmem:[#allocation9 + $0x14a0] sm:$0xff]
          %v2697 = vld [vmem:[#allocation9 + $0x14a8] sm:$0xff]
          %v2698 = vld [vmem:[#allocation9 + $0x14b0] sm:$0xff]
          %v2699 = vld [vmem:[#allocation9 + $0x14b8] sm:$0xff]
          %v2700 = vld [vmem:[#allocation9 + $0x14c0] sm:$0xff]
          %v2701 = vld [vmem:[#allocation9 + $0x14c8] sm:$0xff]
          %v2702 = vld [vmem:[#allocation9 + $0x14d0] sm:$0xff]
          %v2703 = vld [vmem:[#allocation9 + $0x14d8] sm:$0xff]
          %v2704 = vld [vmem:[#allocation9 + $0x14e0] sm:$0xff]
          %v2705 = vld [vmem:[#allocation9 + $0x14e8] sm:$0xff]
          %v2706 = vld [vmem:[#allocation9 + $0x14f0] sm:$0xff]
          %v2707 = vld [vmem:[#allocation9 + $0x14f8] sm:$0xff]
          %v2708 = vld [vmem:[#allocation9 + $0x1500] sm:$0xff]
          %v2709 = vld [vmem:[#allocation9 + $0x1508] sm:$0xff]
          %v2710 = vld [vmem:[#allocation9 + $0x1510] sm:$0xff]
          %v2711 = vld [vmem:[#allocation9 + $0x1518] sm:$0xff]
          %v2712 = vld [vmem:[#allocation9 + $0x1520] sm:$0xff]
          %v2713 = vld [vmem:[#allocation9 + $0x1528] sm:$0xff]
          %v2714 = vld [vmem:[#allocation9 + $0x1530] sm:$0xff]
          %v2715 = vld [vmem:[#allocation9 + $0x1538] sm:$0xff]
          %v2716 = vld [vmem:[#allocation9 + $0x1540] sm:$0xff]
          %v2717 = vld [vmem:[#allocation9 + $0x1548] sm:$0xff]
          %v2718 = vld [vmem:[#allocation9 + $0x1550] sm:$0xff]
          %v2719 = vld [vmem:[#allocation9 + $0x1558] sm:$0xff]
          %v2720 = vld [vmem:[#allocation9 + $0x1560] sm:$0xff]
          %v2721 = vld [vmem:[#allocation9 + $0x1568] sm:$0xff]
          %v2722 = vld [vmem:[#allocation9 + $0x1570] sm:$0xff]
          %v2723 = vld [vmem:[#allocation9 + $0x1578] sm:$0xff]
          %v2724 = vld [vmem:[#allocation9 + $0x1580] sm:$0xff]
          %v2725 = vld [vmem:[#allocation9 + $0x1588] sm:$0xff]
          %v2726 = vld [vmem:[#allocation9 + $0x1590] sm:$0xff]
          %v2727 = vld [vmem:[#allocation9 + $0x1598] sm:$0xff]
          %v2728 = vld [vmem:[#allocation9 + $0x15a0] sm:$0xff]
          %v2729 = vld [vmem:[#allocation9 + $0x15a8] sm:$0xff]
          %v2730 = vld [vmem:[#allocation9 + $0x15b0] sm:$0xff]
          %v2731 = vld [vmem:[#allocation9 + $0x15b8] sm:$0xff]
          %v2732 = vld [vmem:[#allocation9 + $0x15c0] sm:$0xff]
          %v2733 = vld [vmem:[#allocation9 + $0x15c8] sm:$0xff]
          %v2734 = vld [vmem:[#allocation9 + $0x15d0] sm:$0xff]
          %v2735 = vld [vmem:[#allocation9 + $0x15d8] sm:$0xff]
          %v2736 = vld [vmem:[#allocation9 + $0x15e0] sm:$0xff]
          %v2737 = vld [vmem:[#allocation9 + $0x15e8] sm:$0xff]
          %v2738 = vld [vmem:[#allocation9 + $0x15f0] sm:$0xff]
          %v2739 = vld [vmem:[#allocation9 + $0x15f8] sm:$0xff]
          %v2740 = vld [vmem:[#allocation9 + $0x1600] sm:$0xff]
          %v2741 = vld [vmem:[#allocation9 + $0x1608] sm:$0xff]
          %v2742 = vld [vmem:[#allocation9 + $0x1610] sm:$0xff]
          %v2743 = vld [vmem:[#allocation9 + $0x1618] sm:$0xff]
          %v2744 = vld [vmem:[#allocation9 + $0x1620] sm:$0xff]
          %v2745 = vld [vmem:[#allocation9 + $0x1628] sm:$0xff]
          %v2746 = vld [vmem:[#allocation9 + $0x1630] sm:$0xff]
          %v2747 = vld [vmem:[#allocation9 + $0x1638] sm:$0xff]
          %v2748 = vld [vmem:[#allocation9 + $0x1640] sm:$0xff]
          %v2749 = vld [vmem:[#allocation9 + $0x1648] sm:$0xff]
          %v2750 = vld [vmem:[#allocation9 + $0x1650] sm:$0xff]
          %v2751 = vld [vmem:[#allocation9 + $0x1658] sm:$0xff]
          %v2752 = vld [vmem:[#allocation9 + $0x1660] sm:$0xff]
          %v2753 = vld [vmem:[#allocation9 + $0x1668] sm:$0xff]
          %v2754 = vld [vmem:[#allocation9 + $0x1670] sm:$0xff]
          %v2755 = vld [vmem:[#allocation9 + $0x1678] sm:$0xff]
          %v2756 = vld [vmem:[#allocation9 + $0x1680] sm:$0xff]
          %v2757 = vld [vmem:[#allocation9 + $0x1688] sm:$0xff]
          %v2758 = vld [vmem:[#allocation9 + $0x1690] sm:$0xff]
          %v2759 = vld [vmem:[#allocation9 + $0x1698] sm:$0xff]
          %v2760 = vld [vmem:[#allocation9 + $0x16a0] sm:$0xff]
          %v2761 = vld [vmem:[#allocation9 + $0x16a8] sm:$0xff]
          %v2762 = vld [vmem:[#allocation9 + $0x16b0] sm:$0xff]
          %v2763 = vld [vmem:[#allocation9 + $0x16b8] sm:$0xff]
          %v2764 = vld [vmem:[#allocation9 + $0x16c0] sm:$0xff]
          %v2765 = vld [vmem:[#allocation9 + $0x16c8] sm:$0xff]
          %v2766 = vld [vmem:[#allocation9 + $0x16d0] sm:$0xff]
          %v2767 = vld [vmem:[#allocation9 + $0x16d8] sm:$0xff]
          %v2768 = vld [vmem:[#allocation9 + $0x16e0] sm:$0xff]
          %v2769 = vld [vmem:[#allocation9 + $0x16e8] sm:$0xff]
          %v2770 = vld [vmem:[#allocation9 + $0x16f0] sm:$0xff]
          %v2771 = vld [vmem:[#allocation9 + $0x16f8] sm:$0xff]
          %v2772 = vld [vmem:[#allocation9 + $0x1700] sm:$0xff]
          %v2773 = vld [vmem:[#allocation9 + $0x1708] sm:$0xff]
          %v2774 = vld [vmem:[#allocation9 + $0x1710] sm:$0xff]
          %v2775 = vld [vmem:[#allocation9 + $0x1718] sm:$0xff]
          %v2776 = vld [vmem:[#allocation9 + $0x1720] sm:$0xff]
          %v2777 = vld [vmem:[#allocation9 + $0x1728] sm:$0xff]
          %v2778 = vld [vmem:[#allocation9 + $0x1730] sm:$0xff]
          %v2779 = vld [vmem:[#allocation9 + $0x1738] sm:$0xff]
          %v2780 = vld [vmem:[#allocation9 + $0x1740] sm:$0xff]
          %v2781 = vld [vmem:[#allocation9 + $0x1748] sm:$0xff]
          %v2782 = vld [vmem:[#allocation9 + $0x1750] sm:$0xff]
          %v2783 = vld [vmem:[#allocation9 + $0x1758] sm:$0xff]
          %v2784 = vld [vmem:[#allocation9 + $0x1760] sm:$0xff]
          %v2785 = vld [vmem:[#allocation9 + $0x1768] sm:$0xff]
          %v2786 = vld [vmem:[#allocation9 + $0x1770] sm:$0xff]
          %v2787 = vld [vmem:[#allocation9 + $0x1778] sm:$0xff]
          %v2788 = vld [vmem:[#allocation9 + $0x1780] sm:$0xff]
          %v2789 = vld [vmem:[#allocation9 + $0x1788] sm:$0xff]
          %v2790 = vld [vmem:[#allocation9 + $0x1790] sm:$0xff]
          %v2791 = vld [vmem:[#allocation9 + $0x1798] sm:$0xff]
          %v2792 = vld [vmem:[#allocation9 + $0x17a0] sm:$0xff]
          %v2793 = vld [vmem:[#allocation9 + $0x17a8] sm:$0xff]
          %v2794 = vld [vmem:[#allocation9 + $0x17b0] sm:$0xff]
          %v2795 = vld [vmem:[#allocation9 + $0x17b8] sm:$0xff]
          %v2796 = vld [vmem:[#allocation9 + $0x17c0] sm:$0xff]
          %v2797 = vld [vmem:[#allocation9 + $0x17c8] sm:$0xff]
          %v2798 = vld [vmem:[#allocation9 + $0x17d0] sm:$0xff]
          %v2799 = vld [vmem:[#allocation9 + $0x17d8] sm:$0xff]
          %v2800 = vld [vmem:[#allocation9 + $0x17e0] sm:$0xff]
          %v2801 = vld [vmem:[#allocation9 + $0x17e8] sm:$0xff]
          %v2802 = vld [vmem:[#allocation9 + $0x17f0] sm:$0xff]
          %v2803 = vld [vmem:[#allocation9 + $0x17f8] sm:$0xff]
          %v2804 = vld [vmem:[#allocation12] sm:$0xff]
          %v2805 = vld [vmem:[#allocation12 + $0x8] sm:$0xf]
          %v2808 = vperm.slane %v2804, 0
          %v2809 = vperm.slane %v2804, 1
          %v2810 = vperm.slane %v2804, 2
          %v2811 = vperm.slane %v2804, 3
          %v2812 = vperm.slane %v2804, 4
          %v2813 = vperm.slane %v2804, 5
          %v2814 = vperm.slane %v2804, 6
          %v2815 = vperm.slane %v2804, 7
          %v2816 = vperm.slane %v2805, 0
          %v2817 = vperm.slane %v2805, 1
          %v2818 = vperm.slane %v2805, 2
          %v2819 = vperm.slane %v2805, 3
          %2832 = vmatpush.msra.mxu0 %v2216
          %2833 = vmatpush.msra.mxu0 %v2204
          %2834 = vmatpush.msra.mxu0 %v2192
          %2835 = vmatpush.msra.mxu0 %v2180
          %2836 = vmatpush.msra.mxu0 %v2168
          %2837 = vmatpush.msra.mxu0 %v2156
          %2838 = vmatpush.msra.mxu0 %v2144
          %2839 = vmatpush.msra.mxu0 %v2132
          %2840 = vmatpush.msra.mxu0 %v2120
          %2841 = vmatpush.msra.mxu0 %v2108
          %2842 = vmatpush.msra.mxu0 %v2096
          %2843 = vmatpush.msra.mxu0 %v2084
          %2844 = vmatpush.msra.mxu0 %v2072
          %2845 = vmatpush.msra.mxu0 %v2060
          %2846 = vmatpush.msra.mxu0 %v2048
          %2847 = vmatpush.msra.mxu0 %v2036
          %2848 = vmatmul.f32.gmra.mxu0 %v2032
          %v2849 = vpop.f32.mrf.mxu0
          %v2850 = vadd.f32 %v2808, %v2849
          %2851 = vdwg.mxu0
          %2852 = vmatpush.msra.mxu0 %v2408
          %2853 = vmatpush.msra.mxu0 %v2396
          %2854 = vmatpush.msra.mxu0 %v2384
          %2855 = vmatpush.msra.mxu0 %v2372
          %2856 = vmatpush.msra.mxu0 %v2360
          %2857 = vmatpush.msra.mxu0 %v2348
          %2858 = vmatpush.msra.mxu0 %v2336
          %2859 = vmatpush.msra.mxu0 %v2324
          %2860 = vmatpush.msra.mxu0 %v2312
          %2861 = vmatpush.msra.mxu0 %v2300
          %2862 = vmatpush.msra.mxu0 %v2288
          %2863 = vmatpush.msra.mxu0 %v2276
          %2864 = vmatpush.msra.mxu0 %v2264
          %2865 = vmatpush.msra.mxu0 %v2252
          %2866 = vmatpush.msra.mxu0 %v2240
          %2867 = vmatpush.msra.mxu0 %v2228
          %2868 = vmatmul.f32.gmra.mxu0 %v2033
          %v2869 = vpop.f32.mrf.mxu0
          %v2870 = vadd.f32 %v2850, %v2869
          %2871 = vdwg.mxu0
          %2872 = vmatpush.msra.mxu0 %v2600
          %2873 = vmatpush.msra.mxu0 %v2588
          %2874 = vmatpush.msra.mxu0 %v2576
          %2875 = vmatpush.msra.mxu0 %v2564
          %2876 = vmatpush.msra.mxu0 %v2552
          %2877 = vmatpush.msra.mxu0 %v2540
          %2878 = vmatpush.msra.mxu0 %v2528
          %2879 = vmatpush.msra.mxu0 %v2516
          %2880 = vmatpush.msra.mxu0 %v2504
          %2881 = vmatpush.msra.mxu0 %v2492
          %2882 = vmatpush.msra.mxu0 %v2480
          %2883 = vmatpush.msra.mxu0 %v2468
          %2884 = vmatpush.msra.mxu0 %v2456
          %2885 = vmatpush.msra.mxu0 %v2444
          %2886 = vmatpush.msra.mxu0 %v2432
          %2887 = vmatpush.msra.mxu0 %v2420
          %2888 = vmatmul.f32.gmra.mxu0 %v2034
          %v2889 = vpop.f32.mrf.mxu0
          %v2890 = vadd.f32 %v2870, %v2889
          %2891 = vdwg.mxu0
          %2892 = vmatpush.msra.mxu0 %v2792
          %2893 = vmatpush.msra.mxu0 %v2780
          %2894 = vmatpush.msra.mxu0 %v2768
          %2895 = vmatpush.msra.mxu0 %v2756
          %2896 = vmatpush.msra.mxu0 %v2744
          %2897 = vmatpush.msra.mxu0 %v2732
          %2898 = vmatpush.msra.mxu0 %v2720
          %2899 = vmatpush.msra.mxu0 %v2708
          %2900 = vmatpush.msra.mxu0 %v2696
          %2901 = vmatpush.msra.mxu0 %v2684
          %2902 = vmatpush.msra.mxu0 %v2672
          %2903 = vmatpush.msra.mxu0 %v2660
          %2904 = vmatpush.msra.mxu0 %v2648
          %2905 = vmatpush.msra.mxu0 %v2636
          %2906 = vmatpush.msra.mxu0 %v2624
          %2907 = vmatpush.msra.mxu0 %v2612
          %2908 = vmatmul.f32.gmra.mxu0 %v2035
          %v2909 = vpop.f32.mrf.mxu0
          %v2910 = vadd.f32 %v2890, %v2909
          %2911 = vdwg.mxu0
          %2912 = vmatpush.msra.mxu0 %v2217
          %2913 = vmatpush.msra.mxu0 %v2205
          %2914 = vmatpush.msra.mxu0 %v2193
          %2915 = vmatpush.msra.mxu0 %v2181
          %2916 = vmatpush.msra.mxu0 %v2169
          %2917 = vmatpush.msra.mxu0 %v2157
          %2918 = vmatpush.msra.mxu0 %v2145
          %2919 = vmatpush.msra.mxu0 %v2133
          %2920 = vmatpush.msra.mxu0 %v2121
          %2921 = vmatpush.msra.mxu0 %v2109
          %2922 = vmatpush.msra.mxu0 %v2097
          %2923 = vmatpush.msra.mxu0 %v2085
          %2924 = vmatpush.msra.mxu0 %v2073
          %2925 = vmatpush.msra.mxu0 %v2061
          %2926 = vmatpush.msra.mxu0 %v2049
          %2927 = vmatpush.msra.mxu0 %v2037
          %2928 = vmatmul.f32.gmra.mxu0 %v2032
          %v2929 = vpop.f32.mrf.mxu0
          %v2930 = vadd.f32 %v2809, %v2929
          %2931 = vdwg.mxu0
          %2932 = vmatpush.msra.mxu0 %v2409
          %2933 = vmatpush.msra.mxu0 %v2397
          %2934 = vmatpush.msra.mxu0 %v2385
          %2935 = vmatpush.msra.mxu0 %v2373
          %2936 = vmatpush.msra.mxu0 %v2361
          %2937 = vmatpush.msra.mxu0 %v2349
          %2938 = vmatpush.msra.mxu0 %v2337
          %2939 = vmatpush.msra.mxu0 %v2325
          %2940 = vmatpush.msra.mxu0 %v2313
          %2941 = vmatpush.msra.mxu0 %v2301
          %2942 = vmatpush.msra.mxu0 %v2289
          %2943 = vmatpush.msra.mxu0 %v2277
          %2944 = vmatpush.msra.mxu0 %v2265
          %2945 = vmatpush.msra.mxu0 %v2253
          %2946 = vmatpush.msra.mxu0 %v2241
          %2947 = vmatpush.msra.mxu0 %v2229
          %2948 = vmatmul.f32.gmra.mxu0 %v2033
          %v2949 = vpop.f32.mrf.mxu0
          %v2950 = vadd.f32 %v2930, %v2949
          %2951 = vdwg.mxu0
          %2952 = vmatpush.msra.mxu0 %v2601
          %2953 = vmatpush.msra.mxu0 %v2589
          %2954 = vmatpush.msra.mxu0 %v2577
          %2955 = vmatpush.msra.mxu0 %v2565
          %2956 = vmatpush.msra.mxu0 %v2553
          %2957 = vmatpush.msra.mxu0 %v2541
          %2958 = vmatpush.msra.mxu0 %v2529
          %2959 = vmatpush.msra.mxu0 %v2517
          %2960 = vmatpush.msra.mxu0 %v2505
          %2961 = vmatpush.msra.mxu0 %v2493
          %2962 = vmatpush.msra.mxu0 %v2481
          %2963 = vmatpush.msra.mxu0 %v2469
          %2964 = vmatpush.msra.mxu0 %v2457
          %2965 = vmatpush.msra.mxu0 %v2445
          %2966 = vmatpush.msra.mxu0 %v2433
          %2967 = vmatpush.msra.mxu0 %v2421
          %2968 = vmatmul.f32.gmra.mxu0 %v2034
          %v2969 = vpop.f32.mrf.mxu0
          %v2970 = vadd.f32 %v2950, %v2969
          %2971 = vdwg.mxu0
          %2972 = vmatpush.msra.mxu0 %v2793
          %2973 = vmatpush.msra.mxu0 %v2781
          %2974 = vmatpush.msra.mxu0 %v2769
          %2975 = vmatpush.msra.mxu0 %v2757
          %2976 = vmatpush.msra.mxu0 %v2745
          %2977 = vmatpush.msra.mxu0 %v2733
          %2978 = vmatpush.msra.mxu0 %v2721
          %2979 = vmatpush.msra.mxu0 %v2709
          %2980 = vmatpush.msra.mxu0 %v2697
          %2981 = vmatpush.msra.mxu0 %v2685
          %2982 = vmatpush.msra.mxu0 %v2673
          %2983 = vmatpush.msra.mxu0 %v2661
          %2984 = vmatpush.msra.mxu0 %v2649
          %2985 = vmatpush.msra.mxu0 %v2637
          %2986 = vmatpush.msra.mxu0 %v2625
          %2987 = vmatpush.msra.mxu0 %v2613
          %2988 = vmatmul.f32.gmra.mxu0 %v2035
          %v2989 = vpop.f32.mrf.mxu0
          %v2990 = vadd.f32 %v2970, %v2989
          %2991 = vdwg.mxu0
          %2992 = vmatpush.msra.mxu0 %v2218
          %2993 = vmatpush.msra.mxu0 %v2206
          %2994 = vmatpush.msra.mxu0 %v2194
          %2995 = vmatpush.msra.mxu0 %v2182
          %2996 = vmatpush.msra.mxu0 %v2170
          %2997 = vmatpush.msra.mxu0 %v2158
          %2998 = vmatpush.msra.mxu0 %v2146
          %2999 = vmatpush.msra.mxu0 %v2134
          %3000 = vmatpush.msra.mxu0 %v2122
          %3001 = vmatpush.msra.mxu0 %v2110
          %3002 = vmatpush.msra.mxu0 %v2098
          %3003 = vmatpush.msra.mxu0 %v2086
          %3004 = vmatpush.msra.mxu0 %v2074
          %3005 = vmatpush.msra.mxu0 %v2062
          %3006 = vmatpush.msra.mxu0 %v2050
          %3007 = vmatpush.msra.mxu0 %v2038
          %3008 = vmatmul.f32.gmra.mxu0 %v2032
          %v3009 = vpop.f32.mrf.mxu0
          %v3010 = vadd.f32 %v2810, %v3009
          %3011 = vdwg.mxu0
          %3012 = vmatpush.msra.mxu0 %v2410
          %3013 = vmatpush.msra.mxu0 %v2398
          %3014 = vmatpush.msra.mxu0 %v2386
          %3015 = vmatpush.msra.mxu0 %v2374
          %3016 = vmatpush.msra.mxu0 %v2362
          %3017 = vmatpush.msra.mxu0 %v2350
          %3018 = vmatpush.msra.mxu0 %v2338
          %3019 = vmatpush.msra.mxu0 %v2326
          %3020 = vmatpush.msra.mxu0 %v2314
          %3021 = vmatpush.msra.mxu0 %v2302
          %3022 = vmatpush.msra.mxu0 %v2290
          %3023 = vmatpush.msra.mxu0 %v2278
          %3024 = vmatpush.msra.mxu0 %v2266
          %3025 = vmatpush.msra.mxu0 %v2254
          %3026 = vmatpush.msra.mxu0 %v2242
          %3027 = vmatpush.msra.mxu0 %v2230
          %3028 = vmatmul.f32.gmra.mxu0 %v2033
          %v3029 = vpop.f32.mrf.mxu0
          %v3030 = vadd.f32 %v3010, %v3029
          %3031 = vdwg.mxu0
          %3032 = vmatpush.msra.mxu0 %v2602
          %3033 = vmatpush.msra.mxu0 %v2590
          %3034 = vmatpush.msra.mxu0 %v2578
          %3035 = vmatpush.msra.mxu0 %v2566
          %3036 = vmatpush.msra.mxu0 %v2554
          %3037 = vmatpush.msra.mxu0 %v2542
          %3038 = vmatpush.msra.mxu0 %v2530
          %3039 = vmatpush.msra.mxu0 %v2518
          %3040 = vmatpush.msra.mxu0 %v2506
          %3041 = vmatpush.msra.mxu0 %v2494
          %3042 = vmatpush.msra.mxu0 %v2482
          %3043 = vmatpush.msra.mxu0 %v2470
          %3044 = vmatpush.msra.mxu0 %v2458
          %3045 = vmatpush.msra.mxu0 %v2446
          %3046 = vmatpush.msra.mxu0 %v2434
          %3047 = vmatpush.msra.mxu0 %v2422
          %3048 = vmatmul.f32.gmra.mxu0 %v2034
          %v3049 = vpop.f32.mrf.mxu0
          %v3050 = vadd.f32 %v3030, %v3049
          %3051 = vdwg.mxu0
          %3052 = vmatpush.msra.mxu0 %v2794
          %3053 = vmatpush.msra.mxu0 %v2782
          %3054 = vmatpush.msra.mxu0 %v2770
          %3055 = vmatpush.msra.mxu0 %v2758
          %3056 = vmatpush.msra.mxu0 %v2746
          %3057 = vmatpush.msra.mxu0 %v2734
          %3058 = vmatpush.msra.mxu0 %v2722
          %3059 = vmatpush.msra.mxu0 %v2710
          %3060 = vmatpush.msra.mxu0 %v2698
          %3061 = vmatpush.msra.mxu0 %v2686
          %3062 = vmatpush.msra.mxu0 %v2674
          %3063 = vmatpush.msra.mxu0 %v2662
          %3064 = vmatpush.msra.mxu0 %v2650
          %3065 = vmatpush.msra.mxu0 %v2638
          %3066 = vmatpush.msra.mxu0 %v2626
          %3067 = vmatpush.msra.mxu0 %v2614
          %3068 = vmatmul.f32.gmra.mxu0 %v2035
          %v3069 = vpop.f32.mrf.mxu0
          %v3070 = vadd.f32 %v3050, %v3069
          %3071 = vdwg.mxu0
          %3072 = vmatpush.msra.mxu0 %v2219
          %3073 = vmatpush.msra.mxu0 %v2207
          %3074 = vmatpush.msra.mxu0 %v2195
          %3075 = vmatpush.msra.mxu0 %v2183
          %3076 = vmatpush.msra.mxu0 %v2171
          %3077 = vmatpush.msra.mxu0 %v2159
          %3078 = vmatpush.msra.mxu0 %v2147
          %3079 = vmatpush.msra.mxu0 %v2135
          %3080 = vmatpush.msra.mxu0 %v2123
          %3081 = vmatpush.msra.mxu0 %v2111
          %3082 = vmatpush.msra.mxu0 %v2099
          %3083 = vmatpush.msra.mxu0 %v2087
          %3084 = vmatpush.msra.mxu0 %v2075
          %3085 = vmatpush.msra.mxu0 %v2063
          %3086 = vmatpush.msra.mxu0 %v2051
          %3087 = vmatpush.msra.mxu0 %v2039
          %3088 = vmatmul.f32.gmra.mxu0 %v2032
          %v3089 = vpop.f32.mrf.mxu0
          %v3090 = vadd.f32 %v2811, %v3089
          %3091 = vdwg.mxu0
          %3092 = vmatpush.msra.mxu0 %v2411
          %3093 = vmatpush.msra.mxu0 %v2399
          %3094 = vmatpush.msra.mxu0 %v2387
          %3095 = vmatpush.msra.mxu0 %v2375
          %3096 = vmatpush.msra.mxu0 %v2363
          %3097 = vmatpush.msra.mxu0 %v2351
          %3098 = vmatpush.msra.mxu0 %v2339
          %3099 = vmatpush.msra.mxu0 %v2327
          %3100 = vmatpush.msra.mxu0 %v2315
          %3101 = vmatpush.msra.mxu0 %v2303
          %3102 = vmatpush.msra.mxu0 %v2291
          %3103 = vmatpush.msra.mxu0 %v2279
          %3104 = vmatpush.msra.mxu0 %v2267
          %3105 = vmatpush.msra.mxu0 %v2255
          %3106 = vmatpush.msra.mxu0 %v2243
          %3107 = vmatpush.msra.mxu0 %v2231
          %3108 = vmatmul.f32.gmra.mxu0 %v2033
          %v3109 = vpop.f32.mrf.mxu0
          %v3110 = vadd.f32 %v3090, %v3109
          %3111 = vdwg.mxu0
          %3112 = vmatpush.msra.mxu0 %v2603
          %3113 = vmatpush.msra.mxu0 %v2591
          %3114 = vmatpush.msra.mxu0 %v2579
          %3115 = vmatpush.msra.mxu0 %v2567
          %3116 = vmatpush.msra.mxu0 %v2555
          %3117 = vmatpush.msra.mxu0 %v2543
          %3118 = vmatpush.msra.mxu0 %v2531
          %3119 = vmatpush.msra.mxu0 %v2519
          %3120 = vmatpush.msra.mxu0 %v2507
          %3121 = vmatpush.msra.mxu0 %v2495
          %3122 = vmatpush.msra.mxu0 %v2483
          %3123 = vmatpush.msra.mxu0 %v2471
          %3124 = vmatpush.msra.mxu0 %v2459
          %3125 = vmatpush.msra.mxu0 %v2447
          %3126 = vmatpush.msra.mxu0 %v2435
          %3127 = vmatpush.msra.mxu0 %v2423
          %3128 = vmatmul.f32.gmra.mxu0 %v2034
          %v3129 = vpop.f32.mrf.mxu0
          %v3130 = vadd.f32 %v3110, %v3129
          %3131 = vdwg.mxu0
          %3132 = vmatpush.msra.mxu0 %v2795
          %3133 = vmatpush.msra.mxu0 %v2783
          %3134 = vmatpush.msra.mxu0 %v2771
          %3135 = vmatpush.msra.mxu0 %v2759
          %3136 = vmatpush.msra.mxu0 %v2747
          %3137 = vmatpush.msra.mxu0 %v2735
          %3138 = vmatpush.msra.mxu0 %v2723
          %3139 = vmatpush.msra.mxu0 %v2711
          %3140 = vmatpush.msra.mxu0 %v2699
          %3141 = vmatpush.msra.mxu0 %v2687
          %3142 = vmatpush.msra.mxu0 %v2675
          %3143 = vmatpush.msra.mxu0 %v2663
          %3144 = vmatpush.msra.mxu0 %v2651
          %3145 = vmatpush.msra.mxu0 %v2639
          %3146 = vmatpush.msra.mxu0 %v2627
          %3147 = vmatpush.msra.mxu0 %v2615
          %3148 = vmatmul.f32.gmra.mxu0 %v2035
          %v3149 = vpop.f32.mrf.mxu0
          %v3150 = vadd.f32 %v3130, %v3149
          %3151 = vdwg.mxu0
          %3152 = vmatpush.msra.mxu0 %v2220
          %3153 = vmatpush.msra.mxu0 %v2208
          %3154 = vmatpush.msra.mxu0 %v2196
          %3155 = vmatpush.msra.mxu0 %v2184
          %3156 = vmatpush.msra.mxu0 %v2172
          %3157 = vmatpush.msra.mxu0 %v2160
          %3158 = vmatpush.msra.mxu0 %v2148
          %3159 = vmatpush.msra.mxu0 %v2136
          %3160 = vmatpush.msra.mxu0 %v2124
          %3161 = vmatpush.msra.mxu0 %v2112
          %3162 = vmatpush.msra.mxu0 %v2100
          %3163 = vmatpush.msra.mxu0 %v2088
          %3164 = vmatpush.msra.mxu0 %v2076
          %3165 = vmatpush.msra.mxu0 %v2064
          %3166 = vmatpush.msra.mxu0 %v2052
          %3167 = vmatpush.msra.mxu0 %v2040
          %3168 = vmatmul.f32.gmra.mxu0 %v2032
          %v3169 = vpop.f32.mrf.mxu0
          %v3170 = vadd.f32 %v2812, %v3169
          %3171 = vdwg.mxu0
          %3172 = vmatpush.msra.mxu0 %v2412
          %3173 = vmatpush.msra.mxu0 %v2400
          %3174 = vmatpush.msra.mxu0 %v2388
          %3175 = vmatpush.msra.mxu0 %v2376
          %3176 = vmatpush.msra.mxu0 %v2364
          %3177 = vmatpush.msra.mxu0 %v2352
          %3178 = vmatpush.msra.mxu0 %v2340
          %3179 = vmatpush.msra.mxu0 %v2328
          %3180 = vmatpush.msra.mxu0 %v2316
          %3181 = vmatpush.msra.mxu0 %v2304
          %3182 = vmatpush.msra.mxu0 %v2292
          %3183 = vmatpush.msra.mxu0 %v2280
          %3184 = vmatpush.msra.mxu0 %v2268
          %3185 = vmatpush.msra.mxu0 %v2256
          %3186 = vmatpush.msra.mxu0 %v2244
          %3187 = vmatpush.msra.mxu0 %v2232
          %3188 = vmatmul.f32.gmra.mxu0 %v2033
          %v3189 = vpop.f32.mrf.mxu0
          %v3190 = vadd.f32 %v3170, %v3189
          %3191 = vdwg.mxu0
          %3192 = vmatpush.msra.mxu0 %v2604
          %3193 = vmatpush.msra.mxu0 %v2592
          %3194 = vmatpush.msra.mxu0 %v2580
          %3195 = vmatpush.msra.mxu0 %v2568
          %3196 = vmatpush.msra.mxu0 %v2556
          %3197 = vmatpush.msra.mxu0 %v2544
          %3198 = vmatpush.msra.mxu0 %v2532
          %3199 = vmatpush.msra.mxu0 %v2520
          %3200 = vmatpush.msra.mxu0 %v2508
          %3201 = vmatpush.msra.mxu0 %v2496
          %3202 = vmatpush.msra.mxu0 %v2484
          %3203 = vmatpush.msra.mxu0 %v2472
          %3204 = vmatpush.msra.mxu0 %v2460
          %3205 = vmatpush.msra.mxu0 %v2448
          %3206 = vmatpush.msra.mxu0 %v2436
          %3207 = vmatpush.msra.mxu0 %v2424
          %3208 = vmatmul.f32.gmra.mxu0 %v2034
          %v3209 = vpop.f32.mrf.mxu0
          %v3210 = vadd.f32 %v3190, %v3209
          %3211 = vdwg.mxu0
          %3212 = vmatpush.msra.mxu0 %v2796
          %3213 = vmatpush.msra.mxu0 %v2784
          %3214 = vmatpush.msra.mxu0 %v2772
          %3215 = vmatpush.msra.mxu0 %v2760
          %3216 = vmatpush.msra.mxu0 %v2748
          %3217 = vmatpush.msra.mxu0 %v2736
          %3218 = vmatpush.msra.mxu0 %v2724
          %3219 = vmatpush.msra.mxu0 %v2712
          %3220 = vmatpush.msra.mxu0 %v2700
          %3221 = vmatpush.msra.mxu0 %v2688
          %3222 = vmatpush.msra.mxu0 %v2676
          %3223 = vmatpush.msra.mxu0 %v2664
          %3224 = vmatpush.msra.mxu0 %v2652
          %3225 = vmatpush.msra.mxu0 %v2640
          %3226 = vmatpush.msra.mxu0 %v2628
          %3227 = vmatpush.msra.mxu0 %v2616
          %3228 = vmatmul.f32.gmra.mxu0 %v2035
          %v3229 = vpop.f32.mrf.mxu0
          %v3230 = vadd.f32 %v3210, %v3229
          %3231 = vdwg.mxu0
          %3232 = vmatpush.msra.mxu0 %v2221
          %3233 = vmatpush.msra.mxu0 %v2209
          %3234 = vmatpush.msra.mxu0 %v2197
          %3235 = vmatpush.msra.mxu0 %v2185
          %3236 = vmatpush.msra.mxu0 %v2173
          %3237 = vmatpush.msra.mxu0 %v2161
          %3238 = vmatpush.msra.mxu0 %v2149
          %3239 = vmatpush.msra.mxu0 %v2137
          %3240 = vmatpush.msra.mxu0 %v2125
          %3241 = vmatpush.msra.mxu0 %v2113
          %3242 = vmatpush.msra.mxu0 %v2101
          %3243 = vmatpush.msra.mxu0 %v2089
          %3244 = vmatpush.msra.mxu0 %v2077
          %3245 = vmatpush.msra.mxu0 %v2065
          %3246 = vmatpush.msra.mxu0 %v2053
          %3247 = vmatpush.msra.mxu0 %v2041
          %3248 = vmatmul.f32.gmra.mxu0 %v2032
          %v3249 = vpop.f32.mrf.mxu0
          %v3250 = vadd.f32 %v2813, %v3249
          %3251 = vdwg.mxu0
          %3252 = vmatpush.msra.mxu0 %v2413
          %3253 = vmatpush.msra.mxu0 %v2401
          %3254 = vmatpush.msra.mxu0 %v2389
          %3255 = vmatpush.msra.mxu0 %v2377
          %3256 = vmatpush.msra.mxu0 %v2365
          %3257 = vmatpush.msra.mxu0 %v2353
          %3258 = vmatpush.msra.mxu0 %v2341
          %3259 = vmatpush.msra.mxu0 %v2329
          %3260 = vmatpush.msra.mxu0 %v2317
          %3261 = vmatpush.msra.mxu0 %v2305
          %3262 = vmatpush.msra.mxu0 %v2293
          %3263 = vmatpush.msra.mxu0 %v2281
          %3264 = vmatpush.msra.mxu0 %v2269
          %3265 = vmatpush.msra.mxu0 %v2257
          %3266 = vmatpush.msra.mxu0 %v2245
          %3267 = vmatpush.msra.mxu0 %v2233
          %3268 = vmatmul.f32.gmra.mxu0 %v2033
          %v3269 = vpop.f32.mrf.mxu0
          %v3270 = vadd.f32 %v3250, %v3269
          %3271 = vdwg.mxu0
          %3272 = vmatpush.msra.mxu0 %v2605
          %3273 = vmatpush.msra.mxu0 %v2593
          %3274 = vmatpush.msra.mxu0 %v2581
          %3275 = vmatpush.msra.mxu0 %v2569
          %3276 = vmatpush.msra.mxu0 %v2557
          %3277 = vmatpush.msra.mxu0 %v2545
          %3278 = vmatpush.msra.mxu0 %v2533
          %3279 = vmatpush.msra.mxu0 %v2521
          %3280 = vmatpush.msra.mxu0 %v2509
          %3281 = vmatpush.msra.mxu0 %v2497
          %3282 = vmatpush.msra.mxu0 %v2485
          %3283 = vmatpush.msra.mxu0 %v2473
          %3284 = vmatpush.msra.mxu0 %v2461
          %3285 = vmatpush.msra.mxu0 %v2449
          %3286 = vmatpush.msra.mxu0 %v2437
          %3287 = vmatpush.msra.mxu0 %v2425
          %3288 = vmatmul.f32.gmra.mxu0 %v2034
          %v3289 = vpop.f32.mrf.mxu0
          %v3290 = vadd.f32 %v3270, %v3289
          %3291 = vdwg.mxu0
          %3292 = vmatpush.msra.mxu0 %v2797
          %3293 = vmatpush.msra.mxu0 %v2785
          %3294 = vmatpush.msra.mxu0 %v2773
          %3295 = vmatpush.msra.mxu0 %v2761
          %3296 = vmatpush.msra.mxu0 %v2749
          %3297 = vmatpush.msra.mxu0 %v2737
          %3298 = vmatpush.msra.mxu0 %v2725
          %3299 = vmatpush.msra.mxu0 %v2713
          %3300 = vmatpush.msra.mxu0 %v2701
          %3301 = vmatpush.msra.mxu0 %v2689
          %3302 = vmatpush.msra.mxu0 %v2677
          %3303 = vmatpush.msra.mxu0 %v2665
          %3304 = vmatpush.msra.mxu0 %v2653
          %3305 = vmatpush.msra.mxu0 %v2641
          %3306 = vmatpush.msra.mxu0 %v2629
          %3307 = vmatpush.msra.mxu0 %v2617
          %3308 = vmatmul.f32.gmra.mxu0 %v2035
          %v3309 = vpop.f32.mrf.mxu0
          %v3310 = vadd.f32 %v3290, %v3309
          %3311 = vdwg.mxu0
          %3312 = vmatpush.msra.mxu0 %v2222
          %3313 = vmatpush.msra.mxu0 %v2210
          %3314 = vmatpush.msra.mxu0 %v2198
          %3315 = vmatpush.msra.mxu0 %v2186
          %3316 = vmatpush.msra.mxu0 %v2174
          %3317 = vmatpush.msra.mxu0 %v2162
          %3318 = vmatpush.msra.mxu0 %v2150
          %3319 = vmatpush.msra.mxu0 %v2138
          %3320 = vmatpush.msra.mxu0 %v2126
          %3321 = vmatpush.msra.mxu0 %v2114
          %3322 = vmatpush.msra.mxu0 %v2102
          %3323 = vmatpush.msra.mxu0 %v2090
          %3324 = vmatpush.msra.mxu0 %v2078
          %3325 = vmatpush.msra.mxu0 %v2066
          %3326 = vmatpush.msra.mxu0 %v2054
          %3327 = vmatpush.msra.mxu0 %v2042
          %3328 = vmatmul.f32.gmra.mxu0 %v2032
          %v3329 = vpop.f32.mrf.mxu0
          %v3330 = vadd.f32 %v2814, %v3329
          %3331 = vdwg.mxu0
          %3332 = vmatpush.msra.mxu0 %v2414
          %3333 = vmatpush.msra.mxu0 %v2402
          %3334 = vmatpush.msra.mxu0 %v2390
          %3335 = vmatpush.msra.mxu0 %v2378
          %3336 = vmatpush.msra.mxu0 %v2366
          %3337 = vmatpush.msra.mxu0 %v2354
          %3338 = vmatpush.msra.mxu0 %v2342
          %3339 = vmatpush.msra.mxu0 %v2330
          %3340 = vmatpush.msra.mxu0 %v2318
          %3341 = vmatpush.msra.mxu0 %v2306
          %3342 = vmatpush.msra.mxu0 %v2294
          %3343 = vmatpush.msra.mxu0 %v2282
          %3344 = vmatpush.msra.mxu0 %v2270
          %3345 = vmatpush.msra.mxu0 %v2258
          %3346 = vmatpush.msra.mxu0 %v2246
          %3347 = vmatpush.msra.mxu0 %v2234
          %3348 = vmatmul.f32.gmra.mxu0 %v2033
          %v3349 = vpop.f32.mrf.mxu0
          %v3350 = vadd.f32 %v3330, %v3349
          %3351 = vdwg.mxu0
          %3352 = vmatpush.msra.mxu0 %v2606
          %3353 = vmatpush.msra.mxu0 %v2594
          %3354 = vmatpush.msra.mxu0 %v2582
          %3355 = vmatpush.msra.mxu0 %v2570
          %3356 = vmatpush.msra.mxu0 %v2558
          %3357 = vmatpush.msra.mxu0 %v2546
          %3358 = vmatpush.msra.mxu0 %v2534
          %3359 = vmatpush.msra.mxu0 %v2522
          %3360 = vmatpush.msra.mxu0 %v2510
          %3361 = vmatpush.msra.mxu0 %v2498
          %3362 = vmatpush.msra.mxu0 %v2486
          %3363 = vmatpush.msra.mxu0 %v2474
          %3364 = vmatpush.msra.mxu0 %v2462
          %3365 = vmatpush.msra.mxu0 %v2450
          %3366 = vmatpush.msra.mxu0 %v2438
          %3367 = vmatpush.msra.mxu0 %v2426
          %3368 = vmatmul.f32.gmra.mxu0 %v2034
          %v3369 = vpop.f32.mrf.mxu0
          %v3370 = vadd.f32 %v3350, %v3369
          %3371 = vdwg.mxu0
          %3372 = vmatpush.msra.mxu0 %v2798
          %3373 = vmatpush.msra.mxu0 %v2786
          %3374 = vmatpush.msra.mxu0 %v2774
          %3375 = vmatpush.msra.mxu0 %v2762
          %3376 = vmatpush.msra.mxu0 %v2750
          %3377 = vmatpush.msra.mxu0 %v2738
          %3378 = vmatpush.msra.mxu0 %v2726
          %3379 = vmatpush.msra.mxu0 %v2714
          %3380 = vmatpush.msra.mxu0 %v2702
          %3381 = vmatpush.msra.mxu0 %v2690
          %3382 = vmatpush.msra.mxu0 %v2678
          %3383 = vmatpush.msra.mxu0 %v2666
          %3384 = vmatpush.msra.mxu0 %v2654
          %3385 = vmatpush.msra.mxu0 %v2642
          %3386 = vmatpush.msra.mxu0 %v2630
          %3387 = vmatpush.msra.mxu0 %v2618
          %3388 = vmatmul.f32.gmra.mxu0 %v2035
          %v3389 = vpop.f32.mrf.mxu0
          %v3390 = vadd.f32 %v3370, %v3389
          %3391 = vdwg.mxu0
          %3392 = vmatpush.msra.mxu0 %v2223
          %3393 = vmatpush.msra.mxu0 %v2211
          %3394 = vmatpush.msra.mxu0 %v2199
          %3395 = vmatpush.msra.mxu0 %v2187
          %3396 = vmatpush.msra.mxu0 %v2175
          %3397 = vmatpush.msra.mxu0 %v2163
          %3398 = vmatpush.msra.mxu0 %v2151
          %3399 = vmatpush.msra.mxu0 %v2139
          %3400 = vmatpush.msra.mxu0 %v2127
          %3401 = vmatpush.msra.mxu0 %v2115
          %3402 = vmatpush.msra.mxu0 %v2103
          %3403 = vmatpush.msra.mxu0 %v2091
          %3404 = vmatpush.msra.mxu0 %v2079
          %3405 = vmatpush.msra.mxu0 %v2067
          %3406 = vmatpush.msra.mxu0 %v2055
          %3407 = vmatpush.msra.mxu0 %v2043
          %3408 = vmatmul.f32.gmra.mxu0 %v2032
          %v3409 = vpop.f32.mrf.mxu0
          %v3410 = vadd.f32 %v2815, %v3409
          %3411 = vdwg.mxu0
          %3412 = vmatpush.msra.mxu0 %v2415
          %3413 = vmatpush.msra.mxu0 %v2403
          %3414 = vmatpush.msra.mxu0 %v2391
          %3415 = vmatpush.msra.mxu0 %v2379
          %3416 = vmatpush.msra.mxu0 %v2367
          %3417 = vmatpush.msra.mxu0 %v2355
          %3418 = vmatpush.msra.mxu0 %v2343
          %3419 = vmatpush.msra.mxu0 %v2331
          %3420 = vmatpush.msra.mxu0 %v2319
          %3421 = vmatpush.msra.mxu0 %v2307
          %3422 = vmatpush.msra.mxu0 %v2295
          %3423 = vmatpush.msra.mxu0 %v2283
          %3424 = vmatpush.msra.mxu0 %v2271
          %3425 = vmatpush.msra.mxu0 %v2259
          %3426 = vmatpush.msra.mxu0 %v2247
          %3427 = vmatpush.msra.mxu0 %v2235
          %3428 = vmatmul.f32.gmra.mxu0 %v2033
          %v3429 = vpop.f32.mrf.mxu0
          %v3430 = vadd.f32 %v3410, %v3429
          %3431 = vdwg.mxu0
          %3432 = vmatpush.msra.mxu0 %v2607
          %3433 = vmatpush.msra.mxu0 %v2595
          %3434 = vmatpush.msra.mxu0 %v2583
          %3435 = vmatpush.msra.mxu0 %v2571
          %3436 = vmatpush.msra.mxu0 %v2559
          %3437 = vmatpush.msra.mxu0 %v2547
          %3438 = vmatpush.msra.mxu0 %v2535
          %3439 = vmatpush.msra.mxu0 %v2523
          %3440 = vmatpush.msra.mxu0 %v2511
          %3441 = vmatpush.msra.mxu0 %v2499
          %3442 = vmatpush.msra.mxu0 %v2487
          %3443 = vmatpush.msra.mxu0 %v2475
          %3444 = vmatpush.msra.mxu0 %v2463
          %3445 = vmatpush.msra.mxu0 %v2451
          %3446 = vmatpush.msra.mxu0 %v2439
          %3447 = vmatpush.msra.mxu0 %v2427
          %3448 = vmatmul.f32.gmra.mxu0 %v2034
          %v3449 = vpop.f32.mrf.mxu0
          %v3450 = vadd.f32 %v3430, %v3449
          %3451 = vdwg.mxu0
          %3452 = vmatpush.msra.mxu0 %v2799
          %3453 = vmatpush.msra.mxu0 %v2787
          %3454 = vmatpush.msra.mxu0 %v2775
          %3455 = vmatpush.msra.mxu0 %v2763
          %3456 = vmatpush.msra.mxu0 %v2751
          %3457 = vmatpush.msra.mxu0 %v2739
          %3458 = vmatpush.msra.mxu0 %v2727
          %3459 = vmatpush.msra.mxu0 %v2715
          %3460 = vmatpush.msra.mxu0 %v2703
          %3461 = vmatpush.msra.mxu0 %v2691
          %3462 = vmatpush.msra.mxu0 %v2679
          %3463 = vmatpush.msra.mxu0 %v2667
          %3464 = vmatpush.msra.mxu0 %v2655
          %3465 = vmatpush.msra.mxu0 %v2643
          %3466 = vmatpush.msra.mxu0 %v2631
          %3467 = vmatpush.msra.mxu0 %v2619
          %3468 = vmatmul.f32.gmra.mxu0 %v2035
          %v3469 = vpop.f32.mrf.mxu0
          %v3470 = vadd.f32 %v3450, %v3469
          %3471 = vdwg.mxu0
          %3472 = vmatpush.msra.mxu0 %v2224
          %3473 = vmatpush.msra.mxu0 %v2212
          %3474 = vmatpush.msra.mxu0 %v2200
          %3475 = vmatpush.msra.mxu0 %v2188
          %3476 = vmatpush.msra.mxu0 %v2176
          %3477 = vmatpush.msra.mxu0 %v2164
          %3478 = vmatpush.msra.mxu0 %v2152
          %3479 = vmatpush.msra.mxu0 %v2140
          %3480 = vmatpush.msra.mxu0 %v2128
          %3481 = vmatpush.msra.mxu0 %v2116
          %3482 = vmatpush.msra.mxu0 %v2104
          %3483 = vmatpush.msra.mxu0 %v2092
          %3484 = vmatpush.msra.mxu0 %v2080
          %3485 = vmatpush.msra.mxu0 %v2068
          %3486 = vmatpush.msra.mxu0 %v2056
          %3487 = vmatpush.msra.mxu0 %v2044
          %3488 = vmatmul.f32.gmra.mxu0 %v2032
          %v3489 = vpop.f32.mrf.mxu0
          %v3490 = vadd.f32 %v2816, %v3489
          %3491 = vdwg.mxu0
          %3492 = vmatpush.msra.mxu0 %v2416
          %3493 = vmatpush.msra.mxu0 %v2404
          %3494 = vmatpush.msra.mxu0 %v2392
          %3495 = vmatpush.msra.mxu0 %v2380
          %3496 = vmatpush.msra.mxu0 %v2368
          %3497 = vmatpush.msra.mxu0 %v2356
          %3498 = vmatpush.msra.mxu0 %v2344
          %3499 = vmatpush.msra.mxu0 %v2332
          %3500 = vmatpush.msra.mxu0 %v2320
          %3501 = vmatpush.msra.mxu0 %v2308
          %3502 = vmatpush.msra.mxu0 %v2296
          %3503 = vmatpush.msra.mxu0 %v2284
          %3504 = vmatpush.msra.mxu0 %v2272
          %3505 = vmatpush.msra.mxu0 %v2260
          %3506 = vmatpush.msra.mxu0 %v2248
          %3507 = vmatpush.msra.mxu0 %v2236
          %3508 = vmatmul.f32.gmra.mxu0 %v2033
          %v3509 = vpop.f32.mrf.mxu0
          %v3510 = vadd.f32 %v3490, %v3509
          %3511 = vdwg.mxu0
          %3512 = vmatpush.msra.mxu0 %v2608
          %3513 = vmatpush.msra.mxu0 %v2596
          %3514 = vmatpush.msra.mxu0 %v2584
          %3515 = vmatpush.msra.mxu0 %v2572
          %3516 = vmatpush.msra.mxu0 %v2560
          %3517 = vmatpush.msra.mxu0 %v2548
          %3518 = vmatpush.msra.mxu0 %v2536
          %3519 = vmatpush.msra.mxu0 %v2524
          %3520 = vmatpush.msra.mxu0 %v2512
          %3521 = vmatpush.msra.mxu0 %v2500
          %3522 = vmatpush.msra.mxu0 %v2488
          %3523 = vmatpush.msra.mxu0 %v2476
          %3524 = vmatpush.msra.mxu0 %v2464
          %3525 = vmatpush.msra.mxu0 %v2452
          %3526 = vmatpush.msra.mxu0 %v2440
          %3527 = vmatpush.msra.mxu0 %v2428
          %3528 = vmatmul.f32.gmra.mxu0 %v2034
          %v3529 = vpop.f32.mrf.mxu0
          %v3530 = vadd.f32 %v3510, %v3529
          %3531 = vdwg.mxu0
          %3532 = vmatpush.msra.mxu0 %v2800
          %3533 = vmatpush.msra.mxu0 %v2788
          %3534 = vmatpush.msra.mxu0 %v2776
          %3535 = vmatpush.msra.mxu0 %v2764
          %3536 = vmatpush.msra.mxu0 %v2752
          %3537 = vmatpush.msra.mxu0 %v2740
          %3538 = vmatpush.msra.mxu0 %v2728
          %3539 = vmatpush.msra.mxu0 %v2716
          %3540 = vmatpush.msra.mxu0 %v2704
          %3541 = vmatpush.msra.mxu0 %v2692
          %3542 = vmatpush.msra.mxu0 %v2680
          %3543 = vmatpush.msra.mxu0 %v2668
          %3544 = vmatpush.msra.mxu0 %v2656
          %3545 = vmatpush.msra.mxu0 %v2644
          %3546 = vmatpush.msra.mxu0 %v2632
          %3547 = vmatpush.msra.mxu0 %v2620
          %3548 = vmatmul.f32.gmra.mxu0 %v2035
          %v3549 = vpop.f32.mrf.mxu0
          %v3550 = vadd.f32 %v3530, %v3549
          %3551 = vdwg.mxu0
          %3552 = vmatpush.msra.mxu0 %v2225
          %3553 = vmatpush.msra.mxu0 %v2213
          %3554 = vmatpush.msra.mxu0 %v2201
          %3555 = vmatpush.msra.mxu0 %v2189
          %3556 = vmatpush.msra.mxu0 %v2177
          %3557 = vmatpush.msra.mxu0 %v2165
          %3558 = vmatpush.msra.mxu0 %v2153
          %3559 = vmatpush.msra.mxu0 %v2141
          %3560 = vmatpush.msra.mxu0 %v2129
          %3561 = vmatpush.msra.mxu0 %v2117
          %3562 = vmatpush.msra.mxu0 %v2105
          %3563 = vmatpush.msra.mxu0 %v2093
          %3564 = vmatpush.msra.mxu0 %v2081
          %3565 = vmatpush.msra.mxu0 %v2069
          %3566 = vmatpush.msra.mxu0 %v2057
          %3567 = vmatpush.msra.mxu0 %v2045
          %3568 = vmatmul.f32.gmra.mxu0 %v2032
          %v3569 = vpop.f32.mrf.mxu0
          %v3570 = vadd.f32 %v2817, %v3569
          %3571 = vdwg.mxu0
          %3572 = vmatpush.msra.mxu0 %v2417
          %3573 = vmatpush.msra.mxu0 %v2405
          %3574 = vmatpush.msra.mxu0 %v2393
          %3575 = vmatpush.msra.mxu0 %v2381
          %3576 = vmatpush.msra.mxu0 %v2369
          %3577 = vmatpush.msra.mxu0 %v2357
          %3578 = vmatpush.msra.mxu0 %v2345
          %3579 = vmatpush.msra.mxu0 %v2333
          %3580 = vmatpush.msra.mxu0 %v2321
          %3581 = vmatpush.msra.mxu0 %v2309
          %3582 = vmatpush.msra.mxu0 %v2297
          %3583 = vmatpush.msra.mxu0 %v2285
          %3584 = vmatpush.msra.mxu0 %v2273
          %3585 = vmatpush.msra.mxu0 %v2261
          %3586 = vmatpush.msra.mxu0 %v2249
          %3587 = vmatpush.msra.mxu0 %v2237
          %3588 = vmatmul.f32.gmra.mxu0 %v2033
          %v3589 = vpop.f32.mrf.mxu0
          %v3590 = vadd.f32 %v3570, %v3589
          %3591 = vdwg.mxu0
          %3592 = vmatpush.msra.mxu0 %v2609
          %3593 = vmatpush.msra.mxu0 %v2597
          %3594 = vmatpush.msra.mxu0 %v2585
          %3595 = vmatpush.msra.mxu0 %v2573
          %3596 = vmatpush.msra.mxu0 %v2561
          %3597 = vmatpush.msra.mxu0 %v2549
          %3598 = vmatpush.msra.mxu0 %v2537
          %3599 = vmatpush.msra.mxu0 %v2525
          %3600 = vmatpush.msra.mxu0 %v2513
          %3601 = vmatpush.msra.mxu0 %v2501
          %3602 = vmatpush.msra.mxu0 %v2489
          %3603 = vmatpush.msra.mxu0 %v2477
          %3604 = vmatpush.msra.mxu0 %v2465
          %3605 = vmatpush.msra.mxu0 %v2453
          %3606 = vmatpush.msra.mxu0 %v2441
          %3607 = vmatpush.msra.mxu0 %v2429
          %3608 = vmatmul.f32.gmra.mxu0 %v2034
          %v3609 = vpop.f32.mrf.mxu0
          %v3610 = vadd.f32 %v3590, %v3609
          %3611 = vdwg.mxu0
          %3612 = vmatpush.msra.mxu0 %v2801
          %3613 = vmatpush.msra.mxu0 %v2789
          %3614 = vmatpush.msra.mxu0 %v2777
          %3615 = vmatpush.msra.mxu0 %v2765
          %3616 = vmatpush.msra.mxu0 %v2753
          %3617 = vmatpush.msra.mxu0 %v2741
          %3618 = vmatpush.msra.mxu0 %v2729
          %3619 = vmatpush.msra.mxu0 %v2717
          %3620 = vmatpush.msra.mxu0 %v2705
          %3621 = vmatpush.msra.mxu0 %v2693
          %3622 = vmatpush.msra.mxu0 %v2681
          %3623 = vmatpush.msra.mxu0 %v2669
          %3624 = vmatpush.msra.mxu0 %v2657
          %3625 = vmatpush.msra.mxu0 %v2645
          %3626 = vmatpush.msra.mxu0 %v2633
          %3627 = vmatpush.msra.mxu0 %v2621
          %3628 = vmatmul.f32.gmra.mxu0 %v2035
          %v3629 = vpop.f32.mrf.mxu0
          %v3630 = vadd.f32 %v3610, %v3629
          %3631 = vdwg.mxu0
          %3632 = vmatpush.msra.mxu0 %v2226
          %3633 = vmatpush.msra.mxu0 %v2214
          %3634 = vmatpush.msra.mxu0 %v2202
          %3635 = vmatpush.msra.mxu0 %v2190
          %3636 = vmatpush.msra.mxu0 %v2178
          %3637 = vmatpush.msra.mxu0 %v2166
          %3638 = vmatpush.msra.mxu0 %v2154
          %3639 = vmatpush.msra.mxu0 %v2142
          %3640 = vmatpush.msra.mxu0 %v2130
          %3641 = vmatpush.msra.mxu0 %v2118
          %3642 = vmatpush.msra.mxu0 %v2106
          %3643 = vmatpush.msra.mxu0 %v2094
          %3644 = vmatpush.msra.mxu0 %v2082
          %3645 = vmatpush.msra.mxu0 %v2070
          %3646 = vmatpush.msra.mxu0 %v2058
          %3647 = vmatpush.msra.mxu0 %v2046
          %3648 = vmatmul.f32.gmra.mxu0 %v2032
          %v3649 = vpop.f32.mrf.mxu0
          %v3650 = vadd.f32 %v2818, %v3649
          %3651 = vdwg.mxu0
          %3652 = vmatpush.msra.mxu0 %v2418
          %3653 = vmatpush.msra.mxu0 %v2406
          %3654 = vmatpush.msra.mxu0 %v2394
          %3655 = vmatpush.msra.mxu0 %v2382
          %3656 = vmatpush.msra.mxu0 %v2370
          %3657 = vmatpush.msra.mxu0 %v2358
          %3658 = vmatpush.msra.mxu0 %v2346
          %3659 = vmatpush.msra.mxu0 %v2334
          %3660 = vmatpush.msra.mxu0 %v2322
          %3661 = vmatpush.msra.mxu0 %v2310
          %3662 = vmatpush.msra.mxu0 %v2298
          %3663 = vmatpush.msra.mxu0 %v2286
          %3664 = vmatpush.msra.mxu0 %v2274
          %3665 = vmatpush.msra.mxu0 %v2262
          %3666 = vmatpush.msra.mxu0 %v2250
          %3667 = vmatpush.msra.mxu0 %v2238
          %3668 = vmatmul.f32.gmra.mxu0 %v2033
          %v3669 = vpop.f32.mrf.mxu0
          %v3670 = vadd.f32 %v3650, %v3669
          %3671 = vdwg.mxu0
          %3672 = vmatpush.msra.mxu0 %v2610
          %3673 = vmatpush.msra.mxu0 %v2598
          %3674 = vmatpush.msra.mxu0 %v2586
          %3675 = vmatpush.msra.mxu0 %v2574
          %3676 = vmatpush.msra.mxu0 %v2562
          %3677 = vmatpush.msra.mxu0 %v2550
          %3678 = vmatpush.msra.mxu0 %v2538
          %3679 = vmatpush.msra.mxu0 %v2526
          %3680 = vmatpush.msra.mxu0 %v2514
          %3681 = vmatpush.msra.mxu0 %v2502
          %3682 = vmatpush.msra.mxu0 %v2490
          %3683 = vmatpush.msra.mxu0 %v2478
          %3684 = vmatpush.msra.mxu0 %v2466
          %3685 = vmatpush.msra.mxu0 %v2454
          %3686 = vmatpush.msra.mxu0 %v2442
          %3687 = vmatpush.msra.mxu0 %v2430
          %3688 = vmatmul.f32.gmra.mxu0 %v2034
          %v3689 = vpop.f32.mrf.mxu0
          %v3690 = vadd.f32 %v3670, %v3689
          %3691 = vdwg.mxu0
          %3692 = vmatpush.msra.mxu0 %v2802
          %3693 = vmatpush.msra.mxu0 %v2790
          %3694 = vmatpush.msra.mxu0 %v2778
          %3695 = vmatpush.msra.mxu0 %v2766
          %3696 = vmatpush.msra.mxu0 %v2754
          %3697 = vmatpush.msra.mxu0 %v2742
          %3698 = vmatpush.msra.mxu0 %v2730
          %3699 = vmatpush.msra.mxu0 %v2718
          %3700 = vmatpush.msra.mxu0 %v2706
          %3701 = vmatpush.msra.mxu0 %v2694
          %3702 = vmatpush.msra.mxu0 %v2682
          %3703 = vmatpush.msra.mxu0 %v2670
          %3704 = vmatpush.msra.mxu0 %v2658
          %3705 = vmatpush.msra.mxu0 %v2646
          %3706 = vmatpush.msra.mxu0 %v2634
          %3707 = vmatpush.msra.mxu0 %v2622
          %3708 = vmatmul.f32.gmra.mxu0 %v2035
          %v3709 = vpop.f32.mrf.mxu0
          %v3710 = vadd.f32 %v3690, %v3709
          %3711 = vdwg.mxu0
          %3712 = vmatpush.msra.mxu0 %v2227
          %3713 = vmatpush.msra.mxu0 %v2215
          %3714 = vmatpush.msra.mxu0 %v2203
          %3715 = vmatpush.msra.mxu0 %v2191
          %3716 = vmatpush.msra.mxu0 %v2179
          %3717 = vmatpush.msra.mxu0 %v2167
          %3718 = vmatpush.msra.mxu0 %v2155
          %3719 = vmatpush.msra.mxu0 %v2143
          %3720 = vmatpush.msra.mxu0 %v2131
          %3721 = vmatpush.msra.mxu0 %v2119
          %3722 = vmatpush.msra.mxu0 %v2107
          %3723 = vmatpush.msra.mxu0 %v2095
          %3724 = vmatpush.msra.mxu0 %v2083
          %3725 = vmatpush.msra.mxu0 %v2071
          %3726 = vmatpush.msra.mxu0 %v2059
          %3727 = vmatpush.msra.mxu0 %v2047
          %3728 = vmatmul.f32.gmra.mxu0 %v2032
          %v3729 = vpop.f32.mrf.mxu0
          %v3730 = vadd.f32 %v2819, %v3729
          %3731 = vdwg.mxu0
          %3732 = vmatpush.msra.mxu0 %v2419
          %3733 = vmatpush.msra.mxu0 %v2407
          %3734 = vmatpush.msra.mxu0 %v2395
          %3735 = vmatpush.msra.mxu0 %v2383
          %3736 = vmatpush.msra.mxu0 %v2371
          %3737 = vmatpush.msra.mxu0 %v2359
          %3738 = vmatpush.msra.mxu0 %v2347
          %3739 = vmatpush.msra.mxu0 %v2335
          %3740 = vmatpush.msra.mxu0 %v2323
          %3741 = vmatpush.msra.mxu0 %v2311
          %3742 = vmatpush.msra.mxu0 %v2299
          %3743 = vmatpush.msra.mxu0 %v2287
          %3744 = vmatpush.msra.mxu0 %v2275
          %3745 = vmatpush.msra.mxu0 %v2263
          %3746 = vmatpush.msra.mxu0 %v2251
          %3747 = vmatpush.msra.mxu0 %v2239
          %3748 = vmatmul.f32.gmra.mxu0 %v2033
          %v3749 = vpop.f32.mrf.mxu0
          %v3750 = vadd.f32 %v3730, %v3749
          %3751 = vdwg.mxu0
          %3752 = vmatpush.msra.mxu0 %v2611
          %3753 = vmatpush.msra.mxu0 %v2599
          %3754 = vmatpush.msra.mxu0 %v2587
          %3755 = vmatpush.msra.mxu0 %v2575
          %3756 = vmatpush.msra.mxu0 %v2563
          %3757 = vmatpush.msra.mxu0 %v2551
          %3758 = vmatpush.msra.mxu0 %v2539
          %3759 = vmatpush.msra.mxu0 %v2527
          %3760 = vmatpush.msra.mxu0 %v2515
          %3761 = vmatpush.msra.mxu0 %v2503
          %3762 = vmatpush.msra.mxu0 %v2491
          %3763 = vmatpush.msra.mxu0 %v2479
          %3764 = vmatpush.msra.mxu0 %v2467
          %3765 = vmatpush.msra.mxu0 %v2455
          %3766 = vmatpush.msra.mxu0 %v2443
          %3767 = vmatpush.msra.mxu0 %v2431
          %3768 = vmatmul.f32.gmra.mxu0 %v2034
          %v3769 = vpop.f32.mrf.mxu0
          %v3770 = vadd.f32 %v3750, %v3769
          %3771 = vdwg.mxu0
          %3772 = vmatpush.msra.mxu0 %v2803
          %3773 = vmatpush.msra.mxu0 %v2791
          %3774 = vmatpush.msra.mxu0 %v2779
          %3775 = vmatpush.msra.mxu0 %v2767
          %3776 = vmatpush.msra.mxu0 %v2755
          %3777 = vmatpush.msra.mxu0 %v2743
          %3778 = vmatpush.msra.mxu0 %v2731
          %3779 = vmatpush.msra.mxu0 %v2719
          %3780 = vmatpush.msra.mxu0 %v2707
          %3781 = vmatpush.msra.mxu0 %v2695
          %3782 = vmatpush.msra.mxu0 %v2683
          %3783 = vmatpush.msra.mxu0 %v2671
          %3784 = vmatpush.msra.mxu0 %v2659
          %3785 = vmatpush.msra.mxu0 %v2647
          %3786 = vmatpush.msra.mxu0 %v2635
          %3787 = vmatpush.msra.mxu0 %v2623
          %3788 = vmatmul.f32.gmra.mxu0 %v2035
          %v3789 = vpop.f32.mrf.mxu0
          %v3790 = vadd.f32 %v3770, %v3789
          %3791 = vdwg.mxu0
          %v3792 = vld [vmem:[#allocation11] sm:$0xff]
          %v3793 = vld [vmem:[#allocation11 + $0x8] sm:$0xff]
          %v3794 = vld [vmem:[#allocation11 + $0x10] sm:$0xff]
          %v3795 = vld [vmem:[#allocation11 + $0x18] sm:$0xff]
          %v3796 = vld [vmem:[#allocation11 + $0x20] sm:$0xff]
          %v3797 = vld [vmem:[#allocation11 + $0x28] sm:$0xff]
          %v3798 = vld [vmem:[#allocation11 + $0x30] sm:$0xff]
          %v3799 = vld [vmem:[#allocation11 + $0x38] sm:$0xff]
          %v3800 = vld [vmem:[#allocation11 + $0x40] sm:$0xff]
          %v3801 = vld [vmem:[#allocation11 + $0x48] sm:$0xff]
          %v3802 = vld [vmem:[#allocation11 + $0x50] sm:$0xff]
          %v3803 = vld [vmem:[#allocation11 + $0x58] sm:$0xff]
          %v3804 = vld [vmem:[#allocation11 + $0x60] sm:$0xff]
          %v3805 = vld [vmem:[#allocation11 + $0x68] sm:$0xff]
          %v3806 = vld [vmem:[#allocation11 + $0x70] sm:$0xff]
          %v3807 = vld [vmem:[#allocation11 + $0x78] sm:$0xff]
          %v3808 = vld [vmem:[#allocation11 + $0x80] sm:$0xff]
          %v3809 = vld [vmem:[#allocation11 + $0x88] sm:$0xff]
          %v3810 = vld [vmem:[#allocation11 + $0x90] sm:$0xff]
          %v3811 = vld [vmem:[#allocation11 + $0x98] sm:$0xff]
          %v3812 = vld [vmem:[#allocation11 + $0xa0] sm:$0xff]
          %v3813 = vld [vmem:[#allocation11 + $0xa8] sm:$0xff]
          %v3814 = vld [vmem:[#allocation11 + $0xb0] sm:$0xff]
          %v3815 = vld [vmem:[#allocation11 + $0xb8] sm:$0xff]
          %v3816 = vld [vmem:[#allocation11 + $0xc0] sm:$0xff]
          %v3817 = vld [vmem:[#allocation11 + $0xc8] sm:$0xff]
          %v3818 = vld [vmem:[#allocation11 + $0xd0] sm:$0xff]
          %v3819 = vld [vmem:[#allocation11 + $0xd8] sm:$0xff]
          %v3820 = vld [vmem:[#allocation11 + $0xe0] sm:$0xff]
          %v3821 = vld [vmem:[#allocation11 + $0xe8] sm:$0xff]
          %v3822 = vld [vmem:[#allocation11 + $0xf0] sm:$0xff]
          %v3823 = vld [vmem:[#allocation11 + $0xf8] sm:$0xff]
          %v3824 = vld [vmem:[#allocation11 + $0x100] sm:$0xff]
          %v3825 = vld [vmem:[#allocation11 + $0x108] sm:$0xff]
          %v3826 = vld [vmem:[#allocation11 + $0x110] sm:$0xff]
          %v3827 = vld [vmem:[#allocation11 + $0x118] sm:$0xff]
          %v3828 = vld [vmem:[#allocation11 + $0x120] sm:$0xff]
          %v3829 = vld [vmem:[#allocation11 + $0x128] sm:$0xff]
          %v3830 = vld [vmem:[#allocation11 + $0x130] sm:$0xff]
          %v3831 = vld [vmem:[#allocation11 + $0x138] sm:$0xff]
          %v3832 = vld [vmem:[#allocation11 + $0x140] sm:$0xff]
          %v3833 = vld [vmem:[#allocation11 + $0x148] sm:$0xff]
          %v3834 = vld [vmem:[#allocation11 + $0x150] sm:$0xff]
          %v3835 = vld [vmem:[#allocation11 + $0x158] sm:$0xff]
          %v3836 = vld [vmem:[#allocation11 + $0x160] sm:$0xff]
          %v3837 = vld [vmem:[#allocation11 + $0x168] sm:$0xff]
          %v3838 = vld [vmem:[#allocation11 + $0x170] sm:$0xff]
          %v3839 = vld [vmem:[#allocation11 + $0x178] sm:$0xff]
          %v3840 = vld [vmem:[#allocation14] sm:$0x7]
          %v3842 = vperm.slane %v3840, 0
          %v3843 = vperm.slane %v3840, 1
          %v3844 = vperm.slane %v3840, 2
          %v3848 = vld [vmem:[#allocation8] sm:$0x1]
          %v3850 = vperm.slane %v3848, 0
          %3852 = vmatpush.msra.mxu0 %v3837
          %3853 = vmatpush.msra.mxu0 %v3834
          %3854 = vmatpush.msra.mxu0 %v3831
          %3855 = vmatpush.msra.mxu0 %v3828
          %3856 = vmatpush.msra.mxu0 %v3825
          %3857 = vmatpush.msra.mxu0 %v3822
          %3858 = vmatpush.msra.mxu0 %v3819
          %3859 = vmatpush.msra.mxu0 %v3816
          %3860 = vmatpush.msra.mxu0 %v3813
          %3861 = vmatpush.msra.mxu0 %v3810
          %3862 = vmatpush.msra.mxu0 %v3807
          %3863 = vmatpush.msra.mxu0 %v3804
          %3864 = vmatpush.msra.mxu0 %v3801
          %3865 = vmatpush.msra.mxu0 %v3798
          %3866 = vmatpush.msra.mxu0 %v3795
          %3867 = vmatpush.msra.mxu0 %v3792
          %3868 = vmatmul.f32.gmra.mxu0 %v3850
          %v3869 = vpop.f32.mrf.mxu0
          %v3870 = vadd.f32 %v3842, %v3869
          %3871 = vdwg.mxu0
          %3872 = vmatpush.msra.mxu0 %v3838
          %3873 = vmatpush.msra.mxu0 %v3835
          %3874 = vmatpush.msra.mxu0 %v3832
          %3875 = vmatpush.msra.mxu0 %v3829
          %3876 = vmatpush.msra.mxu0 %v3826
          %3877 = vmatpush.msra.mxu0 %v3823
          %3878 = vmatpush.msra.mxu0 %v3820
          %3879 = vmatpush.msra.mxu0 %v3817
          %3880 = vmatpush.msra.mxu0 %v3814
          %3881 = vmatpush.msra.mxu0 %v3811
          %3882 = vmatpush.msra.mxu0 %v3808
          %3883 = vmatpush.msra.mxu0 %v3805
          %3884 = vmatpush.msra.mxu0 %v3802
          %3885 = vmatpush.msra.mxu0 %v3799
          %3886 = vmatpush.msra.mxu0 %v3796
          %3887 = vmatpush.msra.mxu0 %v3793
          %3888 = vmatmul.f32.gmra.mxu0 %v3850
          %v3889 = vpop.f32.mrf.mxu0
          %v3890 = vadd.f32 %v3843, %v3889
          %3891 = vdwg.mxu0
          %3892 = vmatpush.msra.mxu0 %v3839
          %3893 = vmatpush.msra.mxu0 %v3836
          %3894 = vmatpush.msra.mxu0 %v3833
          %3895 = vmatpush.msra.mxu0 %v3830
          %3896 = vmatpush.msra.mxu0 %v3827
          %3897 = vmatpush.msra.mxu0 %v3824
          %3898 = vmatpush.msra.mxu0 %v3821
          %3899 = vmatpush.msra.mxu0 %v3818
          %3900 = vmatpush.msra.mxu0 %v3815
          %3901 = vmatpush.msra.mxu0 %v3812
          %3902 = vmatpush.msra.mxu0 %v3809
          %3903 = vmatpush.msra.mxu0 %v3806
          %3904 = vmatpush.msra.mxu0 %v3803
          %3905 = vmatpush.msra.mxu0 %v3800
          %3906 = vmatpush.msra.mxu0 %v3797
          %3907 = vmatpush.msra.mxu0 %v3794
          %3908 = vmatmul.f32.gmra.mxu0 %v3850
          %v3909 = vpop.f32.mrf.mxu0
          %v3910 = vadd.f32 %v3844, %v3909
          %3911 = vdwg.mxu0
          %v3912 = vadd.f32 %v2910, %v3870
          %v3913 = vxor.u32 %v3912, 2147483648
          %v3914 = vmul.f32 %v3913, 1.442695
          %v3915 = vpow.pop %v3914
          %v3916 = vadd.f32 %v3915, 1.0
          %v3917 = vrcp.pop %v3916
          %v3918 = vmul.f32 %v3916, %v3917
          %v3919 = vsub.f32 1.0, %v3918
          %v3920 = vmul.f32 %v3917, %v3919
          %v3921 = vadd.f32 %v3917, %v3920
          %vm3922 = vweird.f32 %v3916
          %vm3923 = vweird.f32 %v3917
          %vm3924 = vmor %vm3922, %vm3923
          %v3925 = vsel %vm3924, %v3917, %v3921
          %v3926 = vand.u32 2147483647, %v3916
          %vm3927 = vcmp.eq.f32.partialorder %v3926, 8.507059e+37
          %v3928 = vand.u32 %v3916, 2147483648
          %v3929 = vor.u32 1.1754944e-38, %v3928
          %v3930 = vsel %vm3927, %v3929, %v3925
          %v3931 = vmul.f32 1.0, %v3930
          %v3932 = vadd.f32 %v2990, %v3890
          %v3933 = vxor.u32 %v3932, 2147483648
          %v3934 = vmul.f32 %v3933, 1.442695
          %v3935 = vpow.pop %v3934
          %v3936 = vadd.f32 %v3935, 1.0
          %v3937 = vrcp.pop %v3936
          %v3938 = vmul.f32 %v3936, %v3937
          %v3939 = vsub.f32 1.0, %v3938
          %v3940 = vmul.f32 %v3937, %v3939
          %v3941 = vadd.f32 %v3937, %v3940
          %vm3942 = vweird.f32 %v3936
          %vm3943 = vweird.f32 %v3937
          %vm3944 = vmor %vm3942, %vm3943
          %v3945 = vsel %vm3944, %v3937, %v3941
          %v3946 = vand.u32 2147483647, %v3936
          %vm3947 = vcmp.eq.f32.partialorder %v3946, 8.507059e+37
          %v3948 = vand.u32 %v3936, 2147483648
          %v3949 = vor.u32 1.1754944e-38, %v3948
          %v3950 = vsel %vm3947, %v3949, %v3945
          %v3951 = vmul.f32 1.0, %v3950
          %v3952 = vmul.f32 %v3931, %v3910
          %v3953 = vadd.f32 %v3070, %v3952
          %v3954 = vtanh.pop %v3953
          %v3955 = vsub.f32 1.0, %v3951
          %v3956 = vmul.f32 %v3955, %v3954
          %v3957 = vmul.f32 %v3951, %v3850
          %v3958 = vadd.f32 %v3956, %v3957
          %3959 = vmatpush.msra.mxu0 %v3837
          %3960 = vmatpush.msra.mxu0 %v3834
          %3961 = vmatpush.msra.mxu0 %v3831
          %3962 = vmatpush.msra.mxu0 %v3828
          %3963 = vmatpush.msra.mxu0 %v3825
          %3964 = vmatpush.msra.mxu0 %v3822
          %3965 = vmatpush.msra.mxu0 %v3819
          %3966 = vmatpush.msra.mxu0 %v3816
          %3967 = vmatpush.msra.mxu0 %v3813
          %3968 = vmatpush.msra.mxu0 %v3810
          %3969 = vmatpush.msra.mxu0 %v3807
          %3970 = vmatpush.msra.mxu0 %v3804
          %3971 = vmatpush.msra.mxu0 %v3801
          %3972 = vmatpush.msra.mxu0 %v3798
          %3973 = vmatpush.msra.mxu0 %v3795
          %3974 = vmatpush.msra.mxu0 %v3792
          %3975 = vmatmul.f32.gmra.mxu0 %v3958
          %v3976 = vpop.f32.mrf.mxu0
          %v3977 = vadd.f32 %v3842, %v3976
          %3978 = vdwg.mxu0
          %3979 = vmatpush.msra.mxu0 %v3838
          %3980 = vmatpush.msra.mxu0 %v3835
          %3981 = vmatpush.msra.mxu0 %v3832
          %3982 = vmatpush.msra.mxu0 %v3829
          %3983 = vmatpush.msra.mxu0 %v3826
          %3984 = vmatpush.msra.mxu0 %v3823
          %3985 = vmatpush.msra.mxu0 %v3820
          %3986 = vmatpush.msra.mxu0 %v3817
          %3987 = vmatpush.msra.mxu0 %v3814
          %3988 = vmatpush.msra.mxu0 %v3811
          %3989 = vmatpush.msra.mxu0 %v3808
          %3990 = vmatpush.msra.mxu0 %v3805
          %3991 = vmatpush.msra.mxu0 %v3802
          %3992 = vmatpush.msra.mxu0 %v3799
          %3993 = vmatpush.msra.mxu0 %v3796
          %3994 = vmatpush.msra.mxu0 %v3793
          %3995 = vmatmul.f32.gmra.mxu0 %v3958
          %v3996 = vpop.f32.mrf.mxu0
          %v3997 = vadd.f32 %v3843, %v3996
          %3998 = vdwg.mxu0
          %3999 = vmatpush.msra.mxu0 %v3839
          %4000 = vmatpush.msra.mxu0 %v3836
          %4001 = vmatpush.msra.mxu0 %v3833
          %4002 = vmatpush.msra.mxu0 %v3830
          %4003 = vmatpush.msra.mxu0 %v3827
          %4004 = vmatpush.msra.mxu0 %v3824
          %4005 = vmatpush.msra.mxu0 %v3821
          %4006 = vmatpush.msra.mxu0 %v3818
          %4007 = vmatpush.msra.mxu0 %v3815
          %4008 = vmatpush.msra.mxu0 %v3812
          %4009 = vmatpush.msra.mxu0 %v3809
          %4010 = vmatpush.msra.mxu0 %v3806
          %4011 = vmatpush.msra.mxu0 %v3803
          %4012 = vmatpush.msra.mxu0 %v3800
          %4013 = vmatpush.msra.mxu0 %v3797
          %4014 = vmatpush.msra.mxu0 %v3794
          %4015 = vmatmul.f32.gmra.mxu0 %v3958
          %v4016 = vpop.f32.mrf.mxu0
          %v4017 = vadd.f32 %v3844, %v4016
          %4018 = vdwg.mxu0
          %v4019 = vadd.f32 %v3150, %v3977
          %v4020 = vxor.u32 %v4019, 2147483648
          %v4021 = vmul.f32 %v4020, 1.442695
          %v4022 = vpow.pop %v4021
          %v4023 = vadd.f32 %v4022, 1.0
          %v4024 = vrcp.pop %v4023
          %v4025 = vmul.f32 %v4023, %v4024
          %v4026 = vsub.f32 1.0, %v4025
          %v4027 = vmul.f32 %v4024, %v4026
          %v4028 = vadd.f32 %v4024, %v4027
          %vm4029 = vweird.f32 %v4023
          %vm4030 = vweird.f32 %v4024
          %vm4031 = vmor %vm4029, %vm4030
          %v4032 = vsel %vm4031, %v4024, %v4028
          %v4033 = vand.u32 2147483647, %v4023
          %vm4034 = vcmp.eq.f32.partialorder %v4033, 8.507059e+37
          %v4035 = vand.u32 %v4023, 2147483648
          %v4036 = vor.u32 1.1754944e-38, %v4035
          %v4037 = vsel %vm4034, %v4036, %v4032
          %v4038 = vmul.f32 1.0, %v4037
          %v4039 = vadd.f32 %v3230, %v3997
          %v4040 = vxor.u32 %v4039, 2147483648
          %v4041 = vmul.f32 %v4040, 1.442695
          %v4042 = vpow.pop %v4041
          %v4043 = vadd.f32 %v4042, 1.0
          %v4044 = vrcp.pop %v4043
          %v4045 = vmul.f32 %v4043, %v4044
          %v4046 = vsub.f32 1.0, %v4045
          %v4047 = vmul.f32 %v4044, %v4046
          %v4048 = vadd.f32 %v4044, %v4047
          %vm4049 = vweird.f32 %v4043
          %vm4050 = vweird.f32 %v4044
          %vm4051 = vmor %vm4049, %vm4050
          %v4052 = vsel %vm4051, %v4044, %v4048
          %v4053 = vand.u32 2147483647, %v4043
          %vm4054 = vcmp.eq.f32.partialorder %v4053, 8.507059e+37
          %v4055 = vand.u32 %v4043, 2147483648
          %v4056 = vor.u32 1.1754944e-38, %v4055
          %v4057 = vsel %vm4054, %v4056, %v4052
          %v4058 = vmul.f32 1.0, %v4057
          %v4059 = vmul.f32 %v4038, %v4017
          %v4060 = vadd.f32 %v3310, %v4059
          %v4061 = vtanh.pop %v4060
          %v4062 = vsub.f32 1.0, %v4058
          %v4063 = vmul.f32 %v4062, %v4061
          %v4064 = vmul.f32 %v4058, %v3958
          %v4065 = vadd.f32 %v4063, %v4064
          %4066 = vmatpush.msra.mxu0 %v3837
          %4067 = vmatpush.msra.mxu0 %v3834
          %4068 = vmatpush.msra.mxu0 %v3831
          %4069 = vmatpush.msra.mxu0 %v3828
          %4070 = vmatpush.msra.mxu0 %v3825
          %4071 = vmatpush.msra.mxu0 %v3822
          %4072 = vmatpush.msra.mxu0 %v3819
          %4073 = vmatpush.msra.mxu0 %v3816
          %4074 = vmatpush.msra.mxu0 %v3813
          %4075 = vmatpush.msra.mxu0 %v3810
          %4076 = vmatpush.msra.mxu0 %v3807
          %4077 = vmatpush.msra.mxu0 %v3804
          %4078 = vmatpush.msra.mxu0 %v3801
          %4079 = vmatpush.msra.mxu0 %v3798
          %4080 = vmatpush.msra.mxu0 %v3795
          %4081 = vmatpush.msra.mxu0 %v3792
          %4082 = vmatmul.f32.gmra.mxu0 %v4065
          %v4083 = vpop.f32.mrf.mxu0
          %v4084 = vadd.f32 %v3842, %v4083
          %4085 = vdwg.mxu0
          %4086 = vmatpush.msra.mxu0 %v3838
          %4087 = vmatpush.msra.mxu0 %v3835
          %4088 = vmatpush.msra.mxu0 %v3832
          %4089 = vmatpush.msra.mxu0 %v3829
          %4090 = vmatpush.msra.mxu0 %v3826
          %4091 = vmatpush.msra.mxu0 %v3823
          %4092 = vmatpush.msra.mxu0 %v3820
          %4093 = vmatpush.msra.mxu0 %v3817
          %4094 = vmatpush.msra.mxu0 %v3814
          %4095 = vmatpush.msra.mxu0 %v3811
          %4096 = vmatpush.msra.mxu0 %v3808
          %4097 = vmatpush.msra.mxu0 %v3805
          %4098 = vmatpush.msra.mxu0 %v3802
          %4099 = vmatpush.msra.mxu0 %v3799
          %4100 = vmatpush.msra.mxu0 %v3796
          %4101 = vmatpush.msra.mxu0 %v3793
          %4102 = vmatmul.f32.gmra.mxu0 %v4065
          %v4103 = vpop.f32.mrf.mxu0
          %v4104 = vadd.f32 %v3843, %v4103
          %4105 = vdwg.mxu0
          %4106 = vmatpush.msra.mxu0 %v3839
          %4107 = vmatpush.msra.mxu0 %v3836
          %4108 = vmatpush.msra.mxu0 %v3833
          %4109 = vmatpush.msra.mxu0 %v3830
          %4110 = vmatpush.msra.mxu0 %v3827
          %4111 = vmatpush.msra.mxu0 %v3824
          %4112 = vmatpush.msra.mxu0 %v3821
          %4113 = vmatpush.msra.mxu0 %v3818
          %4114 = vmatpush.msra.mxu0 %v3815
          %4115 = vmatpush.msra.mxu0 %v3812
          %4116 = vmatpush.msra.mxu0 %v3809
          %4117 = vmatpush.msra.mxu0 %v3806
          %4118 = vmatpush.msra.mxu0 %v3803
          %4119 = vmatpush.msra.mxu0 %v3800
          %4120 = vmatpush.msra.mxu0 %v3797
          %4121 = vmatpush.msra.mxu0 %v3794
          %4122 = vmatmul.f32.gmra.mxu0 %v4065
          %v4123 = vpop.f32.mrf.mxu0
          %v4124 = vadd.f32 %v3844, %v4123
          %4125 = vdwg.mxu0
          %v4126 = vadd.f32 %v3390, %v4084
          %v4127 = vxor.u32 %v4126, 2147483648
          %v4128 = vmul.f32 %v4127, 1.442695
          %v4129 = vpow.pop %v4128
          %v4130 = vadd.f32 %v4129, 1.0
          %v4131 = vrcp.pop %v4130
          %v4132 = vmul.f32 %v4130, %v4131
          %v4133 = vsub.f32 1.0, %v4132
          %v4134 = vmul.f32 %v4131, %v4133
          %v4135 = vadd.f32 %v4131, %v4134
          %vm4136 = vweird.f32 %v4130
          %vm4137 = vweird.f32 %v4131
          %vm4138 = vmor %vm4136, %vm4137
          %v4139 = vsel %vm4138, %v4131, %v4135
          %v4140 = vand.u32 2147483647, %v4130
          %vm4141 = vcmp.eq.f32.partialorder %v4140, 8.507059e+37
          %v4142 = vand.u32 %v4130, 2147483648
          %v4143 = vor.u32 1.1754944e-38, %v4142
          %v4144 = vsel %vm4141, %v4143, %v4139
          %v4145 = vmul.f32 1.0, %v4144
          %v4146 = vadd.f32 %v3470, %v4104
          %v4147 = vxor.u32 %v4146, 2147483648
          %v4148 = vmul.f32 %v4147, 1.442695
          %v4149 = vpow.pop %v4148
          %v4150 = vadd.f32 %v4149, 1.0
          %v4151 = vrcp.pop %v4150
          %v4152 = vmul.f32 %v4150, %v4151
          %v4153 = vsub.f32 1.0, %v4152
          %v4154 = vmul.f32 %v4151, %v4153
          %v4155 = vadd.f32 %v4151, %v4154
          %vm4156 = vweird.f32 %v4150
          %vm4157 = vweird.f32 %v4151
          %vm4158 = vmor %vm4156, %vm4157
          %v4159 = vsel %vm4158, %v4151, %v4155
          %v4160 = vand.u32 2147483647, %v4150
          %vm4161 = vcmp.eq.f32.partialorder %v4160, 8.507059e+37
          %v4162 = vand.u32 %v4150, 2147483648
          %v4163 = vor.u32 1.1754944e-38, %v4162
          %v4164 = vsel %vm4161, %v4163, %v4159
          %v4165 = vmul.f32 1.0, %v4164
          %v4166 = vmul.f32 %v4145, %v4124
          %v4167 = vadd.f32 %v3550, %v4166
          %v4168 = vtanh.pop %v4167
          %v4169 = vsub.f32 1.0, %v4165
          %v4170 = vmul.f32 %v4169, %v4168
          %v4171 = vmul.f32 %v4165, %v4065
          %v4172 = vadd.f32 %v4170, %v4171
          %4173 = vmatpush.msra.mxu0 %v3837
          %4174 = vmatpush.msra.mxu0 %v3834
          %4175 = vmatpush.msra.mxu0 %v3831
          %4176 = vmatpush.msra.mxu0 %v3828
          %4177 = vmatpush.msra.mxu0 %v3825
          %4178 = vmatpush.msra.mxu0 %v3822
          %4179 = vmatpush.msra.mxu0 %v3819
          %4180 = vmatpush.msra.mxu0 %v3816
          %4181 = vmatpush.msra.mxu0 %v3813
          %4182 = vmatpush.msra.mxu0 %v3810
          %4183 = vmatpush.msra.mxu0 %v3807
          %4184 = vmatpush.msra.mxu0 %v3804
          %4185 = vmatpush.msra.mxu0 %v3801
          %4186 = vmatpush.msra.mxu0 %v3798
          %4187 = vmatpush.msra.mxu0 %v3795
          %4188 = vmatpush.msra.mxu0 %v3792
          %4189 = vmatmul.f32.gmra.mxu0 %v4172
          %v4190 = vpop.f32.mrf.mxu0
          %v4191 = vadd.f32 %v3842, %v4190
          %4192 = vdwg.mxu0
          %4193 = vmatpush.msra.mxu0 %v3838
          %4194 = vmatpush.msra.mxu0 %v3835
          %4195 = vmatpush.msra.mxu0 %v3832
          %4196 = vmatpush.msra.mxu0 %v3829
          %4197 = vmatpush.msra.mxu0 %v3826
          %4198 = vmatpush.msra.mxu0 %v3823
          %4199 = vmatpush.msra.mxu0 %v3820
          %4200 = vmatpush.msra.mxu0 %v3817
          %4201 = vmatpush.msra.mxu0 %v3814
          %4202 = vmatpush.msra.mxu0 %v3811
          %4203 = vmatpush.msra.mxu0 %v3808
          %4204 = vmatpush.msra.mxu0 %v3805
          %4205 = vmatpush.msra.mxu0 %v3802
          %4206 = vmatpush.msra.mxu0 %v3799
          %4207 = vmatpush.msra.mxu0 %v3796
          %4208 = vmatpush.msra.mxu0 %v3793
          %4209 = vmatmul.f32.gmra.mxu0 %v4172
          %v4210 = vpop.f32.mrf.mxu0
          %v4211 = vadd.f32 %v3843, %v4210
          %4212 = vdwg.mxu0
          %4213 = vmatpush.msra.mxu0 %v3839
          %4214 = vmatpush.msra.mxu0 %v3836
          %4215 = vmatpush.msra.mxu0 %v3833
          %4216 = vmatpush.msra.mxu0 %v3830
          %4217 = vmatpush.msra.mxu0 %v3827
          %4218 = vmatpush.msra.mxu0 %v3824
          %4219 = vmatpush.msra.mxu0 %v3821
          %4220 = vmatpush.msra.mxu0 %v3818
          %4221 = vmatpush.msra.mxu0 %v3815
          %4222 = vmatpush.msra.mxu0 %v3812
          %4223 = vmatpush.msra.mxu0 %v3809
          %4224 = vmatpush.msra.mxu0 %v3806
          %4225 = vmatpush.msra.mxu0 %v3803
          %4226 = vmatpush.msra.mxu0 %v3800
          %4227 = vmatpush.msra.mxu0 %v3797
          %4228 = vmatpush.msra.mxu0 %v3794
          %4229 = vmatmul.f32.gmra.mxu0 %v4172
          %v4230 = vpop.f32.mrf.mxu0
          %v4231 = vadd.f32 %v3844, %v4230
          %4232 = vdwg.mxu0
          %v4233 = vadd.f32 %v3630, %v4191
          %v4234 = vxor.u32 %v4233, 2147483648
          %v4235 = vmul.f32 %v4234, 1.442695
          %v4236 = vpow.pop %v4235
          %v4237 = vadd.f32 %v4236, 1.0
          %v4238 = vrcp.pop %v4237
          %v4239 = vmul.f32 %v4237, %v4238
          %v4240 = vsub.f32 1.0, %v4239
          %v4241 = vmul.f32 %v4238, %v4240
          %v4242 = vadd.f32 %v4238, %v4241
          %vm4243 = vweird.f32 %v4237
          %vm4244 = vweird.f32 %v4238
          %vm4245 = vmor %vm4243, %vm4244
          %v4246 = vsel %vm4245, %v4238, %v4242
          %v4247 = vand.u32 2147483647, %v4237
          %vm4248 = vcmp.eq.f32.partialorder %v4247, 8.507059e+37
          %v4249 = vand.u32 %v4237, 2147483648
          %v4250 = vor.u32 1.1754944e-38, %v4249
          %v4251 = vsel %vm4248, %v4250, %v4246
          %v4252 = vmul.f32 1.0, %v4251
          %v4253 = vadd.f32 %v3710, %v4211
          %v4254 = vxor.u32 %v4253, 2147483648
          %v4255 = vmul.f32 %v4254, 1.442695
          %v4256 = vpow.pop %v4255
          %v4257 = vadd.f32 %v4256, 1.0
          %v4258 = vrcp.pop %v4257
          %v4259 = vmul.f32 %v4257, %v4258
          %v4260 = vsub.f32 1.0, %v4259
          %v4261 = vmul.f32 %v4258, %v4260
          %v4262 = vadd.f32 %v4258, %v4261
          %vm4263 = vweird.f32 %v4257
          %vm4264 = vweird.f32 %v4258
          %vm4265 = vmor %vm4263, %vm4264
          %v4266 = vsel %vm4265, %v4258, %v4262
          %v4267 = vand.u32 2147483647, %v4257
          %vm4268 = vcmp.eq.f32.partialorder %v4267, 8.507059e+37
          %v4269 = vand.u32 %v4257, 2147483648
          %v4270 = vor.u32 1.1754944e-38, %v4269
          %v4271 = vsel %vm4268, %v4270, %v4266
          %v4272 = vmul.f32 1.0, %v4271
          %v4273 = vmul.f32 %v4252, %v4231
          %v4274 = vadd.f32 %v3790, %v4273
          %v4275 = vtanh.pop %v4274
          %v4276 = vsub.f32 1.0, %v4272
          %v4277 = vmul.f32 %v4276, %v4275
          %v4278 = vmul.f32 %v4272, %v4172
          %v4279 = vadd.f32 %v4277, %v4278
          %v4280 = vld [vmem:[#allocation15] sm:$0xff]
          %v4281 = vld [vmem:[#allocation15 + $0x8] sm:$0xff]
          %v4282 = vld [vmem:[#allocation15 + $0x10] sm:$0xff]
          %v4283 = vld [vmem:[#allocation15 + $0x18] sm:$0xff]
          %v4284 = vld [vmem:[#allocation15 + $0x20] sm:$0xff]
          %v4285 = vld [vmem:[#allocation15 + $0x28] sm:$0xff]
          %v4286 = vld [vmem:[#allocation15 + $0x30] sm:$0xff]
          %v4287 = vld [vmem:[#allocation15 + $0x38] sm:$0xff]
          %v4288 = vld [vmem:[#allocation15 + $0x40] sm:$0xff]
          %v4289 = vld [vmem:[#allocation15 + $0x48] sm:$0xff]
          %v4290 = vld [vmem:[#allocation15 + $0x50] sm:$0xff]
          %v4291 = vld [vmem:[#allocation15 + $0x58] sm:$0xff]
          %v4292 = vld [vmem:[#allocation15 + $0x60] sm:$0xff]
          %v4293 = vld [vmem:[#allocation15 + $0x68] sm:$0xff]
          %v4294 = vld [vmem:[#allocation15 + $0x70] sm:$0xff]
          %v4295 = vld [vmem:[#allocation15 + $0x78] sm:$0xff]
          %v4296 = vld [vmem:[#allocation15 + $0x80] sm:$0xff]
          %v4297 = vld [vmem:[#allocation15 + $0x88] sm:$0xff]
          %v4298 = vld [vmem:[#allocation15 + $0x90] sm:$0xff]
          %v4299 = vld [vmem:[#allocation15 + $0x98] sm:$0xff]
          %v4300 = vld [vmem:[#allocation15 + $0xa0] sm:$0xff]
          %v4301 = vld [vmem:[#allocation15 + $0xa8] sm:$0xff]
          %v4302 = vld [vmem:[#allocation15 + $0xb0] sm:$0xff]
          %v4303 = vld [vmem:[#allocation15 + $0xb8] sm:$0xff]
          %v4304 = vld [vmem:[#allocation15 + $0xc0] sm:$0xff]
          %v4305 = vld [vmem:[#allocation15 + $0xc8] sm:$0xff]
          %v4306 = vld [vmem:[#allocation15 + $0xd0] sm:$0xff]
          %v4307 = vld [vmem:[#allocation15 + $0xd8] sm:$0xff]
          %v4308 = vld [vmem:[#allocation15 + $0xe0] sm:$0xff]
          %v4309 = vld [vmem:[#allocation15 + $0xe8] sm:$0xff]
          %v4310 = vld [vmem:[#allocation15 + $0xf0] sm:$0xff]
          %v4311 = vld [vmem:[#allocation15 + $0xf8] sm:$0xff]
          %v4312 = vld [vmem:[#allocation15 + $0x100] sm:$0xff]
          %v4313 = vld [vmem:[#allocation15 + $0x108] sm:$0xff]
          %v4314 = vld [vmem:[#allocation15 + $0x110] sm:$0xff]
          %v4315 = vld [vmem:[#allocation15 + $0x118] sm:$0xff]
          %v4316 = vld [vmem:[#allocation15 + $0x120] sm:$0xff]
          %v4317 = vld [vmem:[#allocation15 + $0x128] sm:$0xff]
          %v4318 = vld [vmem:[#allocation15 + $0x130] sm:$0xff]
          %v4319 = vld [vmem:[#allocation15 + $0x138] sm:$0xff]
          %v4320 = vld [vmem:[#allocation15 + $0x140] sm:$0xff]
          %v4321 = vld [vmem:[#allocation15 + $0x148] sm:$0xff]
          %v4322 = vld [vmem:[#allocation15 + $0x150] sm:$0xff]
          %v4323 = vld [vmem:[#allocation15 + $0x158] sm:$0xff]
          %v4324 = vld [vmem:[#allocation15 + $0x160] sm:$0xff]
          %v4325 = vld [vmem:[#allocation15 + $0x168] sm:$0xff]
          %v4326 = vld [vmem:[#allocation15 + $0x170] sm:$0xff]
          %v4327 = vld [vmem:[#allocation15 + $0x178] sm:$0xff]
          %v4328 = vld [vmem:[#allocation15 + $0x180] sm:$0xff]
          %v4329 = vld [vmem:[#allocation15 + $0x188] sm:$0xff]
          %v4330 = vld [vmem:[#allocation15 + $0x190] sm:$0xff]
          %v4331 = vld [vmem:[#allocation15 + $0x198] sm:$0xff]
          %v4332 = vld [vmem:[#allocation15 + $0x1a0] sm:$0xff]
          %v4333 = vld [vmem:[#allocation15 + $0x1a8] sm:$0xff]
          %v4334 = vld [vmem:[#allocation15 + $0x1b0] sm:$0xff]
          %v4335 = vld [vmem:[#allocation15 + $0x1b8] sm:$0xff]
          %v4336 = vld [vmem:[#allocation15 + $0x1c0] sm:$0xff]
          %v4337 = vld [vmem:[#allocation15 + $0x1c8] sm:$0xff]
          %v4338 = vld [vmem:[#allocation15 + $0x1d0] sm:$0xff]
          %v4339 = vld [vmem:[#allocation15 + $0x1d8] sm:$0xff]
          %v4340 = vld [vmem:[#allocation15 + $0x1e0] sm:$0xff]
          %v4341 = vld [vmem:[#allocation15 + $0x1e8] sm:$0xff]
          %v4342 = vld [vmem:[#allocation15 + $0x1f0] sm:$0xff]
          %v4343 = vld [vmem:[#allocation15 + $0x1f8] sm:$0xff]
          %4344 = vmatpush.msra.mxu0 %v4295
          %4345 = vmatpush.msra.mxu0 %v4294
          %4346 = vmatpush.msra.mxu0 %v4293
          %4347 = vmatpush.msra.mxu0 %v4292
          %4348 = vmatpush.msra.mxu0 %v4291
          %4349 = vmatpush.msra.mxu0 %v4290
          %4350 = vmatpush.msra.mxu0 %v4289
          %4351 = vmatpush.msra.mxu0 %v4288
          %4352 = vmatpush.msra.mxu0 %v4287
          %4353 = vmatpush.msra.mxu0 %v4286
          %4354 = vmatpush.msra.mxu0 %v4285
          %4355 = vmatpush.msra.mxu0 %v4284
          %4356 = vmatpush.msra.mxu0 %v4283
          %4357 = vmatpush.msra.mxu0 %v4282
          %4358 = vmatpush.msra.mxu0 %v4281
          %4359 = vmatpush.msra.mxu0 %v4280
          %4360 = vmatmul.f32.gmra.mxu0 %v3958
          %v4361 = vpop.f32.mrf.mxu0
          %v4362 = vadd.f32 0.0, %v4361
          %4363 = vdwg.mxu0
          %4364 = vmatpush.msra.mxu0 %v4311
          %4365 = vmatpush.msra.mxu0 %v4310
          %4366 = vmatpush.msra.mxu0 %v4309
          %4367 = vmatpush.msra.mxu0 %v4308
          %4368 = vmatpush.msra.mxu0 %v4307
          %4369 = vmatpush.msra.mxu0 %v4306
          %4370 = vmatpush.msra.mxu0 %v4305
          %4371 = vmatpush.msra.mxu0 %v4304
          %4372 = vmatpush.msra.mxu0 %v4303
          %4373 = vmatpush.msra.mxu0 %v4302
          %4374 = vmatpush.msra.mxu0 %v4301
          %4375 = vmatpush.msra.mxu0 %v4300
          %4376 = vmatpush.msra.mxu0 %v4299
          %4377 = vmatpush.msra.mxu0 %v4298
          %4378 = vmatpush.msra.mxu0 %v4297
          %4379 = vmatpush.msra.mxu0 %v4296
          %4380 = vmatmul.f32.gmra.mxu0 %v4065
          %v4381 = vpop.f32.mrf.mxu0
          %v4382 = vadd.f32 %v4362, %v4381
          %4383 = vdwg.mxu0
          %4384 = vmatpush.msra.mxu0 %v4327
          %4385 = vmatpush.msra.mxu0 %v4326
          %4386 = vmatpush.msra.mxu0 %v4325
          %4387 = vmatpush.msra.mxu0 %v4324
          %4388 = vmatpush.msra.mxu0 %v4323
          %4389 = vmatpush.msra.mxu0 %v4322
          %4390 = vmatpush.msra.mxu0 %v4321
          %4391 = vmatpush.msra.mxu0 %v4320
          %4392 = vmatpush.msra.mxu0 %v4319
          %4393 = vmatpush.msra.mxu0 %v4318
          %4394 = vmatpush.msra.mxu0 %v4317
          %4395 = vmatpush.msra.mxu0 %v4316
          %4396 = vmatpush.msra.mxu0 %v4315
          %4397 = vmatpush.msra.mxu0 %v4314
          %4398 = vmatpush.msra.mxu0 %v4313
          %4399 = vmatpush.msra.mxu0 %v4312
          %4400 = vmatmul.f32.gmra.mxu0 %v4172
          %v4401 = vpop.f32.mrf.mxu0
          %v4402 = vadd.f32 %v4382, %v4401
          %4403 = vdwg.mxu0
          %4404 = vmatpush.msra.mxu0 %v4343
          %4405 = vmatpush.msra.mxu0 %v4342
          %4406 = vmatpush.msra.mxu0 %v4341
          %4407 = vmatpush.msra.mxu0 %v4340
          %4408 = vmatpush.msra.mxu0 %v4339
          %4409 = vmatpush.msra.mxu0 %v4338
          %4410 = vmatpush.msra.mxu0 %v4337
          %4411 = vmatpush.msra.mxu0 %v4336
          %4412 = vmatpush.msra.mxu0 %v4335
          %4413 = vmatpush.msra.mxu0 %v4334
          %4414 = vmatpush.msra.mxu0 %v4333
          %4415 = vmatpush.msra.mxu0 %v4332
          %4416 = vmatpush.msra.mxu0 %v4331
          %4417 = vmatpush.msra.mxu0 %v4330
          %4418 = vmatpush.msra.mxu0 %v4329
          %4419 = vmatpush.msra.mxu0 %v4328
          %4420 = vmatmul.f32.gmra.mxu0 %v4279
          %v4421 = vpop.f32.mrf.mxu0
          %v4422 = vadd.f32 %v4402, %v4421
          %4423 = vdwg.mxu0
          %4424 = vst [vmem:[#allocation17] sm:$0xff] %v4422
        $region96: #{tpu_custom_call.1} parent=55 // pred_fallthru
          _
        // Predicated region
        $region97: #{tpu_custom_call.1} parent=55 // pred_check
          %p4425 = pneg %p240
        $region98: #{tpu_custom_call.1} parent=55 // pred_check_branch
          %4427 = sbr.rel (%p4425) target = $region100
        $region99: #{tpu_custom_call.1} parent=55 // pred_region
          %4429 = vsyncadd [#allocation5], 0
          %s4431 = sshll.u32 [#allocation17], 4
          %s4432 = int_to_ptr.vmem [resolvable:$true] %s4431
          %s4433 = sshll.u32 %s9, 4
          %s4434 = int_to_ptr.hbm [resolvable:$true] %s4433
          %4436 = dma.vmem_to_hbm [thread:$0]  %s4432, 128, %s4434, [#allocation5]
        $region100: #{tpu_custom_call.1} parent=55 // pred_fallthru
          _
        // Predicated region
        $region101: #{tpu_custom_call.1} parent=55 // pred_check
          %p4437 = pneg %p240
        $region102: #{tpu_custom_call.1} parent=55 // pred_check_branch
          %4439 = sbr.rel (%p4437) target = $region104
        $region103: #{tpu_custom_call.1} parent=55 // pred_region
          %4441 = dma.done [#allocation5], 128
        $region104: #{tpu_custom_call.1} parent=55 // pred_fallthru
          _
      $region56: #{tpu_custom_call.1} parent=5 // pred_fallthru
        _
      %p4442 = scmp.le.s32.totalorder 2, %s23
      // Predicated region
      $region105: #{tpu_custom_call.1} parent=5 // pred_check
        %p4443 = pneg %p4442
      $region106: #{tpu_custom_call.1} parent=5 // pred_check_branch
        %4445 = sbr.rel (%p4443) target = $region108
      $region107: #{tpu_custom_call.1} parent=5 // pred_region
        %s4446 = ssub.s32 %s23, 2
      $region108: #{tpu_custom_call.1} parent=5 // pred_fallthru
        _
    $region6: #{tpu_custom_call.1} parent=1 // loop_footer
      %s27 = sadd.s32 1, %s23
    $region7: #{tpu_custom_call.1} parent=1 // loop_footer_branch
      %22 = sbr.rel target = $region3
    $region8: #{tpu_custom_call.1} parent=1 // loop_exit
      _
    %4447 = vsyncpa [#allocation4], 1
    %s4448 = scalar_lea.sflag [#allocation4], 1
    %4449 = vsyncpa %s4448, 1
    %4450 = vsyncpa [#allocation7], 1
    %4451 = vsyncpa [#allocation10], 1
    %4452 = vsyncpa [#allocation13], 1
    %4453 = vsyncpa [#allocation16], 1
    %4454 = vsyncpa [#allocation5], 1
    %s4455 = scalar_lea.sflag [#allocation5], 1
    %4456 = vsyncpa %s4455, 1

</llo_original>
